<compile_context>
chip_gen: v7x
topology: tpu7x:2x2x1
jax: 0.10.0
libtpu: 0.0.40
codegen_flags: <defaults>
</compile_context>

<pallas_src>
import jax
import jax.numpy as jnp
from jax import lax
from jax.experimental import pallas as pl
from jax.experimental.pallas import tpu as pltpu


_SMALL_S_VPU_THRESHOLD = 128     # below this SRCLEN, attention runs on VPU/XLU
_BUFFERED_STATE = {"ok": None}   # lazily detected support for pl.Buffered(1)


# -----------------------------------------------------------------------------
# Pallas kernel: one grid program == one batch shard; the whole DOCLEN
# recurrence runs inside the body with the (h, c, input) carry in registers.
# -----------------------------------------------------------------------------
def _doc_decoder_kernel(
    x0_ref,        # (Bs, 1, H)  f32   sod embedding (initial LSTM input)
    h0_ref,        # (Bs, 1, H)  f32   src_summary_h0 (initial h and c)
    enc_ref,       # (Bs, S, H)  cdt   encoder_out[0]
    maskb_ref,     # (Bs, 1, S)  f32   additive mask bias (-1e30 at padded pos)
    wih_ref,       # (H, 4H)     cdt   W_ih^T
    whh_ref,       # (H, 4H)     cdt   W_hh^T
    bg_ref,        # (1, 4H)     f32   b_ih + b_hh
    win_ref,       # (H, H)      cdt   attention input_proj^T
    woc_ref,       # (H, H)      cdt   attention output_proj^T, context half
    woh_ref,       # (H, H)      cdt   attention output_proj^T, hidden half
    sent_ref,      # out: (doclen, Bs, H) f32  per-step sentence states
):
    doclen, Bs, H = sent_ref.shape
    S = enc_ref.shape[1]
    cdt = enc_ref.dtype                       # MXU compute dtype (bf16 or f32)

    # ---- loop-invariant loads / broadcasts (hoisted out of the serial loop) --
    enc = enc_ref[...]                        # (Bs, S, H)
    w_ih = wih_ref[...]
    w_hh = whh_ref[...]
    w_in = win_ref[...]
    woc = woc_ref[...]
    woh = woh_ref[...]
    bgb = jnp.broadcast_to(bg_ref[...], (Bs, 4 * H))     # (Bs, 4H) f32, hoisted
    mask_bias = maskb_ref[:, 0, :]                        # (Bs, S)  f32

    h0 = h0_ref[:, 0, :]                      # (Bs, H) f32
    x0 = x0_ref[:, 0, :]                      # (Bs, H) f32  (E == H required)

    # With q == 1 the batched MXU dots pay push/pop latency, not throughput;
    # for small S the VPU multiply + XLU reduce path is shorter.
    use_vpu_attention = S <= _SMALL_S_VPU_THRESHOLD

    def step(j, carry):
        h, c, inp = carry                     # all f32

        # ---- LSTMCell (PyTorch gate order i, f, g, o); two dots, no concat --
        gates = (jnp.dot(inp.astype(cdt), w_ih, preferred_element_type=jnp.float32)
                 + jnp.dot(h.astype(cdt), w_hh, preferred_element_type=jnp.float32)
                 + bgb)
        # NOTE: gate slices are lane-aligned when H is a multiple of 128 (the
        # module default H=512 is); misaligned H only costs lane shuffles.
        i_g = jax.nn.sigmoid(gates[:, 0 * H:1 * H])
        f_g = jax.nn.sigmoid(gates[:, 1 * H:2 * H])
        g_g = jnp.tanh(gates[:, 2 * H:3 * H])
        o_g = jax.nn.sigmoid(gates[:, 3 * H:4 * H])
        c_new = f_g * c + i_g * g_g
        h_new = o_g * jnp.tanh(c_new)

        # ---- AttentionLayer (Luong); query projected per step ---------------
        # (fairseq AttentionLayer in/out projections are bias-free)
        xp = jnp.dot(h_new.astype(cdt), w_in,
                     preferred_element_type=jnp.float32)          # (Bs, H) f32
        if use_vpu_attention:
            scores = jnp.sum(xp[:, None, :] * enc, axis=-1)       # (Bs, S)
        else:
            scores = jnp.einsum('bqh,bsh->bqs', xp[:, None, :].astype(cdt), enc,
                                preferred_element_type=jnp.float32)[:, 0, :]
        scores = scores + mask_bias
        scores = scores - jnp.max(scores, axis=-1, keepdims=True)
        p = jnp.exp(scores)
        # exact reciprocal (EUP): the result feeds the recurrence, so the
        # approx=True error would compound over doclen.
        p = p * pl.reciprocal(jnp.sum(p, axis=-1, keepdims=True), approx=False)
        if use_vpu_attention:
            ctx = jnp.sum(p[:, :, None] * enc, axis=1)            # (Bs, H)
        else:
            ctx = jnp.einsum('bqs,bsh->bqh', p[:, None, :].astype(cdt), enc,
                             preferred_element_type=jnp.float32)[:, 0, :]
        attn_h = jnp.tanh(
            jnp.dot(ctx.astype(cdt), woc, preferred_element_type=jnp.float32)
            + jnp.dot(h_new.astype(cdt), woh, preferred_element_type=jnp.float32))

        # time-major store: one dense (Bs, H) sublane x lane slab per step
        sent_ref[pl.ds(j, 1)] = attn_h[None].astype(sent_ref.dtype)

        return (h_new, c_new, attn_h)

    unroll = True if doclen <= 8 else 2
    lax.fori_loop(0, doclen, step, (h0, h0, x0), unroll=unroll)


# -----------------------------------------------------------------------------
# Wrapper
# -----------------------------------------------------------------------------
def _auto_num_batch_shards(B):
    """2 shards only on a two-TensorCore part (v7x class) AND when each shard
    keeps >= 8 real batch rows; otherwise sharding only shrinks matmul M and
    adds grid overhead (v5e/v6e have one TensorCore)."""
    try:
        kind = jax.devices()[0].device_kind.lower()
    except Exception:
        return 1
    if ("v7" in kind or "7x" in kind) and B >= 16 and B % 2 == 0:
        return 2
    return 1


def _pad_leading(x, n):
    if x.shape[0] == n:
        return x
    pad = [(0, n - x.shape[0])] + [(0, 0)] * (x.ndim - 1)
    return jnp.pad(x, pad)


def doc_decoder_pallas(x0, enc0, pad_mask, params, doclen,
                       num_batch_shards=None, compute_dtype=jnp.bfloat16):
    """Doc-level LSTM + Luong-attention recurrence on TPU.

    Returns batch-major sentence states of shape (B, doclen, H), float32.
    """
    B, E = x0.shape
    _, S, H = enc0.shape
    assert E == H, "module requires embed_dim == hidden_size (out feeds layer 0)"

    if num_batch_shards is None:
        num_batch_shards = _auto_num_batch_shards(B)
    # Pad the batch so every shard has a multiple of 8 rows (dense sublane
    # stores / unmasked matmul M); padded rows compute garbage and are sliced
    # away afterwards (mask bias 0 -> uniform softmax, no NaNs).
    Bs = max(8, (((B + num_batch_shards - 1) // num_batch_shards + 7) // 8) * 8)
    Bp = Bs * num_batch_shards

    # ---- one-time weight / input prep (plain JAX, MXU-friendly layouts) ----
    w_ih_t = params["w_ih"].T.astype(compute_dtype)                   # (H, 4H)
    w_hh_t = params["w_hh"].T.astype(compute_dtype)                   # (H, 4H)
    bg = (params["b_ih"] + params["b_hh"])[None, :].astype(jnp.float32)  # (1,4H)
    w_in_t = params["w_in_proj"].T.astype(compute_dtype)              # (H, H)
    wout_t = params["w_out_proj"].T                                   # (2H, H)
    woc = wout_t[:H, :].astype(compute_dtype)                         # ctx half
    woh = wout_t[H:, :].astype(compute_dtype)                         # hid half

    # src_summary_h0 = encoder_out[0].mean(1): one-time, exact, done in XLA.
    h0 = jnp.mean(enc0, axis=1).astype(jnp.float32)                   # (B, H)

    enc_c = _pad_leading(enc0.astype(compute_dtype), Bp)              # (Bp,S,H)
    x0_3d = _pad_leading(x0.astype(jnp.float32), Bp)[:, None, :]      # (Bp,1,H)
    h0_3d = _pad_leading(h0, Bp)[:, None, :]                          # (Bp,1,H)
    maskb = _pad_leading(pad_mask.astype(jnp.float32) * (-1e30), Bp)[:, None, :]

    # ---- scoped-VMEM budget: actual buffers (worst case double-buffered) ----
    csz = jnp.dtype(compute_dtype).itemsize
    blocks = (Bs * S * H * csz                      # encoder block
              + 2 * Bs * H * 4 + Bs * S * 4         # x0 + h0 + mask
              + (2 * H * 4 * H + 3 * H * H) * csz + 4 * H * 4   # weights/bias
              + doclen * Bs * H * 4)                # output block
    work = 3 * Bs * S * H * 4 + Bs * 4 * H * 4 + 8 * Bs * H * 4   # loop temps
    vmem_limit = int(min(max(2 * (2 * blocks + work), 16 << 20), 64 << 20))

    def _run(allow_single_buffer):
        # Single-buffer the grid-invariant weights always; single-buffer the
        # big per-shard blocks when there is nothing to pipeline (grid of 1).
        single_big = allow_single_buffer and num_batch_shards == 1
        single_w = allow_single_buffer

        def bspec(shape, imap, single):
            if single:
                return pl.BlockSpec(shape, imap, pipeline_mode=pl.Buffered(1))
            return pl.BlockSpec(shape, imap)

        in_specs = [
            bspec((Bs, 1, H), lambda b: (b, 0, 0), single_big),   # x0
            bspec((Bs, 1, H), lambda b: (b, 0, 0), single_big),   # h0
            bspec((Bs, S, H), lambda b: (b, 0, 0), single_big),   # encoder
            bspec((Bs, 1, S), lambda b: (b, 0, 0), single_big),   # mask bias
            bspec((H, 4 * H), lambda b: (0, 0), single_w),        # W_ih^T
            bspec((H, 4 * H), lambda b: (0, 0), single_w),        # W_hh^T
            bspec((1, 4 * H), lambda b: (0, 0), single_w),        # bias
            bspec((H, H), lambda b: (0, 0), single_w),            # input_proj^T
            bspec((H, H), lambda b: (0, 0), single_w),            # out_proj ctx
            bspec((H, H), lambda b: (0, 0), single_w),            # out_proj hid
        ]
        out_spec = bspec((doclen, Bs, H), lambda b: (0, b, 0), single_big)

        grid_spec = pltpu.PrefetchScalarGridSpec(
            num_scalar_prefetch=0,
            grid=(num_batch_shards,),
            in_specs=in_specs,
            out_specs=out_spec)

        return pl.pallas_call(
            _doc_decoder_kernel,
            out_shape=jax.ShapeDtypeStruct((doclen, Bp, H), jnp.float32),
            grid_spec=grid_spec,
            compiler_params=pltpu.CompilerParams(
                dimension_semantics=("parallel",),
                vmem_limit_bytes=vmem_limit),
        )(x0_3d, h0_3d, enc_c, maskb, w_ih_t, w_hh_t, bg, w_in_t, woc, woh)

    if _BUFFERED_STATE["ok"] is None:
        # One-time probe: fall back to default double-buffering if this JAX
        # build rejects pipeline_mode=pl.Buffered(1).
        try:
            sent_tm = _run(True)
            sent_tm.block_until_ready()
            _BUFFERED_STATE["ok"] = True
        except Exception:
            _BUFFERED_STATE["ok"] = False
            sent_tm = _run(False)
    else:
        sent_tm = _run(_BUFFERED_STATE["ok"])

    # time-major (doclen, Bp, H) -> batch-major (B, doclen, H); cheap XLA ops.
    return jnp.transpose(sent_tm[:, :B, :], (1, 0, 2))


# -----------------------------------------------------------------------------
# Glue (plain JAX): embeddings, make_sent_positions, state2key, full forward.
# -----------------------------------------------------------------------------
def make_sent_positions_jax(tokens, padding_idx):
    # tokens: (B, doclen, sentlen); positions start at padding_idx + 1
    mask = jnp.sum(tokens != padding_idx, axis=2) != 0            # (B, doclen)
    positions = jnp.arange(padding_idx + 1,
                           padding_idx + 1 + tokens.shape[1])     # (doclen,)
    return jnp.where(mask, positions[None, :], 1).astype(jnp.int32)


def ldocument_decoder_forward(prev_output_tokens, encoder_out0, encoder_out1,
                              encoder_padding_mask, params, padding_idx,
                              sod_idx, num_batch_shards=None,
                              compute_dtype=jnp.bfloat16):
    B, doclen, sentlen = prev_output_tokens.shape
    _, S, H = encoder_out0.shape

    # x = embed_tokens(sod_idx) for each batch element
    x0 = jnp.broadcast_to(params["embed_tokens"][sod_idx][None, :], (B, H))

    pad_mask = (jnp.zeros((B, S), jnp.float32)
                if encoder_padding_mask is None
                else encoder_padding_mask.astype(jnp.float32))

    # hidemb=False path: attention attends over encoder_out[0]; encoder_out1 is
    # only used when args.hidemb is set.
    sent_bm = doc_decoder_pallas(x0, encoder_out0, pad_mask, params, doclen,
                                 num_batch_shards=num_batch_shards,
                                 compute_dtype=compute_dtype)

    # torch: sent_states = cat(outs, dim=1).view(bsz*doclen, -1)
    sent_states = sent_bm.reshape(B * doclen, H)
    # state2key hoisted out of the serial kernel: one batched matmul.
    tkeys = sent_states @ params["w_s2k"].T + params["b_s2k"][None, :]
    new_incr_cached = sent_bm[:, -1, :]                    # last `out` (B, H)

    # sentence-position embedding (feeds the external word decoder)
    sp_idx = make_sent_positions_jax(prev_output_tokens,
                                     padding_idx).reshape(B * doclen)
    sp = params["embed_sent_pos"][sp_idx]                  # (B*doclen, H)

    # attn_scores tensor is allocated zero and never written in the torch code
    attn_scores = jnp.zeros((B, doclen, S), jnp.float32)

    # TODO(synk): dec_outs / word_atte_scores require the external fconv word
    # decoder (self.decoder), which is not part of this module.
    dec_outs = None
    word_atte_scores = None
    return dec_outs, (attn_scores, word_atte_scores), new_incr_cached, tkeys, \
        sent_states, sp


# -----------------------------------------------------------------------------
# Pure-JAX reference of the kernel path (for correctness checking).
# -----------------------------------------------------------------------------
def reference_doc_decoder(x0, enc0, pad_mask, params, doclen):
    H = enc0.shape[-1]
    h = jnp.mean(enc0, axis=1)
    c = h
    inp = x0
    sents, tks = [], []
    for _ in range(doclen):
        gates = (inp @ params["w_ih"].T + params["b_ih"]
                 + h @ params["w_hh"].T + params["b_hh"])
        i_g = jax.nn.sigmoid(gates[:, 0 * H:1 * H])
        f_g = jax.nn.sigmoid(gates[:, 1 * H:2 * H])
        g_g = jnp.tanh(gates[:, 2 * H:3 * H])
        o_g = jax.nn.sigmoid(gates[:, 3 * H:4 * H])
        c = f_g * c + i_g * g_g
        h = o_g * jnp.tanh(c)
        xp = h @ params["w_in_proj"].T
        scores = jnp.einsum("bsh,bh->bs", enc0, xp)
        scores = jnp.where(pad_mask > 0.0, -jnp.inf, scores)
        p = jax.nn.softmax(scores, axis=-1)
        ctx = jnp.einsum("bs,bsh->bh", p, enc0)
        attn_h = jnp.tanh(jnp.concatenate([ctx, h], axis=-1)
                          @ params["w_out_proj"].T)
        sents.append(attn_h)
        tks.append(attn_h @ params["w_s2k"].T + params["b_s2k"])
        inp = attn_h
    return jnp.stack(sents, axis=0), jnp.stack(tks, axis=0)


# -----------------------------------------------------------------------------
if __name__ == "__main__":
    # Small shapes consistent with the module (embed_dim == hidden_size is
    # required by the feedback of `out` into the layer-0 LSTMCell).
    B, DOCLEN, SENTLEN = 2, 3, 6
    S = 5                      # srcdoclen
    H = 32                     # hidden_size == embed_dim == encoder_output_units
    NUM_TOPICS = 5             # state2key out dim = num_topics + 3 = 8
    K = NUM_TOPICS + 3
    VOCAB = 20
    MAX_TGT_POS = 10
    PAD_IDX, SOD_IDX = 1, 2

    key = jax.random.PRNGKey(0)
    ks = jax.random.split(key, 16)
    u = lambda k, shape, s=0.1: jax.random.uniform(k, shape, jnp.float32, -s, s)

    embed_sent_pos = 0.1 * jax.random.normal(
        ks[0], (MAX_TGT_POS + 2, H), jnp.float32)
    embed_sent_pos = embed_sent_pos.at[PAD_IDX].set(0.0)
    params = {
        "embed_tokens": 0.1 * jax.random.normal(ks[1], (VOCAB, H), jnp.float32),
        "embed_sent_pos": embed_sent_pos,
        "w_ih": u(ks[2], (4 * H, H)),
        "b_ih": u(ks[3], (4 * H,)),
        "w_hh": u(ks[4], (4 * H, H)),
        "b_hh": u(ks[5], (4 * H,)),
        "w_in_proj": u(ks[6], (H, H)),        # AttentionLayer.input_proj
        "w_out_proj": u(ks[7], (H, 2 * H)),   # AttentionLayer.output_proj
        "w_s2k": u(ks[8], (K, H)),            # state2key
        "b_s2k": u(ks[9], (K,)),
    }

    prev_output_tokens = jax.random.randint(
        ks[10], (B, DOCLEN, SENTLEN), 0, VOCAB, dtype=jnp.int32)
    prev_output_tokens = prev_output_tokens.at[0, -1, :].set(PAD_IDX)
    encoder_out0 = jax.random.normal(ks[11], (B, S, H), jnp.float32)
    encoder_out1 = jax.random.normal(ks[12], (B, S, H), jnp.float32)
    encoder_padding_mask = jnp.zeros((B, S), jnp.float32).at[1, -1].set(1.0)

    # Pure-JAX reference (f32).
    x0 = jnp.broadcast_to(params["embed_tokens"][SOD_IDX][None, :], (B, H))
    ref_sent, ref_tkeys = reference_doc_decoder(
        x0, encoder_out0, encoder_padding_mask, params, DOCLEN)
    ref_sent_bm = jnp.transpose(ref_sent, (1, 0, 2))     # (B, DOCLEN, H)
    ref_tkeys_bm = jnp.transpose(ref_tkeys, (1, 0, 2))   # (B, DOCLEN, K)

    # ---- 1) exact path: f32 MXU operands, tight check ----
    outs32 = ldocument_decoder_forward(
        prev_output_tokens, encoder_out0, encoder_out1, encoder_padding_mask,
        params, PAD_IDX, SOD_IDX, compute_dtype=jnp.float32)
    (_, (attn_scores32, _), nic32, tkeys32, sent32, sp32) = outs32
    jax.block_until_ready((attn_scores32, nic32, tkeys32, sent32, sp32))
    e1 = float(jnp.max(jnp.abs(sent32.reshape(B, DOCLEN, H) - ref_sent_bm)))
    e2 = float(jnp.max(jnp.abs(tkeys32.reshape(B, DOCLEN, K) - ref_tkeys_bm)))
    assert e1 < 2e-3 and e2 < 2e-3, ("f32 path mismatch", e1, e2)

    # ---- 2) production path: bf16 MXU operands / encoder storage ----
    outs16 = ldocument_decoder_forward(
        prev_output_tokens, encoder_out0, encoder_out1, encoder_padding_mask,
        params, PAD_IDX, SOD_IDX, compute_dtype=jnp.bfloat16)
    (_, _, nic16, tkeys16, sent16, sp16) = outs16
    jax.block_until_ready((nic16, tkeys16, sent16, sp16))
    e3 = float(jnp.max(jnp.abs(sent16.reshape(B, DOCLEN, H) - ref_sent_bm)))
    e4 = float(jnp.max(jnp.abs(tkeys16.reshape(B, DOCLEN, K) - ref_tkeys_bm)))
    assert e3 < 5e-2 and e4 < 5e-2, ("bf16 path drift too large", e3, e4)

    print("KERNEL_OK")
</pallas_src>

<mosaic_0001>
module attributes {stable_mosaic.version = 11 : i64} {
  func.func @_doc_decoder_kernel(%arg0: i32, %arg1: memref<8x1x32xf32, #tpu.memory_space<vmem>>, %arg2: memref<8x1x32xf32, #tpu.memory_space<vmem>>, %arg3: memref<8x5x32xf32, #tpu.memory_space<vmem>>, %arg4: memref<8x1x5xf32, #tpu.memory_space<vmem>>, %arg5: memref<32x128xf32, #tpu.memory_space<vmem>>, %arg6: memref<32x128xf32, #tpu.memory_space<vmem>>, %arg7: memref<1x128xf32, #tpu.memory_space<vmem>>, %arg8: memref<32x32xf32, #tpu.memory_space<vmem>>, %arg9: memref<32x32xf32, #tpu.memory_space<vmem>>, %arg10: memref<32x32xf32, #tpu.memory_space<vmem>>, %arg11: memref<3x8x32xf32, #tpu.memory_space<vmem>>) attributes {dimension_semantics = [#tpu.dimension_semantics<parallel>], iteration_bounds = array<i64: 1>, scalar_prefetch = 0 : i64, scratch_operands = 0 : i64, tpu.core_type = #tpu.core_type<tc>, window_params = [{pipeline_mode = #tpu.pipeline_mode<synchronous>, transform_indices = @transform_0, window_bounds = array<i64: 8, 1, 32>}, {pipeline_mode = #tpu.pipeline_mode<synchronous>, transform_indices = @transform_1, window_bounds = array<i64: 8, 1, 32>}, {pipeline_mode = #tpu.pipeline_mode<synchronous>, transform_indices = @transform_2, window_bounds = array<i64: 8, 5, 32>}, {pipeline_mode = #tpu.pipeline_mode<synchronous>, transform_indices = @transform_3, window_bounds = array<i64: 8, 1, 5>}, {pipeline_mode = #tpu.pipeline_mode<synchronous>, transform_indices = @transform_4, window_bounds = array<i64: 32, 128>}, {pipeline_mode = #tpu.pipeline_mode<synchronous>, transform_indices = @transform_5, window_bounds = array<i64: 32, 128>}, {pipeline_mode = #tpu.pipeline_mode<synchronous>, transform_indices = @transform_6, window_bounds = array<i64: 1, 128>}, {pipeline_mode = #tpu.pipeline_mode<synchronous>, transform_indices = @transform_7, window_bounds = array<i64: 32, 32>}, {pipeline_mode = #tpu.pipeline_mode<synchronous>, transform_indices = @transform_8, window_bounds = array<i64: 32, 32>}, {pipeline_mode = #tpu.pipeline_mode<synchronous>, transform_indices = @transform_9, window_bounds = array<i64: 32, 32>}, {pipeline_mode = #tpu.pipeline_mode<synchronous>, transform_indices = @transform_10, window_bounds = array<i64: 3, 8, 32>}]} {
    %c0 = arith.constant 0 : index
    %c0_0 = arith.constant 0 : index
    %c0_1 = arith.constant 0 : index
    %0 = vector.load %arg3[%c0, %c0_0, %c0_1] : memref<8x5x32xf32, #tpu.memory_space<vmem>>, vector<8x5x32xf32>
    %c0_2 = arith.constant 0 : index
    %c0_3 = arith.constant 0 : index
    %1 = vector.load %arg5[%c0_2, %c0_3] : memref<32x128xf32, #tpu.memory_space<vmem>>, vector<32x128xf32>
    %c0_4 = arith.constant 0 : index
    %c0_5 = arith.constant 0 : index
    %2 = vector.load %arg6[%c0_4, %c0_5] : memref<32x128xf32, #tpu.memory_space<vmem>>, vector<32x128xf32>
    %c0_6 = arith.constant 0 : index
    %c0_7 = arith.constant 0 : index
    %3 = vector.load %arg8[%c0_6, %c0_7] : memref<32x32xf32, #tpu.memory_space<vmem>>, vector<32x32xf32>
    %c0_8 = arith.constant 0 : index
    %c0_9 = arith.constant 0 : index
    %4 = vector.load %arg9[%c0_8, %c0_9] : memref<32x32xf32, #tpu.memory_space<vmem>>, vector<32x32xf32>
    %c0_10 = arith.constant 0 : index
    %c0_11 = arith.constant 0 : index
    %5 = vector.load %arg10[%c0_10, %c0_11] : memref<32x32xf32, #tpu.memory_space<vmem>>, vector<32x32xf32>
    %c0_12 = arith.constant 0 : index
    %c0_13 = arith.constant 0 : index
    %6 = vector.load %arg7[%c0_12, %c0_13] : memref<1x128xf32, #tpu.memory_space<vmem>>, vector<1x128xf32>
    %7 = vector.shape_cast %6 : vector<1x128xf32> to vector<1x128xf32>
    %8 = vector.broadcast %7 : vector<1x128xf32> to vector<8x128xf32>
    %c0_14 = arith.constant 0 : index
    %c0_15 = arith.constant 0 : index
    %c0_16 = arith.constant 0 : index
    %9 = vector.load %arg4[%c0_14, %c0_15, %c0_16] : memref<8x1x5xf32, #tpu.memory_space<vmem>>, vector<8x1x5xf32>
    %10 = vector.shape_cast %9 : vector<8x1x5xf32> to vector<8x5xf32>
    %c0_17 = arith.constant 0 : index
    %c0_18 = arith.constant 0 : index
    %c0_19 = arith.constant 0 : index
    %11 = vector.load %arg2[%c0_17, %c0_18, %c0_19] : memref<8x1x32xf32, #tpu.memory_space<vmem>>, vector<8x1x32xf32>
    %12 = vector.shape_cast %11 : vector<8x1x32xf32> to vector<8x32xf32>
    %c0_20 = arith.constant 0 : index
    %c0_21 = arith.constant 0 : index
    %c0_22 = arith.constant 0 : index
    %13 = vector.load %arg1[%c0_20, %c0_21, %c0_22] : memref<8x1x32xf32, #tpu.memory_space<vmem>>, vector<8x1x32xf32>
    %14 = vector.shape_cast %13 : vector<8x1x32xf32> to vector<8x32xf32>
    %c0_i32 = arith.constant 0 : i32
    %cst = arith.constant dense<0.000000e+00> : vector<8x128xf32>
    %15 = tpu.matmul %14, %1, %cst {dimension_numbers = #tpu.dot_dimension_numbers<[1], [0], [0], [1], [0, 0, 1, 1], [], []>} : vector<8x32xf32>, vector<32x128xf32>, vector<8x128xf32> -> vector<8x128xf32>
    %cst_23 = arith.constant dense<0.000000e+00> : vector<8x128xf32>
    %16 = tpu.matmul %12, %2, %cst_23 {dimension_numbers = #tpu.dot_dimension_numbers<[1], [0], [0], [1], [0, 0, 1, 1], [], []>} : vector<8x32xf32>, vector<32x128xf32>, vector<8x128xf32> -> vector<8x128xf32>
    %17 = arith.addf %15, %16 : vector<8x128xf32>
    %18 = arith.addf %17, %8 : vector<8x128xf32>
    %19 = vector.extract_strided_slice %18 {offsets = [0, 0], sizes = [8, 32], strides = [1, 1]} : vector<8x128xf32> to vector<8x32xf32>
    %20 = arith.negf %19 : vector<8x32xf32>
    %21 = math.exp %20 : vector<8x32xf32>
    %cst_24 = arith.constant 1.000000e+00 : f32
    %22 = vector.broadcast %cst_24 : f32 to vector<8x32xf32>
    %23 = arith.addf %22, %21 : vector<8x32xf32>
    %24 = arith.divf %22, %23 : vector<8x32xf32>
    %25 = vector.extract_strided_slice %18 {offsets = [0, 32], sizes = [8, 32], strides = [1, 1]} : vector<8x128xf32> to vector<8x32xf32>
    %26 = arith.negf %25 : vector<8x32xf32>
    %27 = math.exp %26 : vector<8x32xf32>
    %cst_25 = arith.constant 1.000000e+00 : f32
    %28 = vector.broadcast %cst_25 : f32 to vector<8x32xf32>
    %29 = arith.addf %28, %27 : vector<8x32xf32>
    %30 = arith.divf %28, %29 : vector<8x32xf32>
    %31 = vector.extract_strided_slice %18 {offsets = [0, 64], sizes = [8, 32], strides = [1, 1]} : vector<8x128xf32> to vector<8x32xf32>
    %32 = math.tanh %31 : vector<8x32xf32>
    %33 = vector.extract_strided_slice %18 {offsets = [0, 96], sizes = [8, 32], strides = [1, 1]} : vector<8x128xf32> to vector<8x32xf32>
    %34 = arith.negf %33 : vector<8x32xf32>
    %35 = math.exp %34 : vector<8x32xf32>
    %cst_26 = arith.constant 1.000000e+00 : f32
    %36 = vector.broadcast %cst_26 : f32 to vector<8x32xf32>
    %37 = arith.addf %36, %35 : vector<8x32xf32>
    %38 = arith.divf %36, %37 : vector<8x32xf32>
    %39 = arith.mulf %30, %12 : vector<8x32xf32>
    %40 = arith.mulf %24, %32 : vector<8x32xf32>
    %41 = arith.addf %39, %40 : vector<8x32xf32>
    %42 = math.tanh %41 : vector<8x32xf32>
    %43 = arith.mulf %38, %42 : vector<8x32xf32>
    %cst_27 = arith.constant dense<0.000000e+00> : vector<8x32xf32>
    %44 = tpu.matmul %43, %3, %cst_27 {dimension_numbers = #tpu.dot_dimension_numbers<[1], [0], [0], [1], [0, 0, 1, 1], [], []>} : vector<8x32xf32>, vector<32x32xf32>, vector<8x32xf32> -> vector<8x32xf32>
    %45 = vector.shape_cast %44 : vector<8x32xf32> to vector<8x1x32xf32>
    %46 = vector.broadcast %45 : vector<8x1x32xf32> to vector<8x5x32xf32>
    %47 = arith.mulf %46, %0 : vector<8x5x32xf32>
    %cst_28 = arith.constant dense<0.000000e+00> : vector<8x5xf32>
    %48 = vector.multi_reduction <add>, %47, %cst_28 [2] : vector<8x5x32xf32> to vector<8x5xf32>
    %49 = arith.addf %48, %10 : vector<8x5xf32>
    %cst_29 = arith.constant dense<0xFF800000> : vector<8xf32>
    %50 = vector.multi_reduction <maximumf>, %49, %cst_29 [1] : vector<8x5xf32> to vector<8xf32>
    %51 = vector.shape_cast %50 : vector<8xf32> to vector<8x1xf32>
    %52 = vector.broadcast %51 : vector<8x1xf32> to vector<8x5xf32>
    %53 = arith.subf %49, %52 : vector<8x5xf32>
    %54 = math.exp %53 : vector<8x5xf32>
    %cst_30 = arith.constant dense<0.000000e+00> : vector<8xf32>
    %55 = vector.multi_reduction <add>, %54, %cst_30 [1] : vector<8x5xf32> to vector<8xf32>
    %56 = vector.shape_cast %55 : vector<8xf32> to vector<8x1xf32>
    %57 = tpu.reciprocal %56 : vector<8x1xf32> -> vector<8x1xf32>
    %58 = vector.broadcast %57 : vector<8x1xf32> to vector<8x5xf32>
    %59 = arith.mulf %54, %58 : vector<8x5xf32>
    %60 = vector.shape_cast %59 : vector<8x5xf32> to vector<8x5x1xf32>
    %61 = vector.broadcast %60 : vector<8x5x1xf32> to vector<8x5x32xf32>
    %62 = arith.mulf %61, %0 : vector<8x5x32xf32>
    %cst_31 = arith.constant dense<0.000000e+00> : vector<8x32xf32>
    %63 = vector.multi_reduction <add>, %62, %cst_31 [1] : vector<8x5x32xf32> to vector<8x32xf32>
    %cst_32 = arith.constant dense<0.000000e+00> : vector<8x32xf32>
    %64 = tpu.matmul %63, %4, %cst_32 {dimension_numbers = #tpu.dot_dimension_numbers<[1], [0], [0], [1], [0, 0, 1, 1], [], []>} : vector<8x32xf32>, vector<32x32xf32>, vector<8x32xf32> -> vector<8x32xf32>
    %cst_33 = arith.constant dense<0.000000e+00> : vector<8x32xf32>
    %65 = tpu.matmul %43, %5, %cst_33 {dimension_numbers = #tpu.dot_dimension_numbers<[1], [0], [0], [1], [0, 0, 1, 1], [], []>} : vector<8x32xf32>, vector<32x32xf32>, vector<8x32xf32> -> vector<8x32xf32>
    %66 = arith.addf %64, %65 : vector<8x32xf32>
    %67 = math.tanh %66 : vector<8x32xf32>
    %68 = vector.shape_cast %67 : vector<8x32xf32> to vector<1x8x32xf32>
    %69 = arith.index_cast %c0_i32 : i32 to index
    %c0_34 = arith.constant 0 : index
    %c0_35 = arith.constant 0 : index
    %70 = vector.load %arg11[%69, %c0_34, %c0_35] : memref<3x8x32xf32, #tpu.memory_space<vmem>>, vector<1x8x32xf32>
    tpu.vector_store %arg11[%69, %c0_34, %c0_35], %68 {strides = array<i32>} : memref<3x8x32xf32, #tpu.memory_space<vmem>>, vector<1x8x32xf32>,
    %c1_i32 = arith.constant 1 : i32
    %cst_36 = arith.constant dense<0.000000e+00> : vector<8x128xf32>
    %71 = tpu.matmul %67, %1, %cst_36 {dimension_numbers = #tpu.dot_dimension_numbers<[1], [0], [0], [1], [0, 0, 1, 1], [], []>} : vector<8x32xf32>, vector<32x128xf32>, vector<8x128xf32> -> vector<8x128xf32>
    %cst_37 = arith.constant dense<0.000000e+00> : vector<8x128xf32>
    %72 = tpu.matmul %43, %2, %cst_37 {dimension_numbers = #tpu.dot_dimension_numbers<[1], [0], [0], [1], [0, 0, 1, 1], [], []>} : vector<8x32xf32>, vector<32x128xf32>, vector<8x128xf32> -> vector<8x128xf32>
    %73 = arith.addf %71, %72 : vector<8x128xf32>
    %74 = arith.addf %73, %8 : vector<8x128xf32>
    %75 = vector.extract_strided_slice %74 {offsets = [0, 0], sizes = [8, 32], strides = [1, 1]} : vector<8x128xf32> to vector<8x32xf32>
    %76 = arith.negf %75 : vector<8x32xf32>
    %77 = math.exp %76 : vector<8x32xf32>
    %cst_38 = arith.constant 1.000000e+00 : f32
    %78 = vector.broadcast %cst_38 : f32 to vector<8x32xf32>
    %79 = arith.addf %78, %77 : vector<8x32xf32>
    %80 = arith.divf %78, %79 : vector<8x32xf32>
    %81 = vector.extract_strided_slice %74 {offsets = [0, 32], sizes = [8, 32], strides = [1, 1]} : vector<8x128xf32> to vector<8x32xf32>
    %82 = arith.negf %81 : vector<8x32xf32>
    %83 = math.exp %82 : vector<8x32xf32>
    %cst_39 = arith.constant 1.000000e+00 : f32
    %84 = vector.broadcast %cst_39 : f32 to vector<8x32xf32>
    %85 = arith.addf %84, %83 : vector<8x32xf32>
    %86 = arith.divf %84, %85 : vector<8x32xf32>
    %87 = vector.extract_strided_slice %74 {offsets = [0, 64], sizes = [8, 32], strides = [1, 1]} : vector<8x128xf32> to vector<8x32xf32>
    %88 = math.tanh %87 : vector<8x32xf32>
    %89 = vector.extract_strided_slice %74 {offsets = [0, 96], sizes = [8, 32], strides = [1, 1]} : vector<8x128xf32> to vector<8x32xf32>
    %90 = arith.negf %89 : vector<8x32xf32>
    %91 = math.exp %90 : vector<8x32xf32>
    %cst_40 = arith.constant 1.000000e+00 : f32
    %92 = vector.broadcast %cst_40 : f32 to vector<8x32xf32>
    %93 = arith.addf %92, %91 : vector<8x32xf32>
    %94 = arith.divf %92, %93 : vector<8x32xf32>
    %95 = arith.mulf %86, %41 : vector<8x32xf32>
    %96 = arith.mulf %80, %88 : vector<8x32xf32>
    %97 = arith.addf %95, %96 : vector<8x32xf32>
    %98 = math.tanh %97 : vector<8x32xf32>
    %99 = arith.mulf %94, %98 : vector<8x32xf32>
    %cst_41 = arith.constant dense<0.000000e+00> : vector<8x32xf32>
    %100 = tpu.matmul %99, %3, %cst_41 {dimension_numbers = #tpu.dot_dimension_numbers<[1], [0], [0], [1], [0, 0, 1, 1], [], []>} : vector<8x32xf32>, vector<32x32xf32>, vector<8x32xf32> -> vector<8x32xf32>
    %101 = vector.shape_cast %100 : vector<8x32xf32> to vector<8x1x32xf32>
    %102 = vector.broadcast %101 : vector<8x1x32xf32> to vector<8x5x32xf32>
    %103 = arith.mulf %102, %0 : vector<8x5x32xf32>
    %cst_42 = arith.constant dense<0.000000e+00> : vector<8x5xf32>
    %104 = vector.multi_reduction <add>, %103, %cst_42 [2] : vector<8x5x32xf32> to vector<8x5xf32>
    %105 = arith.addf %104, %10 : vector<8x5xf32>
    %cst_43 = arith.constant dense<0xFF800000> : vector<8xf32>
    %106 = vector.multi_reduction <maximumf>, %105, %cst_43 [1] : vector<8x5xf32> to vector<8xf32>
    %107 = vector.shape_cast %106 : vector<8xf32> to vector<8x1xf32>
    %108 = vector.broadcast %107 : vector<8x1xf32> to vector<8x5xf32>
    %109 = arith.subf %105, %108 : vector<8x5xf32>
    %110 = math.exp %109 : vector<8x5xf32>
    %cst_44 = arith.constant dense<0.000000e+00> : vector<8xf32>
    %111 = vector.multi_reduction <add>, %110, %cst_44 [1] : vector<8x5xf32> to vector<8xf32>
    %112 = vector.shape_cast %111 : vector<8xf32> to vector<8x1xf32>
    %113 = tpu.reciprocal %112 : vector<8x1xf32> -> vector<8x1xf32>
    %114 = vector.broadcast %113 : vector<8x1xf32> to vector<8x5xf32>
    %115 = arith.mulf %110, %114 : vector<8x5xf32>
    %116 = vector.shape_cast %115 : vector<8x5xf32> to vector<8x5x1xf32>
    %117 = vector.broadcast %116 : vector<8x5x1xf32> to vector<8x5x32xf32>
    %118 = arith.mulf %117, %0 : vector<8x5x32xf32>
    %cst_45 = arith.constant dense<0.000000e+00> : vector<8x32xf32>
    %119 = vector.multi_reduction <add>, %118, %cst_45 [1] : vector<8x5x32xf32> to vector<8x32xf32>
    %cst_46 = arith.constant dense<0.000000e+00> : vector<8x32xf32>
    %120 = tpu.matmul %119, %4, %cst_46 {dimension_numbers = #tpu.dot_dimension_numbers<[1], [0], [0], [1], [0, 0, 1, 1], [], []>} : vector<8x32xf32>, vector<32x32xf32>, vector<8x32xf32> -> vector<8x32xf32>
    %cst_47 = arith.constant dense<0.000000e+00> : vector<8x32xf32>
    %121 = tpu.matmul %99, %5, %cst_47 {dimension_numbers = #tpu.dot_dimension_numbers<[1], [0], [0], [1], [0, 0, 1, 1], [], []>} : vector<8x32xf32>, vector<32x32xf32>, vector<8x32xf32> -> vector<8x32xf32>
    %122 = arith.addf %120, %121 : vector<8x32xf32>
    %123 = math.tanh %122 : vector<8x32xf32>
    %124 = vector.shape_cast %123 : vector<8x32xf32> to vector<1x8x32xf32>
    %125 = arith.index_cast %c1_i32 : i32 to index
    %c0_48 = arith.constant 0 : index
    %c0_49 = arith.constant 0 : index
    %126 = vector.load %arg11[%125, %c0_48, %c0_49] : memref<3x8x32xf32, #tpu.memory_space<vmem>>, vector<1x8x32xf32>
    tpu.vector_store %arg11[%125, %c0_48, %c0_49], %124 {strides = array<i32>} : memref<3x8x32xf32, #tpu.memory_space<vmem>>, vector<1x8x32xf32>,
    %c2_i32 = arith.constant 2 : i32
    %cst_50 = arith.constant dense<0.000000e+00> : vector<8x128xf32>
    %127 = tpu.matmul %123, %1, %cst_50 {dimension_numbers = #tpu.dot_dimension_numbers<[1], [0], [0], [1], [0, 0, 1, 1], [], []>} : vector<8x32xf32>, vector<32x128xf32>, vector<8x128xf32> -> vector<8x128xf32>
    %cst_51 = arith.constant dense<0.000000e+00> : vector<8x128xf32>
    %128 = tpu.matmul %99, %2, %cst_51 {dimension_numbers = #tpu.dot_dimension_numbers<[1], [0], [0], [1], [0, 0, 1, 1], [], []>} : vector<8x32xf32>, vector<32x128xf32>, vector<8x128xf32> -> vector<8x128xf32>
    %129 = arith.addf %127, %128 : vector<8x128xf32>
    %130 = arith.addf %129, %8 : vector<8x128xf32>
    %131 = vector.extract_strided_slice %130 {offsets = [0, 0], sizes = [8, 32], strides = [1, 1]} : vector<8x128xf32> to vector<8x32xf32>
    %132 = arith.negf %131 : vector<8x32xf32>
    %133 = math.exp %132 : vector<8x32xf32>
    %cst_52 = arith.constant 1.000000e+00 : f32
    %134 = vector.broadcast %cst_52 : f32 to vector<8x32xf32>
    %135 = arith.addf %134, %133 : vector<8x32xf32>
    %136 = arith.divf %134, %135 : vector<8x32xf32>
    %137 = vector.extract_strided_slice %130 {offsets = [0, 32], sizes = [8, 32], strides = [1, 1]} : vector<8x128xf32> to vector<8x32xf32>
    %138 = arith.negf %137 : vector<8x32xf32>
    %139 = math.exp %138 : vector<8x32xf32>
    %cst_53 = arith.constant 1.000000e+00 : f32
    %140 = vector.broadcast %cst_53 : f32 to vector<8x32xf32>
    %141 = arith.addf %140, %139 : vector<8x32xf32>
    %142 = arith.divf %140, %141 : vector<8x32xf32>
    %143 = vector.extract_strided_slice %130 {offsets = [0, 64], sizes = [8, 32], strides = [1, 1]} : vector<8x128xf32> to vector<8x32xf32>
    %144 = math.tanh %143 : vector<8x32xf32>
    %145 = vector.extract_strided_slice %130 {offsets = [0, 96], sizes = [8, 32], strides = [1, 1]} : vector<8x128xf32> to vector<8x32xf32>
    %146 = arith.negf %145 : vector<8x32xf32>
    %147 = math.exp %146 : vector<8x32xf32>
    %cst_54 = arith.constant 1.000000e+00 : f32
    %148 = vector.broadcast %cst_54 : f32 to vector<8x32xf32>
    %149 = arith.addf %148, %147 : vector<8x32xf32>
    %150 = arith.divf %148, %149 : vector<8x32xf32>
    %151 = arith.mulf %142, %97 : vector<8x32xf32>
    %152 = arith.mulf %136, %144 : vector<8x32xf32>
    %153 = arith.addf %151, %152 : vector<8x32xf32>
    %154 = math.tanh %153 : vector<8x32xf32>
    %155 = arith.mulf %150, %154 : vector<8x32xf32>
    %cst_55 = arith.constant dense<0.000000e+00> : vector<8x32xf32>
    %156 = tpu.matmul %155, %3, %cst_55 {dimension_numbers = #tpu.dot_dimension_numbers<[1], [0], [0], [1], [0, 0, 1, 1], [], []>} : vector<8x32xf32>, vector<32x32xf32>, vector<8x32xf32> -> vector<8x32xf32>
    %157 = vector.shape_cast %156 : vector<8x32xf32> to vector<8x1x32xf32>
    %158 = vector.broadcast %157 : vector<8x1x32xf32> to vector<8x5x32xf32>
    %159 = arith.mulf %158, %0 : vector<8x5x32xf32>
    %cst_56 = arith.constant dense<0.000000e+00> : vector<8x5xf32>
    %160 = vector.multi_reduction <add>, %159, %cst_56 [2] : vector<8x5x32xf32> to vector<8x5xf32>
    %161 = arith.addf %160, %10 : vector<8x5xf32>
    %cst_57 = arith.constant dense<0xFF800000> : vector<8xf32>
    %162 = vector.multi_reduction <maximumf>, %161, %cst_57 [1] : vector<8x5xf32> to vector<8xf32>
    %163 = vector.shape_cast %162 : vector<8xf32> to vector<8x1xf32>
    %164 = vector.broadcast %163 : vector<8x1xf32> to vector<8x5xf32>
    %165 = arith.subf %161, %164 : vector<8x5xf32>
    %166 = math.exp %165 : vector<8x5xf32>
    %cst_58 = arith.constant dense<0.000000e+00> : vector<8xf32>
    %167 = vector.multi_reduction <add>, %166, %cst_58 [1] : vector<8x5xf32> to vector<8xf32>
    %168 = vector.shape_cast %167 : vector<8xf32> to vector<8x1xf32>
    %169 = tpu.reciprocal %168 : vector<8x1xf32> -> vector<8x1xf32>
    %170 = vector.broadcast %169 : vector<8x1xf32> to vector<8x5xf32>
    %171 = arith.mulf %166, %170 : vector<8x5xf32>
    %172 = vector.shape_cast %171 : vector<8x5xf32> to vector<8x5x1xf32>
    %173 = vector.broadcast %172 : vector<8x5x1xf32> to vector<8x5x32xf32>
    %174 = arith.mulf %173, %0 : vector<8x5x32xf32>
    %cst_59 = arith.constant dense<0.000000e+00> : vector<8x32xf32>
    %175 = vector.multi_reduction <add>, %174, %cst_59 [1] : vector<8x5x32xf32> to vector<8x32xf32>
    %cst_60 = arith.constant dense<0.000000e+00> : vector<8x32xf32>
    %176 = tpu.matmul %175, %4, %cst_60 {dimension_numbers = #tpu.dot_dimension_numbers<[1], [0], [0], [1], [0, 0, 1, 1], [], []>} : vector<8x32xf32>, vector<32x32xf32>, vector<8x32xf32> -> vector<8x32xf32>
    %cst_61 = arith.constant dense<0.000000e+00> : vector<8x32xf32>
    %177 = tpu.matmul %155, %5, %cst_61 {dimension_numbers = #tpu.dot_dimension_numbers<[1], [0], [0], [1], [0, 0, 1, 1], [], []>} : vector<8x32xf32>, vector<32x32xf32>, vector<8x32xf32> -> vector<8x32xf32>
    %178 = arith.addf %176, %177 : vector<8x32xf32>
    %179 = math.tanh %178 : vector<8x32xf32>
    %180 = vector.shape_cast %179 : vector<8x32xf32> to vector<1x8x32xf32>
    %181 = arith.index_cast %c2_i32 : i32 to index
    %c0_62 = arith.constant 0 : index
    %c0_63 = arith.constant 0 : index
    %182 = vector.load %arg11[%181, %c0_62, %c0_63] : memref<3x8x32xf32, #tpu.memory_space<vmem>>, vector<1x8x32xf32>
    tpu.vector_store %arg11[%181, %c0_62, %c0_63], %180 {strides = array<i32>} : memref<3x8x32xf32, #tpu.memory_space<vmem>>, vector<1x8x32xf32>,
    %c3_i32 = arith.constant 3 : i32
    return
  }
  func.func @transform_0(%arg0: i32) -> (i32, i32, i32) {
    %c0_i32 = arith.constant 0 : i32
    %c0_i32_0 = arith.constant 0 : i32
    %c0_i32_1 = arith.constant 0 : i32
    return %arg0, %c0_i32, %c0_i32_0 : i32, i32, i32
  }
  func.func @transform_1(%arg0: i32) -> (i32, i32, i32) {
    %c0_i32 = arith.constant 0 : i32
    %c0_i32_0 = arith.constant 0 : i32
    %c0_i32_1 = arith.constant 0 : i32
    return %arg0, %c0_i32, %c0_i32_0 : i32, i32, i32
  }
  func.func @transform_2(%arg0: i32) -> (i32, i32, i32) {
    %c0_i32 = arith.constant 0 : i32
    %c0_i32_0 = arith.constant 0 : i32
    %c0_i32_1 = arith.constant 0 : i32
    return %arg0, %c0_i32, %c0_i32_0 : i32, i32, i32
  }
  func.func @transform_3(%arg0: i32) -> (i32, i32, i32) {
    %c0_i32 = arith.constant 0 : i32
    %c0_i32_0 = arith.constant 0 : i32
    %c0_i32_1 = arith.constant 0 : i32
    return %arg0, %c0_i32, %c0_i32_0 : i32, i32, i32
  }
  func.func @transform_4(%arg0: i32) -> (i32, i32) {
    %c0_i32 = arith.constant 0 : i32
    %c0_i32_0 = arith.constant 0 : i32
    %c0_i32_1 = arith.constant 0 : i32
    return %c0_i32, %c0_i32_0 : i32, i32
  }
  func.func @transform_5(%arg0: i32) -> (i32, i32) {
    %c0_i32 = arith.constant 0 : i32
    %c0_i32_0 = arith.constant 0 : i32
    %c0_i32_1 = arith.constant 0 : i32
    return %c0_i32, %c0_i32_0 : i32, i32
  }
  func.func @transform_6(%arg0: i32) -> (i32, i32) {
    %c0_i32 = arith.constant 0 : i32
    %c0_i32_0 = arith.constant 0 : i32
    %c0_i32_1 = arith.constant 0 : i32
    return %c0_i32, %c0_i32_0 : i32, i32
  }
  func.func @transform_7(%arg0: i32) -> (i32, i32) {
    %c0_i32 = arith.constant 0 : i32
    %c0_i32_0 = arith.constant 0 : i32
    %c0_i32_1 = arith.constant 0 : i32
    return %c0_i32, %c0_i32_0 : i32, i32
  }
  func.func @transform_8(%arg0: i32) -> (i32, i32) {
    %c0_i32 = arith.constant 0 : i32
    %c0_i32_0 = arith.constant 0 : i32
    %c0_i32_1 = arith.constant 0 : i32
    return %c0_i32, %c0_i32_0 : i32, i32
  }
  func.func @transform_9(%arg0: i32) -> (i32, i32) {
    %c0_i32 = arith.constant 0 : i32
    %c0_i32_0 = arith.constant 0 : i32
    %c0_i32_1 = arith.constant 0 : i32
    return %c0_i32, %c0_i32_0 : i32, i32
  }
  func.func @transform_10(%arg0: i32) -> (i32, i32, i32) {
    %c0_i32 = arith.constant 0 : i32
    %c0_i32_0 = arith.constant 0 : i32
    %c0_i32_1 = arith.constant 0 : i32
    return %c0_i32, %arg0, %c0_i32_0 : i32, i32, i32
  }
}

module attributes {stable_mosaic.version = 11 : i64} {
  func.func @_doc_decoder_kernel(%arg0: i32, %arg1: memref<8x1x32xf32, #tpu.memory_space<vmem>>, %arg2: memref<8x1x32xf32, #tpu.memory_space<vmem>>, %arg3: memref<8x5x32xf32, #tpu.memory_space<vmem>>, %arg4: memref<8x1x5xf32, #tpu.memory_space<vmem>>, %arg5: memref<32x128xf32, #tpu.memory_space<vmem>>, %arg6: memref<32x128xf32, #tpu.memory_space<vmem>>, %arg7: memref<1x128xf32, #tpu.memory_space<vmem>>, %arg8: memref<32x32xf32, #tpu.memory_space<vmem>>, %arg9: memref<32x32xf32, #tpu.memory_space<vmem>>, %arg10: memref<32x32xf32, #tpu.memory_space<vmem>>, %arg11: memref<3x8x32xf32, #tpu.memory_space<vmem>>) attributes {dimension_semantics = [#tpu.dimension_semantics<parallel>], iteration_bounds = array<i64: 1>, scalar_prefetch = 0 : i64, scratch_operands = 0 : i64, tpu.core_type = #tpu.core_type<tc>, window_params = [{transform_indices = @transform_0, window_bounds = array<i64: 8, 1, 32>}, {transform_indices = @transform_1, window_bounds = array<i64: 8, 1, 32>}, {transform_indices = @transform_2, window_bounds = array<i64: 8, 5, 32>}, {transform_indices = @transform_3, window_bounds = array<i64: 8, 1, 5>}, {pipeline_mode = #tpu.pipeline_mode<synchronous>, transform_indices = @transform_4, window_bounds = array<i64: 32, 128>}, {pipeline_mode = #tpu.pipeline_mode<synchronous>, transform_indices = @transform_5, window_bounds = array<i64: 32, 128>}, {pipeline_mode = #tpu.pipeline_mode<synchronous>, transform_indices = @transform_6, window_bounds = array<i64: 1, 128>}, {pipeline_mode = #tpu.pipeline_mode<synchronous>, transform_indices = @transform_7, window_bounds = array<i64: 32, 32>}, {pipeline_mode = #tpu.pipeline_mode<synchronous>, transform_indices = @transform_8, window_bounds = array<i64: 32, 32>}, {pipeline_mode = #tpu.pipeline_mode<synchronous>, transform_indices = @transform_9, window_bounds = array<i64: 32, 32>}, {transform_indices = @transform_10, window_bounds = array<i64: 3, 8, 32>}]} {
    %c0 = arith.constant 0 : index
    %c0_0 = arith.constant 0 : index
    %c0_1 = arith.constant 0 : index
    %0 = vector.load %arg3[%c0, %c0_0, %c0_1] : memref<8x5x32xf32, #tpu.memory_space<vmem>>, vector<8x5x32xf32>
    %c0_2 = arith.constant 0 : index
    %c0_3 = arith.constant 0 : index
    %1 = vector.load %arg5[%c0_2, %c0_3] : memref<32x128xf32, #tpu.memory_space<vmem>>, vector<32x128xf32>
    %c0_4 = arith.constant 0 : index
    %c0_5 = arith.constant 0 : index
    %2 = vector.load %arg6[%c0_4, %c0_5] : memref<32x128xf32, #tpu.memory_space<vmem>>, vector<32x128xf32>
    %c0_6 = arith.constant 0 : index
    %c0_7 = arith.constant 0 : index
    %3 = vector.load %arg8[%c0_6, %c0_7] : memref<32x32xf32, #tpu.memory_space<vmem>>, vector<32x32xf32>
    %c0_8 = arith.constant 0 : index
    %c0_9 = arith.constant 0 : index
    %4 = vector.load %arg9[%c0_8, %c0_9] : memref<32x32xf32, #tpu.memory_space<vmem>>, vector<32x32xf32>
    %c0_10 = arith.constant 0 : index
    %c0_11 = arith.constant 0 : index
    %5 = vector.load %arg10[%c0_10, %c0_11] : memref<32x32xf32, #tpu.memory_space<vmem>>, vector<32x32xf32>
    %c0_12 = arith.constant 0 : index
    %c0_13 = arith.constant 0 : index
    %6 = vector.load %arg7[%c0_12, %c0_13] : memref<1x128xf32, #tpu.memory_space<vmem>>, vector<1x128xf32>
    %7 = vector.shape_cast %6 : vector<1x128xf32> to vector<1x128xf32>
    %8 = vector.broadcast %7 : vector<1x128xf32> to vector<8x128xf32>
    %c0_14 = arith.constant 0 : index
    %c0_15 = arith.constant 0 : index
    %c0_16 = arith.constant 0 : index
    %9 = vector.load %arg4[%c0_14, %c0_15, %c0_16] : memref<8x1x5xf32, #tpu.memory_space<vmem>>, vector<8x1x5xf32>
    %10 = vector.shape_cast %9 : vector<8x1x5xf32> to vector<8x5xf32>
    %c0_17 = arith.constant 0 : index
    %c0_18 = arith.constant 0 : index
    %c0_19 = arith.constant 0 : index
    %11 = vector.load %arg2[%c0_17, %c0_18, %c0_19] : memref<8x1x32xf32, #tpu.memory_space<vmem>>, vector<8x1x32xf32>
    %12 = vector.shape_cast %11 : vector<8x1x32xf32> to vector<8x32xf32>
    %c0_20 = arith.constant 0 : index
    %c0_21 = arith.constant 0 : index
    %c0_22 = arith.constant 0 : index
    %13 = vector.load %arg1[%c0_20, %c0_21, %c0_22] : memref<8x1x32xf32, #tpu.memory_space<vmem>>, vector<8x1x32xf32>
    %14 = vector.shape_cast %13 : vector<8x1x32xf32> to vector<8x32xf32>
    %c0_i32 = arith.constant 0 : i32
    %cst = arith.constant dense<0.000000e+00> : vector<8x128xf32>
    %15 = tpu.matmul %14, %1, %cst {dimension_numbers = #tpu.dot_dimension_numbers<[1], [0], [0], [1], [0, 0, 1, 1], [], []>} : vector<8x32xf32>, vector<32x128xf32>, vector<8x128xf32> -> vector<8x128xf32>
    %cst_23 = arith.constant dense<0.000000e+00> : vector<8x128xf32>
    %16 = tpu.matmul %12, %2, %cst_23 {dimension_numbers = #tpu.dot_dimension_numbers<[1], [0], [0], [1], [0, 0, 1, 1], [], []>} : vector<8x32xf32>, vector<32x128xf32>, vector<8x128xf32> -> vector<8x128xf32>
    %17 = arith.addf %15, %16 : vector<8x128xf32>
    %18 = arith.addf %17, %8 : vector<8x128xf32>
    %19 = vector.extract_strided_slice %18 {offsets = [0, 0], sizes = [8, 32], strides = [1, 1]} : vector<8x128xf32> to vector<8x32xf32>
    %20 = arith.negf %19 : vector<8x32xf32>
    %21 = math.exp %20 : vector<8x32xf32>
    %cst_24 = arith.constant 1.000000e+00 : f32
    %22 = vector.broadcast %cst_24 : f32 to vector<8x32xf32>
    %23 = arith.addf %22, %21 : vector<8x32xf32>
    %24 = arith.divf %22, %23 : vector<8x32xf32>
    %25 = vector.extract_strided_slice %18 {offsets = [0, 32], sizes = [8, 32], strides = [1, 1]} : vector<8x128xf32> to vector<8x32xf32>
    %26 = arith.negf %25 : vector<8x32xf32>
    %27 = math.exp %26 : vector<8x32xf32>
    %cst_25 = arith.constant 1.000000e+00 : f32
    %28 = vector.broadcast %cst_25 : f32 to vector<8x32xf32>
    %29 = arith.addf %28, %27 : vector<8x32xf32>
    %30 = arith.divf %28, %29 : vector<8x32xf32>
    %31 = vector.extract_strided_slice %18 {offsets = [0, 64], sizes = [8, 32], strides = [1, 1]} : vector<8x128xf32> to vector<8x32xf32>
    %32 = math.tanh %31 : vector<8x32xf32>
    %33 = vector.extract_strided_slice %18 {offsets = [0, 96], sizes = [8, 32], strides = [1, 1]} : vector<8x128xf32> to vector<8x32xf32>
    %34 = arith.negf %33 : vector<8x32xf32>
    %35 = math.exp %34 : vector<8x32xf32>
    %cst_26 = arith.constant 1.000000e+00 : f32
    %36 = vector.broadcast %cst_26 : f32 to vector<8x32xf32>
    %37 = arith.addf %36, %35 : vector<8x32xf32>
    %38 = arith.divf %36, %37 : vector<8x32xf32>
    %39 = arith.mulf %30, %12 : vector<8x32xf32>
    %40 = arith.mulf %24, %32 : vector<8x32xf32>
    %41 = arith.addf %39, %40 : vector<8x32xf32>
    %42 = math.tanh %41 : vector<8x32xf32>
    %43 = arith.mulf %38, %42 : vector<8x32xf32>
    %cst_27 = arith.constant dense<0.000000e+00> : vector<8x32xf32>
    %44 = tpu.matmul %43, %3, %cst_27 {dimension_numbers = #tpu.dot_dimension_numbers<[1], [0], [0], [1], [0, 0, 1, 1], [], []>} : vector<8x32xf32>, vector<32x32xf32>, vector<8x32xf32> -> vector<8x32xf32>
    %45 = vector.shape_cast %44 : vector<8x32xf32> to vector<8x1x32xf32>
    %46 = vector.broadcast %45 : vector<8x1x32xf32> to vector<8x5x32xf32>
    %47 = arith.mulf %46, %0 : vector<8x5x32xf32>
    %cst_28 = arith.constant dense<0.000000e+00> : vector<8x5xf32>
    %48 = vector.multi_reduction <add>, %47, %cst_28 [2] : vector<8x5x32xf32> to vector<8x5xf32>
    %49 = arith.addf %48, %10 : vector<8x5xf32>
    %cst_29 = arith.constant dense<0xFF800000> : vector<8xf32>
    %50 = vector.multi_reduction <maximumf>, %49, %cst_29 [1] : vector<8x5xf32> to vector<8xf32>
    %51 = vector.shape_cast %50 : vector<8xf32> to vector<8x1xf32>
    %52 = vector.broadcast %51 : vector<8x1xf32> to vector<8x5xf32>
    %53 = arith.subf %49, %52 : vector<8x5xf32>
    %54 = math.exp %53 : vector<8x5xf32>
    %cst_30 = arith.constant dense<0.000000e+00> : vector<8xf32>
    %55 = vector.multi_reduction <add>, %54, %cst_30 [1] : vector<8x5xf32> to vector<8xf32>
    %56 = vector.shape_cast %55 : vector<8xf32> to vector<8x1xf32>
    %57 = tpu.reciprocal %56 : vector<8x1xf32> -> vector<8x1xf32>
    %58 = vector.broadcast %57 : vector<8x1xf32> to vector<8x5xf32>
    %59 = arith.mulf %54, %58 : vector<8x5xf32>
    %60 = vector.shape_cast %59 : vector<8x5xf32> to vector<8x5x1xf32>
    %61 = vector.broadcast %60 : vector<8x5x1xf32> to vector<8x5x32xf32>
    %62 = arith.mulf %61, %0 : vector<8x5x32xf32>
    %cst_31 = arith.constant dense<0.000000e+00> : vector<8x32xf32>
    %63 = vector.multi_reduction <add>, %62, %cst_31 [1] : vector<8x5x32xf32> to vector<8x32xf32>
    %cst_32 = arith.constant dense<0.000000e+00> : vector<8x32xf32>
    %64 = tpu.matmul %63, %4, %cst_32 {dimension_numbers = #tpu.dot_dimension_numbers<[1], [0], [0], [1], [0, 0, 1, 1], [], []>} : vector<8x32xf32>, vector<32x32xf32>, vector<8x32xf32> -> vector<8x32xf32>
    %cst_33 = arith.constant dense<0.000000e+00> : vector<8x32xf32>
    %65 = tpu.matmul %43, %5, %cst_33 {dimension_numbers = #tpu.dot_dimension_numbers<[1], [0], [0], [1], [0, 0, 1, 1], [], []>} : vector<8x32xf32>, vector<32x32xf32>, vector<8x32xf32> -> vector<8x32xf32>
    %66 = arith.addf %64, %65 : vector<8x32xf32>
    %67 = math.tanh %66 : vector<8x32xf32>
    %68 = vector.shape_cast %67 : vector<8x32xf32> to vector<1x8x32xf32>
    %69 = arith.index_cast %c0_i32 : i32 to index
    %c0_34 = arith.constant 0 : index
    %c0_35 = arith.constant 0 : index
    %70 = vector.load %arg11[%69, %c0_34, %c0_35] : memref<3x8x32xf32, #tpu.memory_space<vmem>>, vector<1x8x32xf32>
    tpu.vector_store %arg11[%69, %c0_34, %c0_35], %68 {strides = array<i32>} : memref<3x8x32xf32, #tpu.memory_space<vmem>>, vector<1x8x32xf32>,
    %c1_i32 = arith.constant 1 : i32
    %cst_36 = arith.constant dense<0.000000e+00> : vector<8x128xf32>
    %71 = tpu.matmul %67, %1, %cst_36 {dimension_numbers = #tpu.dot_dimension_numbers<[1], [0], [0], [1], [0, 0, 1, 1], [], []>} : vector<8x32xf32>, vector<32x128xf32>, vector<8x128xf32> -> vector<8x128xf32>
    %cst_37 = arith.constant dense<0.000000e+00> : vector<8x128xf32>
    %72 = tpu.matmul %43, %2, %cst_37 {dimension_numbers = #tpu.dot_dimension_numbers<[1], [0], [0], [1], [0, 0, 1, 1], [], []>} : vector<8x32xf32>, vector<32x128xf32>, vector<8x128xf32> -> vector<8x128xf32>
    %73 = arith.addf %71, %72 : vector<8x128xf32>
    %74 = arith.addf %73, %8 : vector<8x128xf32>
    %75 = vector.extract_strided_slice %74 {offsets = [0, 0], sizes = [8, 32], strides = [1, 1]} : vector<8x128xf32> to vector<8x32xf32>
    %76 = arith.negf %75 : vector<8x32xf32>
    %77 = math.exp %76 : vector<8x32xf32>
    %cst_38 = arith.constant 1.000000e+00 : f32
    %78 = vector.broadcast %cst_38 : f32 to vector<8x32xf32>
    %79 = arith.addf %78, %77 : vector<8x32xf32>
    %80 = arith.divf %78, %79 : vector<8x32xf32>
    %81 = vector.extract_strided_slice %74 {offsets = [0, 32], sizes = [8, 32], strides = [1, 1]} : vector<8x128xf32> to vector<8x32xf32>
    %82 = arith.negf %81 : vector<8x32xf32>
    %83 = math.exp %82 : vector<8x32xf32>
    %cst_39 = arith.constant 1.000000e+00 : f32
    %84 = vector.broadcast %cst_39 : f32 to vector<8x32xf32>
    %85 = arith.addf %84, %83 : vector<8x32xf32>
    %86 = arith.divf %84, %85 : vector<8x32xf32>
    %87 = vector.extract_strided_slice %74 {offsets = [0, 64], sizes = [8, 32], strides = [1, 1]} : vector<8x128xf32> to vector<8x32xf32>
    %88 = math.tanh %87 : vector<8x32xf32>
    %89 = vector.extract_strided_slice %74 {offsets = [0, 96], sizes = [8, 32], strides = [1, 1]} : vector<8x128xf32> to vector<8x32xf32>
    %90 = arith.negf %89 : vector<8x32xf32>
    %91 = math.exp %90 : vector<8x32xf32>
    %cst_40 = arith.constant 1.000000e+00 : f32
    %92 = vector.broadcast %cst_40 : f32 to vector<8x32xf32>
    %93 = arith.addf %92, %91 : vector<8x32xf32>
    %94 = arith.divf %92, %93 : vector<8x32xf32>
    %95 = arith.mulf %86, %41 : vector<8x32xf32>
    %96 = arith.mulf %80, %88 : vector<8x32xf32>
    %97 = arith.addf %95, %96 : vector<8x32xf32>
    %98 = math.tanh %97 : vector<8x32xf32>
    %99 = arith.mulf %94, %98 : vector<8x32xf32>
    %cst_41 = arith.constant dense<0.000000e+00> : vector<8x32xf32>
    %100 = tpu.matmul %99, %3, %cst_41 {dimension_numbers = #tpu.dot_dimension_numbers<[1], [0], [0], [1], [0, 0, 1, 1], [], []>} : vector<8x32xf32>, vector<32x32xf32>, vector<8x32xf32> -> vector<8x32xf32>
    %101 = vector.shape_cast %100 : vector<8x32xf32> to vector<8x1x32xf32>
    %102 = vector.broadcast %101 : vector<8x1x32xf32> to vector<8x5x32xf32>
    %103 = arith.mulf %102, %0 : vector<8x5x32xf32>
    %cst_42 = arith.constant dense<0.000000e+00> : vector<8x5xf32>
    %104 = vector.multi_reduction <add>, %103, %cst_42 [2] : vector<8x5x32xf32> to vector<8x5xf32>
    %105 = arith.addf %104, %10 : vector<8x5xf32>
    %cst_43 = arith.constant dense<0xFF800000> : vector<8xf32>
    %106 = vector.multi_reduction <maximumf>, %105, %cst_43 [1] : vector<8x5xf32> to vector<8xf32>
    %107 = vector.shape_cast %106 : vector<8xf32> to vector<8x1xf32>
    %108 = vector.broadcast %107 : vector<8x1xf32> to vector<8x5xf32>
    %109 = arith.subf %105, %108 : vector<8x5xf32>
    %110 = math.exp %109 : vector<8x5xf32>
    %cst_44 = arith.constant dense<0.000000e+00> : vector<8xf32>
    %111 = vector.multi_reduction <add>, %110, %cst_44 [1] : vector<8x5xf32> to vector<8xf32>
    %112 = vector.shape_cast %111 : vector<8xf32> to vector<8x1xf32>
    %113 = tpu.reciprocal %112 : vector<8x1xf32> -> vector<8x1xf32>
    %114 = vector.broadcast %113 : vector<8x1xf32> to vector<8x5xf32>
    %115 = arith.mulf %110, %114 : vector<8x5xf32>
    %116 = vector.shape_cast %115 : vector<8x5xf32> to vector<8x5x1xf32>
    %117 = vector.broadcast %116 : vector<8x5x1xf32> to vector<8x5x32xf32>
    %118 = arith.mulf %117, %0 : vector<8x5x32xf32>
    %cst_45 = arith.constant dense<0.000000e+00> : vector<8x32xf32>
    %119 = vector.multi_reduction <add>, %118, %cst_45 [1] : vector<8x5x32xf32> to vector<8x32xf32>
    %cst_46 = arith.constant dense<0.000000e+00> : vector<8x32xf32>
    %120 = tpu.matmul %119, %4, %cst_46 {dimension_numbers = #tpu.dot_dimension_numbers<[1], [0], [0], [1], [0, 0, 1, 1], [], []>} : vector<8x32xf32>, vector<32x32xf32>, vector<8x32xf32> -> vector<8x32xf32>
    %cst_47 = arith.constant dense<0.000000e+00> : vector<8x32xf32>
    %121 = tpu.matmul %99, %5, %cst_47 {dimension_numbers = #tpu.dot_dimension_numbers<[1], [0], [0], [1], [0, 0, 1, 1], [], []>} : vector<8x32xf32>, vector<32x32xf32>, vector<8x32xf32> -> vector<8x32xf32>
    %122 = arith.addf %120, %121 : vector<8x32xf32>
    %123 = math.tanh %122 : vector<8x32xf32>
    %124 = vector.shape_cast %123 : vector<8x32xf32> to vector<1x8x32xf32>
    %125 = arith.index_cast %c1_i32 : i32 to index
    %c0_48 = arith.constant 0 : index
    %c0_49 = arith.constant 0 : index
    %126 = vector.load %arg11[%125, %c0_48, %c0_49] : memref<3x8x32xf32, #tpu.memory_space<vmem>>, vector<1x8x32xf32>
    tpu.vector_store %arg11[%125, %c0_48, %c0_49], %124 {strides = array<i32>} : memref<3x8x32xf32, #tpu.memory_space<vmem>>, vector<1x8x32xf32>,
    %c2_i32 = arith.constant 2 : i32
    %cst_50 = arith.constant dense<0.000000e+00> : vector<8x128xf32>
    %127 = tpu.matmul %123, %1, %cst_50 {dimension_numbers = #tpu.dot_dimension_numbers<[1], [0], [0], [1], [0, 0, 1, 1], [], []>} : vector<8x32xf32>, vector<32x128xf32>, vector<8x128xf32> -> vector<8x128xf32>
    %cst_51 = arith.constant dense<0.000000e+00> : vector<8x128xf32>
    %128 = tpu.matmul %99, %2, %cst_51 {dimension_numbers = #tpu.dot_dimension_numbers<[1], [0], [0], [1], [0, 0, 1, 1], [], []>} : vector<8x32xf32>, vector<32x128xf32>, vector<8x128xf32> -> vector<8x128xf32>
    %129 = arith.addf %127, %128 : vector<8x128xf32>
    %130 = arith.addf %129, %8 : vector<8x128xf32>
    %131 = vector.extract_strided_slice %130 {offsets = [0, 0], sizes = [8, 32], strides = [1, 1]} : vector<8x128xf32> to vector<8x32xf32>
    %132 = arith.negf %131 : vector<8x32xf32>
    %133 = math.exp %132 : vector<8x32xf32>
    %cst_52 = arith.constant 1.000000e+00 : f32
    %134 = vector.broadcast %cst_52 : f32 to vector<8x32xf32>
    %135 = arith.addf %134, %133 : vector<8x32xf32>
    %136 = arith.divf %134, %135 : vector<8x32xf32>
    %137 = vector.extract_strided_slice %130 {offsets = [0, 32], sizes = [8, 32], strides = [1, 1]} : vector<8x128xf32> to vector<8x32xf32>
    %138 = arith.negf %137 : vector<8x32xf32>
    %139 = math.exp %138 : vector<8x32xf32>
    %cst_53 = arith.constant 1.000000e+00 : f32
    %140 = vector.broadcast %cst_53 : f32 to vector<8x32xf32>
    %141 = arith.addf %140, %139 : vector<8x32xf32>
    %142 = arith.divf %140, %141 : vector<8x32xf32>
    %143 = vector.extract_strided_slice %130 {offsets = [0, 64], sizes = [8, 32], strides = [1, 1]} : vector<8x128xf32> to vector<8x32xf32>
    %144 = math.tanh %143 : vector<8x32xf32>
    %145 = vector.extract_strided_slice %130 {offsets = [0, 96], sizes = [8, 32], strides = [1, 1]} : vector<8x128xf32> to vector<8x32xf32>
    %146 = arith.negf %145 : vector<8x32xf32>
    %147 = math.exp %146 : vector<8x32xf32>
    %cst_54 = arith.constant 1.000000e+00 : f32
    %148 = vector.broadcast %cst_54 : f32 to vector<8x32xf32>
    %149 = arith.addf %148, %147 : vector<8x32xf32>
    %150 = arith.divf %148, %149 : vector<8x32xf32>
    %151 = arith.mulf %142, %97 : vector<8x32xf32>
    %152 = arith.mulf %136, %144 : vector<8x32xf32>
    %153 = arith.addf %151, %152 : vector<8x32xf32>
    %154 = math.tanh %153 : vector<8x32xf32>
    %155 = arith.mulf %150, %154 : vector<8x32xf32>
    %cst_55 = arith.constant dense<0.000000e+00> : vector<8x32xf32>
    %156 = tpu.matmul %155, %3, %cst_55 {dimension_numbers = #tpu.dot_dimension_numbers<[1], [0], [0], [1], [0, 0, 1, 1], [], []>} : vector<8x32xf32>, vector<32x32xf32>, vector<8x32xf32> -> vector<8x32xf32>
    %157 = vector.shape_cast %156 : vector<8x32xf32> to vector<8x1x32xf32>
    %158 = vector.broadcast %157 : vector<8x1x32xf32> to vector<8x5x32xf32>
    %159 = arith.mulf %158, %0 : vector<8x5x32xf32>
    %cst_56 = arith.constant dense<0.000000e+00> : vector<8x5xf32>
    %160 = vector.multi_reduction <add>, %159, %cst_56 [2] : vector<8x5x32xf32> to vector<8x5xf32>
    %161 = arith.addf %160, %10 : vector<8x5xf32>
    %cst_57 = arith.constant dense<0xFF800000> : vector<8xf32>
    %162 = vector.multi_reduction <maximumf>, %161, %cst_57 [1] : vector<8x5xf32> to vector<8xf32>
    %163 = vector.shape_cast %162 : vector<8xf32> to vector<8x1xf32>
    %164 = vector.broadcast %163 : vector<8x1xf32> to vector<8x5xf32>
    %165 = arith.subf %161, %164 : vector<8x5xf32>
    %166 = math.exp %165 : vector<8x5xf32>
    %cst_58 = arith.constant dense<0.000000e+00> : vector<8xf32>
    %167 = vector.multi_reduction <add>, %166, %cst_58 [1] : vector<8x5xf32> to vector<8xf32>
    %168 = vector.shape_cast %167 : vector<8xf32> to vector<8x1xf32>
    %169 = tpu.reciprocal %168 : vector<8x1xf32> -> vector<8x1xf32>
    %170 = vector.broadcast %169 : vector<8x1xf32> to vector<8x5xf32>
    %171 = arith.mulf %166, %170 : vector<8x5xf32>
    %172 = vector.shape_cast %171 : vector<8x5xf32> to vector<8x5x1xf32>
    %173 = vector.broadcast %172 : vector<8x5x1xf32> to vector<8x5x32xf32>
    %174 = arith.mulf %173, %0 : vector<8x5x32xf32>
    %cst_59 = arith.constant dense<0.000000e+00> : vector<8x32xf32>
    %175 = vector.multi_reduction <add>, %174, %cst_59 [1] : vector<8x5x32xf32> to vector<8x32xf32>
    %cst_60 = arith.constant dense<0.000000e+00> : vector<8x32xf32>
    %176 = tpu.matmul %175, %4, %cst_60 {dimension_numbers = #tpu.dot_dimension_numbers<[1], [0], [0], [1], [0, 0, 1, 1], [], []>} : vector<8x32xf32>, vector<32x32xf32>, vector<8x32xf32> -> vector<8x32xf32>
    %cst_61 = arith.constant dense<0.000000e+00> : vector<8x32xf32>
    %177 = tpu.matmul %155, %5, %cst_61 {dimension_numbers = #tpu.dot_dimension_numbers<[1], [0], [0], [1], [0, 0, 1, 1], [], []>} : vector<8x32xf32>, vector<32x32xf32>, vector<8x32xf32> -> vector<8x32xf32>
    %178 = arith.addf %176, %177 : vector<8x32xf32>
    %179 = math.tanh %178 : vector<8x32xf32>
    %180 = vector.shape_cast %179 : vector<8x32xf32> to vector<1x8x32xf32>
    %181 = arith.index_cast %c2_i32 : i32 to index
    %c0_62 = arith.constant 0 : index
    %c0_63 = arith.constant 0 : index
    %182 = vector.load %arg11[%181, %c0_62, %c0_63] : memref<3x8x32xf32, #tpu.memory_space<vmem>>, vector<1x8x32xf32>
    tpu.vector_store %arg11[%181, %c0_62, %c0_63], %180 {strides = array<i32>} : memref<3x8x32xf32, #tpu.memory_space<vmem>>, vector<1x8x32xf32>,
    %c3_i32 = arith.constant 3 : i32
    return
  }
  func.func @transform_0(%arg0: i32) -> (i32, i32, i32) {
    %c0_i32 = arith.constant 0 : i32
    %c0_i32_0 = arith.constant 0 : i32
    %c0_i32_1 = arith.constant 0 : i32
    return %arg0, %c0_i32, %c0_i32_0 : i32, i32, i32
  }
  func.func @transform_1(%arg0: i32) -> (i32, i32, i32) {
    %c0_i32 = arith.constant 0 : i32
    %c0_i32_0 = arith.constant 0 : i32
    %c0_i32_1 = arith.constant 0 : i32
    return %arg0, %c0_i32, %c0_i32_0 : i32, i32, i32
  }
  func.func @transform_2(%arg0: i32) -> (i32, i32, i32) {
    %c0_i32 = arith.constant 0 : i32
    %c0_i32_0 = arith.constant 0 : i32
    %c0_i32_1 = arith.constant 0 : i32
    return %arg0, %c0_i32, %c0_i32_0 : i32, i32, i32
  }
  func.func @transform_3(%arg0: i32) -> (i32, i32, i32) {
    %c0_i32 = arith.constant 0 : i32
    %c0_i32_0 = arith.constant 0 : i32
    %c0_i32_1 = arith.constant 0 : i32
    return %arg0, %c0_i32, %c0_i32_0 : i32, i32, i32
  }
  func.func @transform_4(%arg0: i32) -> (i32, i32) {
    %c0_i32 = arith.constant 0 : i32
    %c0_i32_0 = arith.constant 0 : i32
    %c0_i32_1 = arith.constant 0 : i32
    return %c0_i32, %c0_i32_0 : i32, i32
  }
  func.func @transform_5(%arg0: i32) -> (i32, i32) {
    %c0_i32 = arith.constant 0 : i32
    %c0_i32_0 = arith.constant 0 : i32
    %c0_i32_1 = arith.constant 0 : i32
    return %c0_i32, %c0_i32_0 : i32, i32
  }
  func.func @transform_6(%arg0: i32) -> (i32, i32) {
    %c0_i32 = arith.constant 0 : i32
    %c0_i32_0 = arith.constant 0 : i32
    %c0_i32_1 = arith.constant 0 : i32
    return %c0_i32, %c0_i32_0 : i32, i32
  }
  func.func @transform_7(%arg0: i32) -> (i32, i32) {
    %c0_i32 = arith.constant 0 : i32
    %c0_i32_0 = arith.constant 0 : i32
    %c0_i32_1 = arith.constant 0 : i32
    return %c0_i32, %c0_i32_0 : i32, i32
  }
  func.func @transform_8(%arg0: i32) -> (i32, i32) {
    %c0_i32 = arith.constant 0 : i32
    %c0_i32_0 = arith.constant 0 : i32
    %c0_i32_1 = arith.constant 0 : i32
    return %c0_i32, %c0_i32_0 : i32, i32
  }
  func.func @transform_9(%arg0: i32) -> (i32, i32) {
    %c0_i32 = arith.constant 0 : i32
    %c0_i32_0 = arith.constant 0 : i32
    %c0_i32_1 = arith.constant 0 : i32
    return %c0_i32, %c0_i32_0 : i32, i32
  }
  func.func @transform_10(%arg0: i32) -> (i32, i32, i32) {
    %c0_i32 = arith.constant 0 : i32
    %c0_i32_0 = arith.constant 0 : i32
    %c0_i32_1 = arith.constant 0 : i32
    return %c0_i32, %arg0, %c0_i32_0 : i32, i32, i32
  }
}

</mosaic_0001>

<llo_original>
// kernel: tpu_custom_call.1
$region0: #{tpu_custom_call.1}
  #allocation0 [shape = 'u32[]', space=smem, size = 0x4, offset = 0x4, fixed_abs, tag = 'smem constant byte address 0x4 - core index']
  #allocation1 [shape = 'u32[144,128]{1,0:T(1,128)}', space=vmem, size = 0x12000, scoped, tag = 'internal scratch']
  %s0 = inlined_call_operand.hbm [shape: f32[8,1,32], index: 0, kind: input, shape index: {}]
  %s1 = inlined_call_operand.hbm [shape: f32[8,1,32], index: 1, kind: input, shape index: {}]
  %s2 = inlined_call_operand.vmem [shape: f32[8,5,32], index: 2, kind: input, shape index: {}]
  %s3 = inlined_call_operand.vmem [shape: f32[8,1,5], index: 3, kind: input, shape index: {}]
  %s4 = inlined_call_operand.vmem [shape: f32[32,128], index: 4, kind: input, shape index: {}]
  %s5 = inlined_call_operand.vmem [shape: f32[32,128], index: 5, kind: input, shape index: {}]
  %s6 = inlined_call_operand.vmem [shape: f32[1,128], index: 6, kind: input, shape index: {}]
  %s7 = inlined_call_operand.vmem [shape: f32[32,32], index: 7, kind: input, shape index: {}]
  %s8 = inlined_call_operand.vmem [shape: f32[32,32], index: 8, kind: input, shape index: {}]
  %s9 = inlined_call_operand.hbm [shape: f32[32,32], index: 9, kind: input, shape index: {}]
  %s10 = inlined_call_operand.hbm [shape: f32[3,8,32], index: 10, kind: output, shape index: {}]
  %s11 = sld [smem:[#allocation0]]
  $region62: #{tpu_custom_call.1} parent=0
    _
  %s13 = ssub.s32 1, %s11
  %s14 = scalar_select 0, %s13, %s11
  $region1: #{tpu_custom_call.1} parent=0
    #allocation2 [shape = 'u8[4096]{0}', space=vmem, size = 0x1000, scoped, tag = 'input window, operand 0, single buffered']
    #allocation3 [shape = 's32[1]{0}', space=sflag, size = 0x4, scoped, tag = 'scoped memory for tpu_custom_call.1']
    #allocation4 [shape = 's32[1]{0}', space=sflag, size = 0x4, scoped, tag = 'scoped memory for tpu_custom_call.1']
    #allocation5 [shape = 'u8[4096]{0}', space=vmem, size = 0x1000, scoped, tag = 'input window, operand 1, single buffered']
    #allocation6 [shape = 's32[1]{0}', space=sflag, size = 0x4, scoped, tag = 'scoped memory for tpu_custom_call.1']
    #allocation7 [shape = 'u8[16384]{0}', space=vmem, size = 0x4000, scoped, tag = 'input window, operand 9, single buffered']
    #allocation8 [shape = 'u8[12288]{0}', space=vmem, size = 0x3000, scoped, tag = 'output window, operand 0, single buffered']
    %15 = vsyncpa [#allocation3], 0
    %16 = vsyncpa [#allocation6], 0
    %17 = vsyncpa [#allocation4], 0
    // Predicated region
    $region2: #{tpu_custom_call.1} parent=1 // pred_check
      _
    $region3: #{tpu_custom_call.1} parent=1 // pred_check_branch
      %19 = sbr.rel (0) target = $region5
    $region4: #{tpu_custom_call.1} parent=1 // pred_region
      %s21 = ssub.s32 128, 128
      %22 = vsyncadd [#allocation3], %s21
      %s23 = sshll.u32 [#allocation2], 4
      %s24 = int_to_ptr.vmem [resolvable:$true] %s23
      %29 = dma.hbm_to_vmem [thread:$0]  %s0, 128, %s24, [#allocation3], 16, 16, 1
    $region5: #{tpu_custom_call.1} parent=1 // pred_fallthru
      _
    // Predicated region
    $region6: #{tpu_custom_call.1} parent=1 // pred_check
      _
    $region7: #{tpu_custom_call.1} parent=1 // pred_check_branch
      %31 = sbr.rel (0) target = $region9
    $region8: #{tpu_custom_call.1} parent=1 // pred_region
      %s33 = ssub.s32 128, 128
      %34 = vsyncadd [#allocation6], %s33
      %s35 = sshll.u32 [#allocation5], 4
      %s36 = int_to_ptr.vmem [resolvable:$true] %s35
      %41 = dma.hbm_to_vmem [thread:$0]  %s1, 128, %s36, [#allocation6], 16, 16, 1
    $region9: #{tpu_custom_call.1} parent=1 // pred_fallthru
      _
    // Predicated region
    $region10: #{tpu_custom_call.1} parent=1 // pred_check
      _
    $region11: #{tpu_custom_call.1} parent=1 // pred_check_branch
      %43 = sbr.rel (0) target = $region13
    $region12: #{tpu_custom_call.1} parent=1 // pred_region
      _
    $region13: #{tpu_custom_call.1} parent=1 // pred_fallthru
      _
    // Predicated region
    $region14: #{tpu_custom_call.1} parent=1 // pred_check
      _
    $region15: #{tpu_custom_call.1} parent=1 // pred_check_branch
      %45 = sbr.rel (0) target = $region17
    $region16: #{tpu_custom_call.1} parent=1 // pred_region
      _
    $region17: #{tpu_custom_call.1} parent=1 // pred_fallthru
      _
    // Predicated region
    $region18: #{tpu_custom_call.1} parent=1 // pred_check
      _
    $region19: #{tpu_custom_call.1} parent=1 // pred_check_branch
      %47 = sbr.rel (0) target = $region21
    $region20: #{tpu_custom_call.1} parent=1 // pred_region
      _
    $region21: #{tpu_custom_call.1} parent=1 // pred_fallthru
      _
    // Predicated region
    $region22: #{tpu_custom_call.1} parent=1 // pred_check
      _
    $region23: #{tpu_custom_call.1} parent=1 // pred_check_branch
      %49 = sbr.rel (0) target = $region25
    $region24: #{tpu_custom_call.1} parent=1 // pred_region
      _
    $region25: #{tpu_custom_call.1} parent=1 // pred_fallthru
      _
    // Predicated region
    $region26: #{tpu_custom_call.1} parent=1 // pred_check
      _
    $region27: #{tpu_custom_call.1} parent=1 // pred_check_branch
      %51 = sbr.rel (0) target = $region29
    $region28: #{tpu_custom_call.1} parent=1 // pred_region
      _
    $region29: #{tpu_custom_call.1} parent=1 // pred_fallthru
      _
    // Predicated region
    $region30: #{tpu_custom_call.1} parent=1 // pred_check
      _
    $region31: #{tpu_custom_call.1} parent=1 // pred_check_branch
      %53 = sbr.rel (0) target = $region33
    $region32: #{tpu_custom_call.1} parent=1 // pred_region
      _
    $region33: #{tpu_custom_call.1} parent=1 // pred_fallthru
      _
    // Predicated region
    $region34: #{tpu_custom_call.1} parent=1 // pred_check
      _
    $region35: #{tpu_custom_call.1} parent=1 // pred_check_branch
      %55 = sbr.rel (0) target = $region37
    $region36: #{tpu_custom_call.1} parent=1 // pred_region
      _
    $region37: #{tpu_custom_call.1} parent=1 // pred_fallthru
      _
    // Predicated region
    $region38: #{tpu_custom_call.1} parent=1 // pred_check
      _
    $region39: #{tpu_custom_call.1} parent=1 // pred_check_branch
      %57 = sbr.rel (0) target = $region41
    $region40: #{tpu_custom_call.1} parent=1 // pred_region
      %s59 = ssub.s32 512, 512
      %60 = vsyncadd [#allocation6], %s59
      %s61 = sshll.u32 [#allocation7], 4
      %s62 = int_to_ptr.vmem [resolvable:$true] %s61
      %67 = dma.hbm_to_vmem [thread:$0]  %s9, 512, %s62, [#allocation6], 128, 128, 8
    $region41: #{tpu_custom_call.1} parent=1 // pred_fallthru
      _
    // Predicated region
    $region42: #{tpu_custom_call.1} parent=1 // pred_check
      _
    $region43: #{tpu_custom_call.1} parent=1 // pred_check_branch
      %69 = sbr.rel (0) target = $region45
    $region44: #{tpu_custom_call.1} parent=1 // pred_region
      %70 = dma.done [#allocation3], 128
    $region45: #{tpu_custom_call.1} parent=1 // pred_fallthru
      _
    // Predicated region
    $region46: #{tpu_custom_call.1} parent=1 // pred_check
      _
    $region47: #{tpu_custom_call.1} parent=1 // pred_check_branch
      %72 = sbr.rel (0) target = $region49
    $region48: #{tpu_custom_call.1} parent=1 // pred_region
      %73 = dma.done [#allocation6], 128
    $region49: #{tpu_custom_call.1} parent=1 // pred_fallthru
      _
    // Predicated region
    $region50: #{tpu_custom_call.1} parent=1 // pred_check
      _
    $region51: #{tpu_custom_call.1} parent=1 // pred_check_branch
      %75 = sbr.rel (0) target = $region53
    $region52: #{tpu_custom_call.1} parent=1 // pred_region
      %76 = dma.done [#allocation6], 512
    $region53: #{tpu_custom_call.1} parent=1 // pred_fallthru
      _
    %v77 = vld [vmem:[%s2] sm:$0x1f]
    %v78 = vld [vmem:[%s2 + $0x8] sm:$0x1f]
    %v79 = vld [vmem:[%s2 + $0x10] sm:$0x1f]
    %v80 = vld [vmem:[%s2 + $0x18] sm:$0x1f]
    %v81 = vld [vmem:[%s2 + $0x20] sm:$0x1f]
    %v82 = vld [vmem:[%s2 + $0x28] sm:$0x1f]
    %v83 = vld [vmem:[%s2 + $0x30] sm:$0x1f]
    %v84 = vld [vmem:[%s2 + $0x38] sm:$0x1f]
    %v85 = vld [vmem:[%s4] sm:$0xff]
    %v86 = vld [vmem:[%s4 + $0x8] sm:$0xff]
    %v87 = vld [vmem:[%s4 + $0x10] sm:$0xff]
    %v88 = vld [vmem:[%s4 + $0x18] sm:$0xff]
    %v89 = vld [vmem:[%s5] sm:$0xff]
    %v90 = vld [vmem:[%s5 + $0x8] sm:$0xff]
    %v91 = vld [vmem:[%s5 + $0x10] sm:$0xff]
    %v92 = vld [vmem:[%s5 + $0x18] sm:$0xff]
    %v93 = vld [vmem:[%s7] sm:$0xff]
    %v94 = vld [vmem:[%s7 + $0x8] sm:$0xff]
    %v95 = vld [vmem:[%s7 + $0x10] sm:$0xff]
    %v96 = vld [vmem:[%s7 + $0x18] sm:$0xff]
    %v97 = vld [vmem:[%s8] sm:$0xff]
    %v98 = vld [vmem:[%s8 + $0x8] sm:$0xff]
    %v99 = vld [vmem:[%s8 + $0x10] sm:$0xff]
    %v100 = vld [vmem:[%s8 + $0x18] sm:$0xff]
    %v101 = vld [vmem:[#allocation7] sm:$0xff]
    %v102 = vld [vmem:[#allocation7 + $0x8] sm:$0xff]
    %v103 = vld [vmem:[#allocation7 + $0x10] sm:$0xff]
    %v104 = vld [vmem:[#allocation7 + $0x18] sm:$0xff]
    %v105 = vld [vmem:[%s6] sm:$0x1]
    %v107 = vlaneseq
    %v108 = vshrl.u32 %v107, 7
    %v109 = vsub.s32 0, %v108
    %v110 = vrot.slane %v105, %v109
    %v112 = vld [vmem:[%s3] sm:$0x1]
    %v113 = vld [vmem:[%s3 + $0x1] sm:$0x1]
    %v114 = vld [vmem:[%s3 + $0x2] sm:$0x1]
    %v115 = vld [vmem:[%s3 + $0x3] sm:$0x1]
    %v116 = vld [vmem:[%s3 + $0x4] sm:$0x1]
    %v117 = vld [vmem:[%s3 + $0x5] sm:$0x1]
    %v118 = vld [vmem:[%s3 + $0x6] sm:$0x1]
    %v119 = vld [vmem:[%s3 + $0x7] sm:$0x1]
    %v120 = vld [vmem:[#allocation5] sm:$0x1]
    %v121 = vld [vmem:[#allocation5 + $0x1] sm:$0x1]
    %v122 = vld [vmem:[#allocation5 + $0x2] sm:$0x1]
    %v123 = vld [vmem:[#allocation5 + $0x3] sm:$0x1]
    %v124 = vld [vmem:[#allocation5 + $0x4] sm:$0x1]
    %v125 = vld [vmem:[#allocation5 + $0x5] sm:$0x1]
    %v126 = vld [vmem:[#allocation5 + $0x6] sm:$0x1]
    %v127 = vld [vmem:[#allocation5 + $0x7] sm:$0x1]
    %v128 = vld [vmem:[#allocation2] sm:$0x1]
    %v129 = vld [vmem:[#allocation2 + $0x1] sm:$0x1]
    %v130 = vld [vmem:[#allocation2 + $0x2] sm:$0x1]
    %v131 = vld [vmem:[#allocation2 + $0x3] sm:$0x1]
    %v132 = vld [vmem:[#allocation2 + $0x4] sm:$0x1]
    %v133 = vld [vmem:[#allocation2 + $0x5] sm:$0x1]
    %v134 = vld [vmem:[#allocation2 + $0x6] sm:$0x1]
    %v135 = vld [vmem:[#allocation2 + $0x7] sm:$0x1]
    %v144 = vcombine.low %v120, %v121
    %v145 = vcombine.low %v122, %v123
    %v146 = vcombine.low %v124, %v125
    %v147 = vcombine.low %v126, %v127
    %v149 = vunpack.c.l.s4 1966171168
    %v150 = vunpack.c.0.s8 %v149
    %v151 = vlaneseq
    %v152 = vshrl.u32 %v151, 7
    %v153 = vsub.s32 %v150, %v152
    %v154 = vrot.slane %v144, %v153
    %v156 = vunpack.c.l.s4 1966171168
    %v157 = vunpack.c.0.s8 %v156
    %v158 = vlaneseq
    %v159 = vshrl.u32 %v158, 7
    %v160 = vsub.s32 %v157, %v159
    %v161 = vrot.slane %v145, %v160
    %v163 = vunpack.c.l.s4 1966171168
    %v164 = vunpack.c.0.s8 %v163
    %v165 = vlaneseq
    %v166 = vshrl.u32 %v165, 7
    %v167 = vsub.s32 %v164, %v166
    %v168 = vrot.slane %v146, %v167
    %v170 = vunpack.c.l.s4 1966171168
    %v171 = vunpack.c.0.s8 %v170
    %v172 = vlaneseq
    %v173 = vshrl.u32 %v172, 7
    %v174 = vsub.s32 %v171, %v173
    %v175 = vrot.slane %v147, %v174
    %v176 = vcombine.low %v154, %v161
    %v177 = vcombine.low %v168, %v175
    %v179 = vunpack.c.l.s4 1966171168
    %v180 = vunpack.c.0.s8 %v179
    %v181 = vlaneseq
    %v182 = vshrl.u32 %v181, 7
    %v183 = vsub.s32 %v180, %v182
    %v184 = vrot.slane %v176, %v183
    %v186 = vunpack.c.l.s4 1966171168
    %v187 = vunpack.c.0.s8 %v186
    %v188 = vlaneseq
    %v189 = vshrl.u32 %v188, 7
    %v190 = vsub.s32 %v187, %v189
    %v191 = vrot.slane %v177, %v190
    %v192 = vcombine.low %v184, %v191
    %vm193 = vcmask 261120
    %v194 = vsel %vm193, %v192, 0
    %196 = vmatprep.subr.mxu0 0.0
    %197 = vmatpush1.msra.mxu0 %v89
    %198 = vmatprep.subr.mxu0 0.0
    %199 = vmatpush1.msra.mxu0 %v90
    %200 = vmatprep.subr.mxu0 0.0
    %201 = vmatpush1.msra.mxu0 %v91
    %202 = vmatprep.subr.mxu0 0.0
    %203 = vmatpush1.msra.mxu0 %v92
    %204 = vmatprep.subr.mxu0 0.0
    %205 = vmatpush1.msra.mxu0 0.0
    %206 = vmatprep.subr.mxu0 0.0
    %207 = vmatpush1.msra.mxu0 0.0
    %208 = vmatprep.subr.mxu0 0.0
    %209 = vmatpush1.msra.mxu0 0.0
    %210 = vmatprep.subr.mxu0 0.0
    %211 = vmatpush1.msra.mxu0 0.0
    %212 = vmatprep.subr.mxu0 0.0
    %213 = vmatpush1.msra.mxu0 0.0
    %214 = vmatprep.subr.mxu0 0.0
    %215 = vmatpush1.msra.mxu0 0.0
    %216 = vmatprep.subr.mxu0 0.0
    %217 = vmatpush1.msra.mxu0 0.0
    %218 = vmatprep.subr.mxu0 0.0
    %219 = vmatpush1.msra.mxu0 0.0
    %220 = vmatprep.subr.mxu0 0.0
    %221 = vmatpush1.msra.mxu0 0.0
    %222 = vmatprep.subr.mxu0 0.0
    %223 = vmatpush1.msra.mxu0 0.0
    %224 = vmatprep.subr.mxu0 0.0
    %225 = vmatpush1.msra.mxu0 0.0
    %226 = vmatprep.subr.mxu0 0.0
    %227 = vmatpush1.msra.mxu0 0.0
    %228 = vmatprep.subr.mxu0 0.0
    %229 = vmatpush1.msra.mxu0 0.0
    %230 = vmatprep.subr.mxu0 0.0
    %231 = vmatpush1.msra.mxu0 0.0
    %232 = vmatprep.subr.mxu0 0.0
    %233 = vmatpush1.msra.mxu0 0.0
    %234 = vmatprep.subr.mxu0 0.0
    %235 = vmatpush1.msra.mxu0 0.0
    %236 = vmatprep.subr.mxu0 0.0
    %237 = vmatpush1.msra.mxu0 0.0
    %238 = vmatprep.subr.mxu0 0.0
    %239 = vmatpush1.msra.mxu0 0.0
    %240 = vmatprep.subr.mxu0 0.0
    %241 = vmatpush1.msra.mxu0 0.0
    %242 = vmatprep.subr.mxu0 0.0
    %243 = vmatpush1.msra.mxu0 0.0
    %244 = vmatprep.subr.mxu0 0.0
    %245 = vmatpush1.msra.mxu0 0.0
    %246 = vmatprep.subr.mxu0 0.0
    %247 = vmatpush1.msra.mxu0 0.0
    %248 = vmatprep.subr.mxu0 0.0
    %249 = vmatpush1.msra.mxu0 0.0
    %250 = vmatprep.subr.mxu0 0.0
    %251 = vmatpush1.msra.mxu0 0.0
    %252 = vmatprep.subr.mxu0 0.0
    %253 = vmatpush1.msra.mxu0 0.0
    %254 = vmatprep.subr.mxu0 0.0
    %255 = vmatpush1.msra.mxu0 0.0
    %256 = vmatprep.subr.mxu0 0.0
    %257 = vmatpush1.msra.mxu0 0.0
    %258 = vmatprep.subr.mxu0 0.0
    %259 = vmatpush1.msra.mxu0 0.0
    %260 = vmatprep.mubr.f32.mxu0 0.0
    %261 = vmatmul.mubr.f32.gmra.mrb[0].mxu0 %v194
    %v262 = vpop.f32.mrb[0].mxu0
    %v263 = vadd.f32 0.0, %v262
    %v264 = vpop.f32.mrb[0].mxu0
    %265 = vdwg.mxu0
    %v274 = vcombine.low %v128, %v129
    %v275 = vcombine.low %v130, %v131
    %v276 = vcombine.low %v132, %v133
    %v277 = vcombine.low %v134, %v135
    %v279 = vunpack.c.l.s4 1966171168
    %v280 = vunpack.c.0.s8 %v279
    %v281 = vlaneseq
    %v282 = vshrl.u32 %v281, 7
    %v283 = vsub.s32 %v280, %v282
    %v284 = vrot.slane %v274, %v283
    %v286 = vunpack.c.l.s4 1966171168
    %v287 = vunpack.c.0.s8 %v286
    %v288 = vlaneseq
    %v289 = vshrl.u32 %v288, 7
    %v290 = vsub.s32 %v287, %v289
    %v291 = vrot.slane %v275, %v290
    %v293 = vunpack.c.l.s4 1966171168
    %v294 = vunpack.c.0.s8 %v293
    %v295 = vlaneseq
    %v296 = vshrl.u32 %v295, 7
    %v297 = vsub.s32 %v294, %v296
    %v298 = vrot.slane %v276, %v297
    %v300 = vunpack.c.l.s4 1966171168
    %v301 = vunpack.c.0.s8 %v300
    %v302 = vlaneseq
    %v303 = vshrl.u32 %v302, 7
    %v304 = vsub.s32 %v301, %v303
    %v305 = vrot.slane %v277, %v304
    %v306 = vcombine.low %v284, %v291
    %v307 = vcombine.low %v298, %v305
    %v309 = vunpack.c.l.s4 1966171168
    %v310 = vunpack.c.0.s8 %v309
    %v311 = vlaneseq
    %v312 = vshrl.u32 %v311, 7
    %v313 = vsub.s32 %v310, %v312
    %v314 = vrot.slane %v306, %v313
    %v316 = vunpack.c.l.s4 1966171168
    %v317 = vunpack.c.0.s8 %v316
    %v318 = vlaneseq
    %v319 = vshrl.u32 %v318, 7
    %v320 = vsub.s32 %v317, %v319
    %v321 = vrot.slane %v307, %v320
    %v322 = vcombine.low %v314, %v321
    %v323 = vsel %vm193, %v322, 0
    %325 = vmatprep.subr.mxu0 0.0
    %326 = vmatpush1.msra.mxu0 %v85
    %327 = vmatprep.subr.mxu0 0.0
    %328 = vmatpush1.msra.mxu0 %v86
    %329 = vmatprep.subr.mxu0 0.0
    %330 = vmatpush1.msra.mxu0 %v87
    %331 = vmatprep.subr.mxu0 0.0
    %332 = vmatpush1.msra.mxu0 %v88
    %333 = vmatprep.subr.mxu0 0.0
    %334 = vmatpush1.msra.mxu0 0.0
    %335 = vmatprep.subr.mxu0 0.0
    %336 = vmatpush1.msra.mxu0 0.0
    %337 = vmatprep.subr.mxu0 0.0
    %338 = vmatpush1.msra.mxu0 0.0
    %339 = vmatprep.subr.mxu0 0.0
    %340 = vmatpush1.msra.mxu0 0.0
    %341 = vmatprep.subr.mxu0 0.0
    %342 = vmatpush1.msra.mxu0 0.0
    %343 = vmatprep.subr.mxu0 0.0
    %344 = vmatpush1.msra.mxu0 0.0
    %345 = vmatprep.subr.mxu0 0.0
    %346 = vmatpush1.msra.mxu0 0.0
    %347 = vmatprep.subr.mxu0 0.0
    %348 = vmatpush1.msra.mxu0 0.0
    %349 = vmatprep.subr.mxu0 0.0
    %350 = vmatpush1.msra.mxu0 0.0
    %351 = vmatprep.subr.mxu0 0.0
    %352 = vmatpush1.msra.mxu0 0.0
    %353 = vmatprep.subr.mxu0 0.0
    %354 = vmatpush1.msra.mxu0 0.0
    %355 = vmatprep.subr.mxu0 0.0
    %356 = vmatpush1.msra.mxu0 0.0
    %357 = vmatprep.subr.mxu0 0.0
    %358 = vmatpush1.msra.mxu0 0.0
    %359 = vmatprep.subr.mxu0 0.0
    %360 = vmatpush1.msra.mxu0 0.0
    %361 = vmatprep.subr.mxu0 0.0
    %362 = vmatpush1.msra.mxu0 0.0
    %363 = vmatprep.subr.mxu0 0.0
    %364 = vmatpush1.msra.mxu0 0.0
    %365 = vmatprep.subr.mxu0 0.0
    %366 = vmatpush1.msra.mxu0 0.0
    %367 = vmatprep.subr.mxu0 0.0
    %368 = vmatpush1.msra.mxu0 0.0
    %369 = vmatprep.subr.mxu0 0.0
    %370 = vmatpush1.msra.mxu0 0.0
    %371 = vmatprep.subr.mxu0 0.0
    %372 = vmatpush1.msra.mxu0 0.0
    %373 = vmatprep.subr.mxu0 0.0
    %374 = vmatpush1.msra.mxu0 0.0
    %375 = vmatprep.subr.mxu0 0.0
    %376 = vmatpush1.msra.mxu0 0.0
    %377 = vmatprep.subr.mxu0 0.0
    %378 = vmatpush1.msra.mxu0 0.0
    %379 = vmatprep.subr.mxu0 0.0
    %380 = vmatpush1.msra.mxu0 0.0
    %381 = vmatprep.subr.mxu0 0.0
    %382 = vmatpush1.msra.mxu0 0.0
    %383 = vmatprep.subr.mxu0 0.0
    %384 = vmatpush1.msra.mxu0 0.0
    %385 = vmatprep.subr.mxu0 0.0
    %386 = vmatpush1.msra.mxu0 0.0
    %387 = vmatprep.subr.mxu0 0.0
    %388 = vmatpush1.msra.mxu0 0.0
    %389 = vmatprep.mubr.f32.mxu0 0.0
    %390 = vmatmul.mubr.f32.gmra.mrb[0].mxu0 %v323
    %v391 = vpop.f32.mrb[0].mxu0
    %v392 = vadd.f32 %v263, %v391
    %v393 = vpop.f32.mrb[0].mxu0
    %394 = vdwg.mxu0
    %v395 = vadd.f32 %v392, %v110
    %v396 = vxor.u32 %v395, 2147483648
    %v397 = vmul.f32 %v396, 1.442695
    %v398 = vpow.pop %v397
    %v399 = vadd.f32 %v398, 1.0
    %v400 = vrcp.pop %v399
    %v401 = vmul.f32 1.0, %v400
    %v402 = vtanh.pop %v395
    %403 = vrot.lane.b32.xlu0 %v192, 32
    %v404 = vpop.permute.xlu0 %403
    %v406 = vmul.f32 %v401, %v404
    %408 = vrot.lane.b32.xlu0 %v402, 64
    %v409 = vpop.permute.xlu0 %408
    %v411 = vmul.f32 %v401, %v409
    %413 = vrot.lane.b32.xlu0 %v411, 32
    %v414 = vpop.permute.xlu0 %413
    %v416 = vadd.f32 %v406, %v414
    %v417 = vtanh.pop %v416
    %419 = vrot.lane.b32.xlu0 %v417, 64
    %v420 = vpop.permute.xlu0 %419
    %v422 = vmul.f32 %v401, %v420
    %424 = vrot.lane.b32.xlu0 %v422, 32
    %v425 = vpop.permute.xlu0 %424
    %v426 = vsel %vm193, %v425, 0
    %428 = vmatprep.subr.mxu0 0.0
    %429 = vmatpush1.msra.mxu0 %v93
    %430 = vmatprep.subr.mxu0 0.0
    %431 = vmatpush1.msra.mxu0 %v94
    %432 = vmatprep.subr.mxu0 0.0
    %433 = vmatpush1.msra.mxu0 %v95
    %434 = vmatprep.subr.mxu0 0.0
    %435 = vmatpush1.msra.mxu0 %v96
    %436 = vmatprep.subr.mxu0 0.0
    %437 = vmatpush1.msra.mxu0 0.0
    %438 = vmatprep.subr.mxu0 0.0
    %439 = vmatpush1.msra.mxu0 0.0
    %440 = vmatprep.subr.mxu0 0.0
    %441 = vmatpush1.msra.mxu0 0.0
    %442 = vmatprep.subr.mxu0 0.0
    %443 = vmatpush1.msra.mxu0 0.0
    %444 = vmatprep.subr.mxu0 0.0
    %445 = vmatpush1.msra.mxu0 0.0
    %446 = vmatprep.subr.mxu0 0.0
    %447 = vmatpush1.msra.mxu0 0.0
    %448 = vmatprep.subr.mxu0 0.0
    %449 = vmatpush1.msra.mxu0 0.0
    %450 = vmatprep.subr.mxu0 0.0
    %451 = vmatpush1.msra.mxu0 0.0
    %452 = vmatprep.subr.mxu0 0.0
    %453 = vmatpush1.msra.mxu0 0.0
    %454 = vmatprep.subr.mxu0 0.0
    %455 = vmatpush1.msra.mxu0 0.0
    %456 = vmatprep.subr.mxu0 0.0
    %457 = vmatpush1.msra.mxu0 0.0
    %458 = vmatprep.subr.mxu0 0.0
    %459 = vmatpush1.msra.mxu0 0.0
    %460 = vmatprep.subr.mxu0 0.0
    %461 = vmatpush1.msra.mxu0 0.0
    %462 = vmatprep.subr.mxu0 0.0
    %463 = vmatpush1.msra.mxu0 0.0
    %464 = vmatprep.subr.mxu0 0.0
    %465 = vmatpush1.msra.mxu0 0.0
    %466 = vmatprep.subr.mxu0 0.0
    %467 = vmatpush1.msra.mxu0 0.0
    %468 = vmatprep.subr.mxu0 0.0
    %469 = vmatpush1.msra.mxu0 0.0
    %470 = vmatprep.subr.mxu0 0.0
    %471 = vmatpush1.msra.mxu0 0.0
    %472 = vmatprep.subr.mxu0 0.0
    %473 = vmatpush1.msra.mxu0 0.0
    %474 = vmatprep.subr.mxu0 0.0
    %475 = vmatpush1.msra.mxu0 0.0
    %476 = vmatprep.subr.mxu0 0.0
    %477 = vmatpush1.msra.mxu0 0.0
    %478 = vmatprep.subr.mxu0 0.0
    %479 = vmatpush1.msra.mxu0 0.0
    %480 = vmatprep.subr.mxu0 0.0
    %481 = vmatpush1.msra.mxu0 0.0
    %482 = vmatprep.subr.mxu0 0.0
    %483 = vmatpush1.msra.mxu0 0.0
    %484 = vmatprep.subr.mxu0 0.0
    %485 = vmatpush1.msra.mxu0 0.0
    %486 = vmatprep.subr.mxu0 0.0
    %487 = vmatpush1.msra.mxu0 0.0
    %488 = vmatprep.subr.mxu0 0.0
    %489 = vmatpush1.msra.mxu0 0.0
    %490 = vmatprep.subr.mxu0 0.0
    %491 = vmatpush1.msra.mxu0 0.0
    %492 = vmatprep.mubr.f32.mxu0 0.0
    %493 = vmatmul.mubr.f32.gmra.mrb[0].mxu0 %v426
    %v494 = vpop.f32.mrb[0].mxu0
    %v495 = vadd.f32 0.0, %v494
    %v496 = vpop.f32.mrb[0].mxu0
    %497 = vdwg.mxu0
    %v499 = vcombine.high %v495, %v495
    %v501 = vunpack.c.l.s4 1966171168
    %v502 = vunpack.c.0.s8 %v501
    %v503 = vlaneseq
    %v504 = vshrl.u32 %v503, 7
    %v505 = vsub.s32 %v502, %v504
    %v506 = vrot.slane %v495, %v505
    %v508 = vunpack.c.l.s4 1966171168
    %v509 = vunpack.c.0.s8 %v508
    %v510 = vlaneseq
    %v511 = vshrl.u32 %v510, 7
    %v512 = vsub.s32 %v509, %v511
    %v513 = vrot.slane %v499, %v512
    %v514 = vcombine.high %v506, %v506
    %v515 = vcombine.high %v513, %v513
    %v517 = vunpack.c.l.s4 1966171168
    %v518 = vunpack.c.0.s8 %v517
    %v519 = vlaneseq
    %v520 = vshrl.u32 %v519, 7
    %v521 = vsub.s32 %v518, %v520
    %v522 = vrot.slane %v506, %v521
    %v524 = vunpack.c.l.s4 1966171168
    %v525 = vunpack.c.0.s8 %v524
    %v526 = vlaneseq
    %v527 = vshrl.u32 %v526, 7
    %v528 = vsub.s32 %v525, %v527
    %v529 = vrot.slane %v513, %v528
    %v531 = vunpack.c.l.s4 1966171168
    %v532 = vunpack.c.0.s8 %v531
    %v533 = vlaneseq
    %v534 = vshrl.u32 %v533, 7
    %v535 = vsub.s32 %v532, %v534
    %v536 = vrot.slane %v514, %v535
    %v538 = vunpack.c.l.s4 1966171168
    %v539 = vunpack.c.0.s8 %v538
    %v540 = vlaneseq
    %v541 = vshrl.u32 %v540, 7
    %v542 = vsub.s32 %v539, %v541
    %v543 = vrot.slane %v515, %v542
    %v544 = vcombine.high %v522, %v522
    %v545 = vcombine.high %v529, %v529
    %v546 = vcombine.high %v536, %v536
    %v547 = vcombine.high %v543, %v543
    %v548 = vlaneseq
    %v549 = vshrl.u32 %v548, 7
    %v550 = vsub.s32 0, %v549
    %v551 = vrot.slane %v522, %v550
    %v552 = vlaneseq
    %v553 = vshrl.u32 %v552, 7
    %v554 = vsub.s32 0, %v553
    %v555 = vrot.slane %v536, %v554
    %v556 = vlaneseq
    %v557 = vshrl.u32 %v556, 7
    %v558 = vsub.s32 0, %v557
    %v559 = vrot.slane %v544, %v558
    %v560 = vlaneseq
    %v561 = vshrl.u32 %v560, 7
    %v562 = vsub.s32 0, %v561
    %v563 = vrot.slane %v546, %v562
    %v564 = vlaneseq
    %v565 = vshrl.u32 %v564, 7
    %v566 = vsub.s32 0, %v565
    %v567 = vrot.slane %v529, %v566
    %v568 = vlaneseq
    %v569 = vshrl.u32 %v568, 7
    %v570 = vsub.s32 0, %v569
    %v571 = vrot.slane %v543, %v570
    %v572 = vlaneseq
    %v573 = vshrl.u32 %v572, 7
    %v574 = vsub.s32 0, %v573
    %v575 = vrot.slane %v545, %v574
    %v576 = vlaneseq
    %v577 = vshrl.u32 %v576, 7
    %v578 = vsub.s32 0, %v577
    %v579 = vrot.slane %v547, %v578
    %v588 = vmul.f32 %v551, %v77
    %v589 = vmul.f32 %v555, %v78
    %v590 = vmul.f32 %v559, %v79
    %v591 = vmul.f32 %v563, %v80
    %v592 = vmul.f32 %v567, %v81
    %v593 = vmul.f32 %v571, %v82
    %v594 = vmul.f32 %v575, %v83
    %v595 = vmul.f32 %v579, %v84
    %vm596 = vcmask 258048
    %v597 = vsel %vm596, %v588, 0.0
    %598 = vadd.xlane.f32.xlu0 %v597
    %v599 = vpop.xlane.xlu0 %598
    %v600 = vsel %vm596, %v589, 0.0
    %601 = vadd.xlane.f32.xlu0 %v600
    %v602 = vpop.xlane.xlu0 %601
    %v603 = vsel %vm596, %v590, 0.0
    %604 = vadd.xlane.f32.xlu0 %v603
    %v605 = vpop.xlane.xlu0 %604
    %v606 = vsel %vm596, %v591, 0.0
    %607 = vadd.xlane.f32.xlu0 %v606
    %v608 = vpop.xlane.xlu0 %607
    %v609 = vsel %vm596, %v592, 0.0
    %610 = vadd.xlane.f32.xlu0 %v609
    %v611 = vpop.xlane.xlu0 %610
    %v612 = vsel %vm596, %v593, 0.0
    %613 = vadd.xlane.f32.xlu0 %v612
    %v614 = vpop.xlane.xlu0 %613
    %v615 = vsel %vm596, %v594, 0.0
    %616 = vadd.xlane.f32.xlu0 %v615
    %v617 = vpop.xlane.xlu0 %616
    %v618 = vsel %vm596, %v595, 0.0
    %619 = vadd.xlane.f32.xlu0 %v618
    %v620 = vpop.xlane.xlu0 %619
    %v629 = vlaneseq
    %v630 = vshrl.u32 %v629, 7
    %v631 = vsub.s32 0, %v630
    %v632 = vrot.slane %v112, %v631
    %v633 = vlaneseq
    %v634 = vshrl.u32 %v633, 7
    %v635 = vsub.s32 0, %v634
    %v636 = vrot.slane %v113, %v635
    %v637 = vlaneseq
    %v638 = vshrl.u32 %v637, 7
    %v639 = vsub.s32 0, %v638
    %v640 = vrot.slane %v114, %v639
    %v641 = vlaneseq
    %v642 = vshrl.u32 %v641, 7
    %v643 = vsub.s32 0, %v642
    %v644 = vrot.slane %v115, %v643
    %v645 = vlaneseq
    %v646 = vshrl.u32 %v645, 7
    %v647 = vsub.s32 0, %v646
    %v648 = vrot.slane %v116, %v647
    %v649 = vlaneseq
    %v650 = vshrl.u32 %v649, 7
    %v651 = vsub.s32 0, %v650
    %v652 = vrot.slane %v117, %v651
    %v653 = vlaneseq
    %v654 = vshrl.u32 %v653, 7
    %v655 = vsub.s32 0, %v654
    %v656 = vrot.slane %v118, %v655
    %v657 = vlaneseq
    %v658 = vshrl.u32 %v657, 7
    %v659 = vsub.s32 0, %v658
    %v660 = vrot.slane %v119, %v659
    %662 = vbcast.lane.b32.xlu0 %v632, 256
    %v663 = vpop.permute.xlu0 %662
    %665 = vbcast.lane.b32.xlu0 %v636, 256
    %v666 = vpop.permute.xlu0 %665
    %668 = vbcast.lane.b32.xlu0 %v640, 256
    %v669 = vpop.permute.xlu0 %668
    %671 = vbcast.lane.b32.xlu0 %v644, 256
    %v672 = vpop.permute.xlu0 %671
    %674 = vbcast.lane.b32.xlu0 %v648, 256
    %v675 = vpop.permute.xlu0 %674
    %677 = vbcast.lane.b32.xlu0 %v652, 256
    %v678 = vpop.permute.xlu0 %677
    %680 = vbcast.lane.b32.xlu0 %v656, 256
    %v681 = vpop.permute.xlu0 %680
    %683 = vbcast.lane.b32.xlu0 %v660, 256
    %v684 = vpop.permute.xlu0 %683
    %v693 = vadd.f32 %v599, %v663
    %v694 = vadd.f32 %v602, %v666
    %v695 = vadd.f32 %v605, %v669
    %v696 = vadd.f32 %v608, %v672
    %v697 = vadd.f32 %v611, %v675
    %v698 = vadd.f32 %v614, %v678
    %v699 = vadd.f32 %v617, %v681
    %v700 = vadd.f32 %v620, %v684
    %709 = vset.pattern.permute.xlu0 0
    %710 = vperm.xlu0 %709, %v693
    %v711 = vpop.permute.xlu0 %710
    %712 = vset.pattern.permute.xlu0 0
    %713 = vperm.xlu0 %712, %v694
    %v714 = vpop.permute.xlu0 %713
    %715 = vset.pattern.permute.xlu0 0
    %716 = vperm.xlu0 %715, %v695
    %v717 = vpop.permute.xlu0 %716
    %718 = vset.pattern.permute.xlu0 0
    %719 = vperm.xlu0 %718, %v696
    %v720 = vpop.permute.xlu0 %719
    %721 = vset.pattern.permute.xlu0 0
    %722 = vperm.xlu0 %721, %v697
    %v723 = vpop.permute.xlu0 %722
    %724 = vset.pattern.permute.xlu0 0
    %725 = vperm.xlu0 %724, %v698
    %v726 = vpop.permute.xlu0 %725
    %727 = vset.pattern.permute.xlu0 0
    %728 = vperm.xlu0 %727, %v699
    %v729 = vpop.permute.xlu0 %728
    %730 = vset.pattern.permute.xlu0 0
    %731 = vperm.xlu0 %730, %v700
    %v732 = vpop.permute.xlu0 %731
    %v733 = vlaneseq
    %v734 = vand.u32 %v733, 127
    %v735 = vlaneseq
    %v736 = vshrl.u32 %v735, 7
    %v737 = vsub.s32 %v734, %v736
    %v738 = vrot.slane %v711, %v737
    %v739 = vlaneseq
    %v740 = vshrl.u32 %v739, 7
    %v741 = vsub.s32 %v734, %v740
    %v742 = vrot.slane %v714, %v741
    %v743 = vlaneseq
    %v744 = vshrl.u32 %v743, 7
    %v745 = vsub.s32 %v734, %v744
    %v746 = vrot.slane %v717, %v745
    %v747 = vlaneseq
    %v748 = vshrl.u32 %v747, 7
    %v749 = vsub.s32 %v734, %v748
    %v750 = vrot.slane %v720, %v749
    %v751 = vlaneseq
    %v752 = vshrl.u32 %v751, 7
    %v753 = vsub.s32 %v734, %v752
    %v754 = vrot.slane %v723, %v753
    %v755 = vlaneseq
    %v756 = vshrl.u32 %v755, 7
    %v757 = vsub.s32 %v734, %v756
    %v758 = vrot.slane %v726, %v757
    %v759 = vlaneseq
    %v760 = vshrl.u32 %v759, 7
    %v761 = vsub.s32 %v734, %v760
    %v762 = vrot.slane %v729, %v761
    %v763 = vlaneseq
    %v764 = vshrl.u32 %v763, 7
    %v765 = vsub.s32 %v734, %v764
    %v766 = vrot.slane %v732, %v765
    %vm767 = vcmask 1041409
    %v768 = vsel %vm767, %v742, %v738
    %vm769 = vcmask 1042434
    %v770 = vsel %vm769, %v746, %v768
    %vm771 = vcmask 1043459
    %v772 = vsel %vm771, %v750, %v770
    %vm773 = vcmask 1044484
    %v774 = vsel %vm773, %v754, %v772
    %vm775 = vcmask 1045509
    %v776 = vsel %vm775, %v758, %v774
    %vm777 = vcmask 1046534
    %v778 = vsel %vm777, %v762, %v776
    %vm779 = vcmask 1047559
    %v780 = vsel %vm779, %v766, %v778
    %vm782 = vcmask 39936
    %v783 = vsel %vm782, %v780, -inf
    %784 = vmax.xlane.f32.xlu0 %v783
    %v785 = vpop.xlane.xlu0 %784
    %v787 = vlaneseq
    %v788 = vshrl.u32 %v787, 7
    %v789 = vsub.s32 0, %v788
    %v790 = vrot.slane %v785, %v789
    %v791 = vlaneseq
    %v792 = vshrl.u32 %v791, 7
    %v793 = vsub.s32 1, %v792
    %v794 = vrot.slane %v785, %v793
    %v795 = vlaneseq
    %v796 = vshrl.u32 %v795, 7
    %v797 = vsub.s32 2, %v796
    %v798 = vrot.slane %v785, %v797
    %v799 = vlaneseq
    %v800 = vshrl.u32 %v799, 7
    %v801 = vsub.s32 3, %v800
    %v802 = vrot.slane %v785, %v801
    %v803 = vlaneseq
    %v804 = vshrl.u32 %v803, 7
    %v805 = vsub.s32 4, %v804
    %v806 = vrot.slane %v785, %v805
    %v807 = vlaneseq
    %v808 = vshrl.u32 %v807, 7
    %v809 = vsub.s32 5, %v808
    %v810 = vrot.slane %v785, %v809
    %v811 = vlaneseq
    %v812 = vshrl.u32 %v811, 7
    %v813 = vsub.s32 6, %v812
    %v814 = vrot.slane %v785, %v813
    %v815 = vlaneseq
    %v816 = vshrl.u32 %v815, 7
    %v817 = vsub.s32 7, %v816
    %v818 = vrot.slane %v785, %v817
    %v827 = vsub.f32 %v693, %v790
    %v828 = vsub.f32 %v694, %v794
    %v829 = vsub.f32 %v695, %v798
    %v830 = vsub.f32 %v696, %v802
    %v831 = vsub.f32 %v697, %v806
    %v832 = vsub.f32 %v698, %v810
    %v833 = vsub.f32 %v699, %v814
    %v834 = vsub.f32 %v700, %v818
    %v835 = vmul.f32 %v827, 1.442695
    %v836 = vpow.pop %v835
    %v837 = vmul.f32 %v828, 1.442695
    %v838 = vpow.pop %v837
    %v839 = vmul.f32 %v829, 1.442695
    %v840 = vpow.pop %v839
    %v841 = vmul.f32 %v830, 1.442695
    %v842 = vpow.pop %v841
    %v843 = vmul.f32 %v831, 1.442695
    %v844 = vpow.pop %v843
    %v845 = vmul.f32 %v832, 1.442695
    %v846 = vpow.pop %v845
    %v847 = vmul.f32 %v833, 1.442695
    %v848 = vpow.pop %v847
    %v849 = vmul.f32 %v834, 1.442695
    %v850 = vpow.pop %v849
    %859 = vset.pattern.permute.xlu0 0
    %860 = vperm.xlu0 %859, %v836
    %v861 = vpop.permute.xlu0 %860
    %862 = vset.pattern.permute.xlu0 0
    %863 = vperm.xlu0 %862, %v838
    %v864 = vpop.permute.xlu0 %863
    %865 = vset.pattern.permute.xlu0 0
    %866 = vperm.xlu0 %865, %v840
    %v867 = vpop.permute.xlu0 %866
    %868 = vset.pattern.permute.xlu0 0
    %869 = vperm.xlu0 %868, %v842
    %v870 = vpop.permute.xlu0 %869
    %871 = vset.pattern.permute.xlu0 0
    %872 = vperm.xlu0 %871, %v844
    %v873 = vpop.permute.xlu0 %872
    %874 = vset.pattern.permute.xlu0 0
    %875 = vperm.xlu0 %874, %v846
    %v876 = vpop.permute.xlu0 %875
    %877 = vset.pattern.permute.xlu0 0
    %878 = vperm.xlu0 %877, %v848
    %v879 = vpop.permute.xlu0 %878
    %880 = vset.pattern.permute.xlu0 0
    %881 = vperm.xlu0 %880, %v850
    %v882 = vpop.permute.xlu0 %881
    %v883 = vlaneseq
    %v884 = vshrl.u32 %v883, 7
    %v885 = vsub.s32 %v734, %v884
    %v886 = vrot.slane %v861, %v885
    %v887 = vlaneseq
    %v888 = vshrl.u32 %v887, 7
    %v889 = vsub.s32 %v734, %v888
    %v890 = vrot.slane %v864, %v889
    %v891 = vlaneseq
    %v892 = vshrl.u32 %v891, 7
    %v893 = vsub.s32 %v734, %v892
    %v894 = vrot.slane %v867, %v893
    %v895 = vlaneseq
    %v896 = vshrl.u32 %v895, 7
    %v897 = vsub.s32 %v734, %v896
    %v898 = vrot.slane %v870, %v897
    %v899 = vlaneseq
    %v900 = vshrl.u32 %v899, 7
    %v901 = vsub.s32 %v734, %v900
    %v902 = vrot.slane %v873, %v901
    %v903 = vlaneseq
    %v904 = vshrl.u32 %v903, 7
    %v905 = vsub.s32 %v734, %v904
    %v906 = vrot.slane %v876, %v905
    %v907 = vlaneseq
    %v908 = vshrl.u32 %v907, 7
    %v909 = vsub.s32 %v734, %v908
    %v910 = vrot.slane %v879, %v909
    %v911 = vlaneseq
    %v912 = vshrl.u32 %v911, 7
    %v913 = vsub.s32 %v734, %v912
    %v914 = vrot.slane %v882, %v913
    %v915 = vsel %vm767, %v890, %v886
    %v916 = vsel %vm769, %v894, %v915
    %v917 = vsel %vm771, %v898, %v916
    %v918 = vsel %vm773, %v902, %v917
    %v919 = vsel %vm775, %v906, %v918
    %v920 = vsel %vm777, %v910, %v919
    %v921 = vsel %vm779, %v914, %v920
    %v923 = vsel %vm782, %v921, 0.0
    %924 = vadd.xlane.f32.xlu0 %v923
    %v925 = vpop.xlane.xlu0 %924
    %v926 = vrcp.pop %v925
    %v928 = vlaneseq
    %v929 = vshrl.u32 %v928, 7
    %v930 = vsub.s32 0, %v929
    %v931 = vrot.slane %v926, %v930
    %v932 = vlaneseq
    %v933 = vshrl.u32 %v932, 7
    %v934 = vsub.s32 1, %v933
    %v935 = vrot.slane %v926, %v934
    %v936 = vlaneseq
    %v937 = vshrl.u32 %v936, 7
    %v938 = vsub.s32 2, %v937
    %v939 = vrot.slane %v926, %v938
    %v940 = vlaneseq
    %v941 = vshrl.u32 %v940, 7
    %v942 = vsub.s32 3, %v941
    %v943 = vrot.slane %v926, %v942
    %v944 = vlaneseq
    %v945 = vshrl.u32 %v944, 7
    %v946 = vsub.s32 4, %v945
    %v947 = vrot.slane %v926, %v946
    %v948 = vlaneseq
    %v949 = vshrl.u32 %v948, 7
    %v950 = vsub.s32 5, %v949
    %v951 = vrot.slane %v926, %v950
    %v952 = vlaneseq
    %v953 = vshrl.u32 %v952, 7
    %v954 = vsub.s32 6, %v953
    %v955 = vrot.slane %v926, %v954
    %v956 = vlaneseq
    %v957 = vshrl.u32 %v956, 7
    %v958 = vsub.s32 7, %v957
    %v959 = vrot.slane %v926, %v958
    %v968 = vmul.f32 %v836, %v931
    %v969 = vmul.f32 %v838, %v935
    %v970 = vmul.f32 %v840, %v939
    %v971 = vmul.f32 %v842, %v943
    %v972 = vmul.f32 %v844, %v947
    %v973 = vmul.f32 %v846, %v951
    %v974 = vmul.f32 %v848, %v955
    %v975 = vmul.f32 %v850, %v959
    %977 = vset.pattern.permute.xlu0 0
    %978 = vperm.xlu0 %977, %v968
    %v979 = vpop.permute.xlu0 %978
    %982 = vset.pattern.permute.xlu0 0
    %983 = vperm.xlu0 %982, %v969
    %v984 = vpop.permute.xlu0 %983
    %987 = vset.pattern.permute.xlu0 0
    %988 = vperm.xlu0 %987, %v970
    %v989 = vpop.permute.xlu0 %988
    %992 = vset.pattern.permute.xlu0 0
    %993 = vperm.xlu0 %992, %v971
    %v994 = vpop.permute.xlu0 %993
    %997 = vset.pattern.permute.xlu0 0
    %998 = vperm.xlu0 %997, %v972
    %v999 = vpop.permute.xlu0 %998
    %1002 = vset.pattern.permute.xlu0 0
    %1003 = vperm.xlu0 %1002, %v973
    %v1004 = vpop.permute.xlu0 %1003
    %1007 = vset.pattern.permute.xlu0 0
    %1008 = vperm.xlu0 %1007, %v974
    %v1009 = vpop.permute.xlu0 %1008
    %1012 = vset.pattern.permute.xlu0 0
    %1013 = vperm.xlu0 %1012, %v975
    %v1014 = vpop.permute.xlu0 %1013
    %v1016 = vmul.f32 %v979, %v77
    %v1017 = vmul.f32 %v984, %v78
    %v1018 = vmul.f32 %v989, %v79
    %v1019 = vmul.f32 %v994, %v80
    %v1020 = vmul.f32 %v999, %v81
    %v1021 = vmul.f32 %v1004, %v82
    %v1022 = vmul.f32 %v1009, %v83
    %v1023 = vmul.f32 %v1014, %v84
    %v1024 = vsel %vm596, %v1016, 0.0
    %v1025 = vrot.slane %v1024, 4
    %v1026 = vadd.f32 %v1024, %v1025
    %v1027 = vrot.slane %v1026, 2
    %v1028 = vadd.f32 %v1026, %v1027
    %v1029 = vrot.slane %v1028, 1
    %v1030 = vadd.f32 %v1028, %v1029
    %v1031 = vsel %vm596, %v1017, 0.0
    %v1032 = vrot.slane %v1031, 4
    %v1033 = vadd.f32 %v1031, %v1032
    %v1034 = vrot.slane %v1033, 2
    %v1035 = vadd.f32 %v1033, %v1034
    %v1036 = vrot.slane %v1035, 1
    %v1037 = vadd.f32 %v1035, %v1036
    %v1038 = vsel %vm596, %v1018, 0.0
    %v1039 = vrot.slane %v1038, 4
    %v1040 = vadd.f32 %v1038, %v1039
    %v1041 = vrot.slane %v1040, 2
    %v1042 = vadd.f32 %v1040, %v1041
    %v1043 = vrot.slane %v1042, 1
    %v1044 = vadd.f32 %v1042, %v1043
    %v1045 = vsel %vm596, %v1019, 0.0
    %v1046 = vrot.slane %v1045, 4
    %v1047 = vadd.f32 %v1045, %v1046
    %v1048 = vrot.slane %v1047, 2
    %v1049 = vadd.f32 %v1047, %v1048
    %v1050 = vrot.slane %v1049, 1
    %v1051 = vadd.f32 %v1049, %v1050
    %v1052 = vsel %vm596, %v1020, 0.0
    %v1053 = vrot.slane %v1052, 4
    %v1054 = vadd.f32 %v1052, %v1053
    %v1055 = vrot.slane %v1054, 2
    %v1056 = vadd.f32 %v1054, %v1055
    %v1057 = vrot.slane %v1056, 1
    %v1058 = vadd.f32 %v1056, %v1057
    %v1059 = vsel %vm596, %v1021, 0.0
    %v1060 = vrot.slane %v1059, 4
    %v1061 = vadd.f32 %v1059, %v1060
    %v1062 = vrot.slane %v1061, 2
    %v1063 = vadd.f32 %v1061, %v1062
    %v1064 = vrot.slane %v1063, 1
    %v1065 = vadd.f32 %v1063, %v1064
    %v1066 = vsel %vm596, %v1022, 0.0
    %v1067 = vrot.slane %v1066, 4
    %v1068 = vadd.f32 %v1066, %v1067
    %v1069 = vrot.slane %v1068, 2
    %v1070 = vadd.f32 %v1068, %v1069
    %v1071 = vrot.slane %v1070, 1
    %v1072 = vadd.f32 %v1070, %v1071
    %v1073 = vsel %vm596, %v1023, 0.0
    %v1074 = vrot.slane %v1073, 4
    %v1075 = vadd.f32 %v1073, %v1074
    %v1076 = vrot.slane %v1075, 2
    %v1077 = vadd.f32 %v1075, %v1076
    %v1078 = vrot.slane %v1077, 1
    %v1079 = vadd.f32 %v1077, %v1078
    %1080 = vmatprep.subr.mxu0 0.0
    %1081 = vmatpush1.msra.mxu0 %v101
    %1082 = vmatprep.subr.mxu0 0.0
    %1083 = vmatpush1.msra.mxu0 %v102
    %1084 = vmatprep.subr.mxu0 0.0
    %1085 = vmatpush1.msra.mxu0 %v103
    %1086 = vmatprep.subr.mxu0 0.0
    %1087 = vmatpush1.msra.mxu0 %v104
    %1088 = vmatprep.subr.mxu0 0.0
    %1089 = vmatpush1.msra.mxu0 0.0
    %1090 = vmatprep.subr.mxu0 0.0
    %1091 = vmatpush1.msra.mxu0 0.0
    %1092 = vmatprep.subr.mxu0 0.0
    %1093 = vmatpush1.msra.mxu0 0.0
    %1094 = vmatprep.subr.mxu0 0.0
    %1095 = vmatpush1.msra.mxu0 0.0
    %1096 = vmatprep.subr.mxu0 0.0
    %1097 = vmatpush1.msra.mxu0 0.0
    %1098 = vmatprep.subr.mxu0 0.0
    %1099 = vmatpush1.msra.mxu0 0.0
    %1100 = vmatprep.subr.mxu0 0.0
    %1101 = vmatpush1.msra.mxu0 0.0
    %1102 = vmatprep.subr.mxu0 0.0
    %1103 = vmatpush1.msra.mxu0 0.0
    %1104 = vmatprep.subr.mxu0 0.0
    %1105 = vmatpush1.msra.mxu0 0.0
    %1106 = vmatprep.subr.mxu0 0.0
    %1107 = vmatpush1.msra.mxu0 0.0
    %1108 = vmatprep.subr.mxu0 0.0
    %1109 = vmatpush1.msra.mxu0 0.0
    %1110 = vmatprep.subr.mxu0 0.0
    %1111 = vmatpush1.msra.mxu0 0.0
    %1112 = vmatprep.subr.mxu0 0.0
    %1113 = vmatpush1.msra.mxu0 0.0
    %1114 = vmatprep.subr.mxu0 0.0
    %1115 = vmatpush1.msra.mxu0 0.0
    %1116 = vmatprep.subr.mxu0 0.0
    %1117 = vmatpush1.msra.mxu0 0.0
    %1118 = vmatprep.subr.mxu0 0.0
    %1119 = vmatpush1.msra.mxu0 0.0
    %1120 = vmatprep.subr.mxu0 0.0
    %1121 = vmatpush1.msra.mxu0 0.0
    %1122 = vmatprep.subr.mxu0 0.0
    %1123 = vmatpush1.msra.mxu0 0.0
    %1124 = vmatprep.subr.mxu0 0.0
    %1125 = vmatpush1.msra.mxu0 0.0
    %1126 = vmatprep.subr.mxu0 0.0
    %1127 = vmatpush1.msra.mxu0 0.0
    %1128 = vmatprep.subr.mxu0 0.0
    %1129 = vmatpush1.msra.mxu0 0.0
    %1130 = vmatprep.subr.mxu0 0.0
    %1131 = vmatpush1.msra.mxu0 0.0
    %1132 = vmatprep.subr.mxu0 0.0
    %1133 = vmatpush1.msra.mxu0 0.0
    %1134 = vmatprep.subr.mxu0 0.0
    %1135 = vmatpush1.msra.mxu0 0.0
    %1136 = vmatprep.subr.mxu0 0.0
    %1137 = vmatpush1.msra.mxu0 0.0
    %1138 = vmatprep.subr.mxu0 0.0
    %1139 = vmatpush1.msra.mxu0 0.0
    %1140 = vmatprep.subr.mxu0 0.0
    %1141 = vmatpush1.msra.mxu0 0.0
    %1142 = vmatprep.subr.mxu0 0.0
    %1143 = vmatpush1.msra.mxu0 0.0
    %1144 = vmatprep.mubr.f32.mxu0 0.0
    %1145 = vmatmul.mubr.f32.gmra.mrb[0].mxu0 %v426
    %v1146 = vpop.f32.mrb[0].mxu0
    %v1147 = vadd.f32 0.0, %v1146
    %v1148 = vpop.f32.mrb[0].mxu0
    %1149 = vdwg.mxu0
    %v1158 = vsel %vm767, %v1037, %v1030
    %v1159 = vsel %vm769, %v1044, %v1158
    %v1160 = vsel %vm771, %v1051, %v1159
    %v1161 = vsel %vm773, %v1058, %v1160
    %v1162 = vsel %vm775, %v1065, %v1161
    %v1163 = vsel %vm777, %v1072, %v1162
    %v1164 = vsel %vm779, %v1079, %v1163
    %v1165 = vsel %vm193, %v1164, 0
    %1167 = vmatprep.subr.mxu0 0.0
    %1168 = vmatpush1.msra.mxu0 %v97
    %1169 = vmatprep.subr.mxu0 0.0
    %1170 = vmatpush1.msra.mxu0 %v98
    %1171 = vmatprep.subr.mxu0 0.0
    %1172 = vmatpush1.msra.mxu0 %v99
    %1173 = vmatprep.subr.mxu0 0.0
    %1174 = vmatpush1.msra.mxu0 %v100
    %1175 = vmatprep.subr.mxu0 0.0
    %1176 = vmatpush1.msra.mxu0 0.0
    %1177 = vmatprep.subr.mxu0 0.0
    %1178 = vmatpush1.msra.mxu0 0.0
    %1179 = vmatprep.subr.mxu0 0.0
    %1180 = vmatpush1.msra.mxu0 0.0
    %1181 = vmatprep.subr.mxu0 0.0
    %1182 = vmatpush1.msra.mxu0 0.0
    %1183 = vmatprep.subr.mxu0 0.0
    %1184 = vmatpush1.msra.mxu0 0.0
    %1185 = vmatprep.subr.mxu0 0.0
    %1186 = vmatpush1.msra.mxu0 0.0
    %1187 = vmatprep.subr.mxu0 0.0
    %1188 = vmatpush1.msra.mxu0 0.0
    %1189 = vmatprep.subr.mxu0 0.0
    %1190 = vmatpush1.msra.mxu0 0.0
    %1191 = vmatprep.subr.mxu0 0.0
    %1192 = vmatpush1.msra.mxu0 0.0
    %1193 = vmatprep.subr.mxu0 0.0
    %1194 = vmatpush1.msra.mxu0 0.0
    %1195 = vmatprep.subr.mxu0 0.0
    %1196 = vmatpush1.msra.mxu0 0.0
    %1197 = vmatprep.subr.mxu0 0.0
    %1198 = vmatpush1.msra.mxu0 0.0
    %1199 = vmatprep.subr.mxu0 0.0
    %1200 = vmatpush1.msra.mxu0 0.0
    %1201 = vmatprep.subr.mxu0 0.0
    %1202 = vmatpush1.msra.mxu0 0.0
    %1203 = vmatprep.subr.mxu0 0.0
    %1204 = vmatpush1.msra.mxu0 0.0
    %1205 = vmatprep.subr.mxu0 0.0
    %1206 = vmatpush1.msra.mxu0 0.0
    %1207 = vmatprep.subr.mxu0 0.0
    %1208 = vmatpush1.msra.mxu0 0.0
    %1209 = vmatprep.subr.mxu0 0.0
    %1210 = vmatpush1.msra.mxu0 0.0
    %1211 = vmatprep.subr.mxu0 0.0
    %1212 = vmatpush1.msra.mxu0 0.0
    %1213 = vmatprep.subr.mxu0 0.0
    %1214 = vmatpush1.msra.mxu0 0.0
    %1215 = vmatprep.subr.mxu0 0.0
    %1216 = vmatpush1.msra.mxu0 0.0
    %1217 = vmatprep.subr.mxu0 0.0
    %1218 = vmatpush1.msra.mxu0 0.0
    %1219 = vmatprep.subr.mxu0 0.0
    %1220 = vmatpush1.msra.mxu0 0.0
    %1221 = vmatprep.subr.mxu0 0.0
    %1222 = vmatpush1.msra.mxu0 0.0
    %1223 = vmatprep.subr.mxu0 0.0
    %1224 = vmatpush1.msra.mxu0 0.0
    %1225 = vmatprep.subr.mxu0 0.0
    %1226 = vmatpush1.msra.mxu0 0.0
    %1227 = vmatprep.subr.mxu0 0.0
    %1228 = vmatpush1.msra.mxu0 0.0
    %1229 = vmatprep.subr.mxu0 0.0
    %1230 = vmatpush1.msra.mxu0 0.0
    %1231 = vmatprep.mubr.f32.mxu0 0.0
    %1232 = vmatmul.mubr.f32.gmra.mrb[0].mxu0 %v1165
    %v1233 = vpop.f32.mrb[0].mxu0
    %v1234 = vadd.f32 %v1147, %v1233
    %v1235 = vpop.f32.mrb[0].mxu0
    %1236 = vdwg.mxu0
    %v1237 = vtanh.pop %v1234
    %1238 = vst.msk [vmem:[#allocation8] sm:$0xff] %vm193, %v1237
    %1239 = vmatprep.subr.mxu0 0.0
    %1240 = vmatpush1.msra.mxu0 %v89
    %1241 = vmatprep.subr.mxu0 0.0
    %1242 = vmatpush1.msra.mxu0 %v90
    %1243 = vmatprep.subr.mxu0 0.0
    %1244 = vmatpush1.msra.mxu0 %v91
    %1245 = vmatprep.subr.mxu0 0.0
    %1246 = vmatpush1.msra.mxu0 %v92
    %1247 = vmatprep.subr.mxu0 0.0
    %1248 = vmatpush1.msra.mxu0 0.0
    %1249 = vmatprep.subr.mxu0 0.0
    %1250 = vmatpush1.msra.mxu0 0.0
    %1251 = vmatprep.subr.mxu0 0.0
    %1252 = vmatpush1.msra.mxu0 0.0
    %1253 = vmatprep.subr.mxu0 0.0
    %1254 = vmatpush1.msra.mxu0 0.0
    %1255 = vmatprep.subr.mxu0 0.0
    %1256 = vmatpush1.msra.mxu0 0.0
    %1257 = vmatprep.subr.mxu0 0.0
    %1258 = vmatpush1.msra.mxu0 0.0
    %1259 = vmatprep.subr.mxu0 0.0
    %1260 = vmatpush1.msra.mxu0 0.0
    %1261 = vmatprep.subr.mxu0 0.0
    %1262 = vmatpush1.msra.mxu0 0.0
    %1263 = vmatprep.subr.mxu0 0.0
    %1264 = vmatpush1.msra.mxu0 0.0
    %1265 = vmatprep.subr.mxu0 0.0
    %1266 = vmatpush1.msra.mxu0 0.0
    %1267 = vmatprep.subr.mxu0 0.0
    %1268 = vmatpush1.msra.mxu0 0.0
    %1269 = vmatprep.subr.mxu0 0.0
    %1270 = vmatpush1.msra.mxu0 0.0
    %1271 = vmatprep.subr.mxu0 0.0
    %1272 = vmatpush1.msra.mxu0 0.0
    %1273 = vmatprep.subr.mxu0 0.0
    %1274 = vmatpush1.msra.mxu0 0.0
    %1275 = vmatprep.subr.mxu0 0.0
    %1276 = vmatpush1.msra.mxu0 0.0
    %1277 = vmatprep.subr.mxu0 0.0
    %1278 = vmatpush1.msra.mxu0 0.0
    %1279 = vmatprep.subr.mxu0 0.0
    %1280 = vmatpush1.msra.mxu0 0.0
    %1281 = vmatprep.subr.mxu0 0.0
    %1282 = vmatpush1.msra.mxu0 0.0
    %1283 = vmatprep.subr.mxu0 0.0
    %1284 = vmatpush1.msra.mxu0 0.0
    %1285 = vmatprep.subr.mxu0 0.0
    %1286 = vmatpush1.msra.mxu0 0.0
    %1287 = vmatprep.subr.mxu0 0.0
    %1288 = vmatpush1.msra.mxu0 0.0
    %1289 = vmatprep.subr.mxu0 0.0
    %1290 = vmatpush1.msra.mxu0 0.0
    %1291 = vmatprep.subr.mxu0 0.0
    %1292 = vmatpush1.msra.mxu0 0.0
    %1293 = vmatprep.subr.mxu0 0.0
    %1294 = vmatpush1.msra.mxu0 0.0
    %1295 = vmatprep.subr.mxu0 0.0
    %1296 = vmatpush1.msra.mxu0 0.0
    %1297 = vmatprep.subr.mxu0 0.0
    %1298 = vmatpush1.msra.mxu0 0.0
    %1299 = vmatprep.subr.mxu0 0.0
    %1300 = vmatpush1.msra.mxu0 0.0
    %1301 = vmatprep.subr.mxu0 0.0
    %1302 = vmatpush1.msra.mxu0 0.0
    %1303 = vmatprep.mubr.f32.mxu0 0.0
    %1304 = vmatmul.mubr.f32.gmra.mrb[0].mxu0 %v426
    %v1305 = vpop.f32.mrb[0].mxu0
    %v1306 = vadd.f32 0.0, %v1305
    %v1307 = vpop.f32.mrb[0].mxu0
    %1308 = vdwg.mxu0
    %v1310 = vsel %vm193, %v1237, 0
    %1312 = vmatprep.subr.mxu0 0.0
    %1313 = vmatpush1.msra.mxu0 %v85
    %1314 = vmatprep.subr.mxu0 0.0
    %1315 = vmatpush1.msra.mxu0 %v86
    %1316 = vmatprep.subr.mxu0 0.0
    %1317 = vmatpush1.msra.mxu0 %v87
    %1318 = vmatprep.subr.mxu0 0.0
    %1319 = vmatpush1.msra.mxu0 %v88
    %1320 = vmatprep.subr.mxu0 0.0
    %1321 = vmatpush1.msra.mxu0 0.0
    %1322 = vmatprep.subr.mxu0 0.0
    %1323 = vmatpush1.msra.mxu0 0.0
    %1324 = vmatprep.subr.mxu0 0.0
    %1325 = vmatpush1.msra.mxu0 0.0
    %1326 = vmatprep.subr.mxu0 0.0
    %1327 = vmatpush1.msra.mxu0 0.0
    %1328 = vmatprep.subr.mxu0 0.0
    %1329 = vmatpush1.msra.mxu0 0.0
    %1330 = vmatprep.subr.mxu0 0.0
    %1331 = vmatpush1.msra.mxu0 0.0
    %1332 = vmatprep.subr.mxu0 0.0
    %1333 = vmatpush1.msra.mxu0 0.0
    %1334 = vmatprep.subr.mxu0 0.0
    %1335 = vmatpush1.msra.mxu0 0.0
    %1336 = vmatprep.subr.mxu0 0.0
    %1337 = vmatpush1.msra.mxu0 0.0
    %1338 = vmatprep.subr.mxu0 0.0
    %1339 = vmatpush1.msra.mxu0 0.0
    %1340 = vmatprep.subr.mxu0 0.0
    %1341 = vmatpush1.msra.mxu0 0.0
    %1342 = vmatprep.subr.mxu0 0.0
    %1343 = vmatpush1.msra.mxu0 0.0
    %1344 = vmatprep.subr.mxu0 0.0
    %1345 = vmatpush1.msra.mxu0 0.0
    %1346 = vmatprep.subr.mxu0 0.0
    %1347 = vmatpush1.msra.mxu0 0.0
    %1348 = vmatprep.subr.mxu0 0.0
    %1349 = vmatpush1.msra.mxu0 0.0
    %1350 = vmatprep.subr.mxu0 0.0
    %1351 = vmatpush1.msra.mxu0 0.0
    %1352 = vmatprep.subr.mxu0 0.0
    %1353 = vmatpush1.msra.mxu0 0.0
    %1354 = vmatprep.subr.mxu0 0.0
    %1355 = vmatpush1.msra.mxu0 0.0
    %1356 = vmatprep.subr.mxu0 0.0
    %1357 = vmatpush1.msra.mxu0 0.0
    %1358 = vmatprep.subr.mxu0 0.0
    %1359 = vmatpush1.msra.mxu0 0.0
    %1360 = vmatprep.subr.mxu0 0.0
    %1361 = vmatpush1.msra.mxu0 0.0
    %1362 = vmatprep.subr.mxu0 0.0
    %1363 = vmatpush1.msra.mxu0 0.0
    %1364 = vmatprep.subr.mxu0 0.0
    %1365 = vmatpush1.msra.mxu0 0.0
    %1366 = vmatprep.subr.mxu0 0.0
    %1367 = vmatpush1.msra.mxu0 0.0
    %1368 = vmatprep.subr.mxu0 0.0
    %1369 = vmatpush1.msra.mxu0 0.0
    %1370 = vmatprep.subr.mxu0 0.0
    %1371 = vmatpush1.msra.mxu0 0.0
    %1372 = vmatprep.subr.mxu0 0.0
    %1373 = vmatpush1.msra.mxu0 0.0
    %1374 = vmatprep.subr.mxu0 0.0
    %1375 = vmatpush1.msra.mxu0 0.0
    %1376 = vmatprep.mubr.f32.mxu0 0.0
    %1377 = vmatmul.mubr.f32.gmra.mrb[0].mxu0 %v1310
    %v1378 = vpop.f32.mrb[0].mxu0
    %v1379 = vadd.f32 %v1306, %v1378
    %v1380 = vpop.f32.mrb[0].mxu0
    %1381 = vdwg.mxu0
    %v1382 = vadd.f32 %v1379, %v110
    %v1383 = vxor.u32 %v1382, 2147483648
    %v1384 = vmul.f32 %v1383, 1.442695
    %v1385 = vpow.pop %v1384
    %v1386 = vadd.f32 %v1385, 1.0
    %v1387 = vrcp.pop %v1386
    %v1388 = vmul.f32 1.0, %v1387
    %v1389 = vtanh.pop %v1382
    %v1390 = vmul.f32 %v1388, %v416
    %1392 = vrot.lane.b32.xlu0 %v1389, 64
    %v1393 = vpop.permute.xlu0 %1392
    %v1395 = vmul.f32 %v1388, %v1393
    %1397 = vrot.lane.b32.xlu0 %v1395, 32
    %v1398 = vpop.permute.xlu0 %1397
    %v1400 = vadd.f32 %v1390, %v1398
    %v1401 = vtanh.pop %v1400
    %1403 = vrot.lane.b32.xlu0 %v1401, 64
    %v1404 = vpop.permute.xlu0 %1403
    %v1406 = vmul.f32 %v1388, %v1404
    %1408 = vrot.lane.b32.xlu0 %v1406, 32
    %v1409 = vpop.permute.xlu0 %1408
    %v1410 = vsel %vm193, %v1409, 0
    %1412 = vmatprep.subr.mxu0 0.0
    %1413 = vmatpush1.msra.mxu0 %v93
    %1414 = vmatprep.subr.mxu0 0.0
    %1415 = vmatpush1.msra.mxu0 %v94
    %1416 = vmatprep.subr.mxu0 0.0
    %1417 = vmatpush1.msra.mxu0 %v95
    %1418 = vmatprep.subr.mxu0 0.0
    %1419 = vmatpush1.msra.mxu0 %v96
    %1420 = vmatprep.subr.mxu0 0.0
    %1421 = vmatpush1.msra.mxu0 0.0
    %1422 = vmatprep.subr.mxu0 0.0
    %1423 = vmatpush1.msra.mxu0 0.0
    %1424 = vmatprep.subr.mxu0 0.0
    %1425 = vmatpush1.msra.mxu0 0.0
    %1426 = vmatprep.subr.mxu0 0.0
    %1427 = vmatpush1.msra.mxu0 0.0
    %1428 = vmatprep.subr.mxu0 0.0
    %1429 = vmatpush1.msra.mxu0 0.0
    %1430 = vmatprep.subr.mxu0 0.0
    %1431 = vmatpush1.msra.mxu0 0.0
    %1432 = vmatprep.subr.mxu0 0.0
    %1433 = vmatpush1.msra.mxu0 0.0
    %1434 = vmatprep.subr.mxu0 0.0
    %1435 = vmatpush1.msra.mxu0 0.0
    %1436 = vmatprep.subr.mxu0 0.0
    %1437 = vmatpush1.msra.mxu0 0.0
    %1438 = vmatprep.subr.mxu0 0.0
    %1439 = vmatpush1.msra.mxu0 0.0
    %1440 = vmatprep.subr.mxu0 0.0
    %1441 = vmatpush1.msra.mxu0 0.0
    %1442 = vmatprep.subr.mxu0 0.0
    %1443 = vmatpush1.msra.mxu0 0.0
    %1444 = vmatprep.subr.mxu0 0.0
    %1445 = vmatpush1.msra.mxu0 0.0
    %1446 = vmatprep.subr.mxu0 0.0
    %1447 = vmatpush1.msra.mxu0 0.0
    %1448 = vmatprep.subr.mxu0 0.0
    %1449 = vmatpush1.msra.mxu0 0.0
    %1450 = vmatprep.subr.mxu0 0.0
    %1451 = vmatpush1.msra.mxu0 0.0
    %1452 = vmatprep.subr.mxu0 0.0
    %1453 = vmatpush1.msra.mxu0 0.0
    %1454 = vmatprep.subr.mxu0 0.0
    %1455 = vmatpush1.msra.mxu0 0.0
    %1456 = vmatprep.subr.mxu0 0.0
    %1457 = vmatpush1.msra.mxu0 0.0
    %1458 = vmatprep.subr.mxu0 0.0
    %1459 = vmatpush1.msra.mxu0 0.0
    %1460 = vmatprep.subr.mxu0 0.0
    %1461 = vmatpush1.msra.mxu0 0.0
    %1462 = vmatprep.subr.mxu0 0.0
    %1463 = vmatpush1.msra.mxu0 0.0
    %1464 = vmatprep.subr.mxu0 0.0
    %1465 = vmatpush1.msra.mxu0 0.0
    %1466 = vmatprep.subr.mxu0 0.0
    %1467 = vmatpush1.msra.mxu0 0.0
    %1468 = vmatprep.subr.mxu0 0.0
    %1469 = vmatpush1.msra.mxu0 0.0
    %1470 = vmatprep.subr.mxu0 0.0
    %1471 = vmatpush1.msra.mxu0 0.0
    %1472 = vmatprep.subr.mxu0 0.0
    %1473 = vmatpush1.msra.mxu0 0.0
    %1474 = vmatprep.subr.mxu0 0.0
    %1475 = vmatpush1.msra.mxu0 0.0
    %1476 = vmatprep.mubr.f32.mxu0 0.0
    %1477 = vmatmul.mubr.f32.gmra.mrb[0].mxu0 %v1410
    %v1478 = vpop.f32.mrb[0].mxu0
    %v1479 = vadd.f32 0.0, %v1478
    %v1480 = vpop.f32.mrb[0].mxu0
    %1481 = vdwg.mxu0
    %v1483 = vcombine.high %v1479, %v1479
    %v1485 = vunpack.c.l.s4 1966171168
    %v1486 = vunpack.c.0.s8 %v1485
    %v1487 = vlaneseq
    %v1488 = vshrl.u32 %v1487, 7
    %v1489 = vsub.s32 %v1486, %v1488
    %v1490 = vrot.slane %v1479, %v1489
    %v1492 = vunpack.c.l.s4 1966171168
    %v1493 = vunpack.c.0.s8 %v1492
    %v1494 = vlaneseq
    %v1495 = vshrl.u32 %v1494, 7
    %v1496 = vsub.s32 %v1493, %v1495
    %v1497 = vrot.slane %v1483, %v1496
    %v1498 = vcombine.high %v1490, %v1490
    %v1499 = vcombine.high %v1497, %v1497
    %v1501 = vunpack.c.l.s4 1966171168
    %v1502 = vunpack.c.0.s8 %v1501
    %v1503 = vlaneseq
    %v1504 = vshrl.u32 %v1503, 7
    %v1505 = vsub.s32 %v1502, %v1504
    %v1506 = vrot.slane %v1490, %v1505
    %v1508 = vunpack.c.l.s4 1966171168
    %v1509 = vunpack.c.0.s8 %v1508
    %v1510 = vlaneseq
    %v1511 = vshrl.u32 %v1510, 7
    %v1512 = vsub.s32 %v1509, %v1511
    %v1513 = vrot.slane %v1497, %v1512
    %v1515 = vunpack.c.l.s4 1966171168
    %v1516 = vunpack.c.0.s8 %v1515
    %v1517 = vlaneseq
    %v1518 = vshrl.u32 %v1517, 7
    %v1519 = vsub.s32 %v1516, %v1518
    %v1520 = vrot.slane %v1498, %v1519
    %v1522 = vunpack.c.l.s4 1966171168
    %v1523 = vunpack.c.0.s8 %v1522
    %v1524 = vlaneseq
    %v1525 = vshrl.u32 %v1524, 7
    %v1526 = vsub.s32 %v1523, %v1525
    %v1527 = vrot.slane %v1499, %v1526
    %v1528 = vcombine.high %v1506, %v1506
    %v1529 = vcombine.high %v1513, %v1513
    %v1530 = vcombine.high %v1520, %v1520
    %v1531 = vcombine.high %v1527, %v1527
    %v1532 = vlaneseq
    %v1533 = vshrl.u32 %v1532, 7
    %v1534 = vsub.s32 0, %v1533
    %v1535 = vrot.slane %v1506, %v1534
    %v1536 = vlaneseq
    %v1537 = vshrl.u32 %v1536, 7
    %v1538 = vsub.s32 0, %v1537
    %v1539 = vrot.slane %v1520, %v1538
    %v1540 = vlaneseq
    %v1541 = vshrl.u32 %v1540, 7
    %v1542 = vsub.s32 0, %v1541
    %v1543 = vrot.slane %v1528, %v1542
    %v1544 = vlaneseq
    %v1545 = vshrl.u32 %v1544, 7
    %v1546 = vsub.s32 0, %v1545
    %v1547 = vrot.slane %v1530, %v1546
    %v1548 = vlaneseq
    %v1549 = vshrl.u32 %v1548, 7
    %v1550 = vsub.s32 0, %v1549
    %v1551 = vrot.slane %v1513, %v1550
    %v1552 = vlaneseq
    %v1553 = vshrl.u32 %v1552, 7
    %v1554 = vsub.s32 0, %v1553
    %v1555 = vrot.slane %v1527, %v1554
    %v1556 = vlaneseq
    %v1557 = vshrl.u32 %v1556, 7
    %v1558 = vsub.s32 0, %v1557
    %v1559 = vrot.slane %v1529, %v1558
    %v1560 = vlaneseq
    %v1561 = vshrl.u32 %v1560, 7
    %v1562 = vsub.s32 0, %v1561
    %v1563 = vrot.slane %v1531, %v1562
    %v1572 = vmul.f32 %v1535, %v77
    %v1573 = vmul.f32 %v1539, %v78
    %v1574 = vmul.f32 %v1543, %v79
    %v1575 = vmul.f32 %v1547, %v80
    %v1576 = vmul.f32 %v1551, %v81
    %v1577 = vmul.f32 %v1555, %v82
    %v1578 = vmul.f32 %v1559, %v83
    %v1579 = vmul.f32 %v1563, %v84
    %v1580 = vsel %vm596, %v1572, 0.0
    %1581 = vadd.xlane.f32.xlu0 %v1580
    %v1582 = vpop.xlane.xlu0 %1581
    %v1583 = vsel %vm596, %v1573, 0.0
    %1584 = vadd.xlane.f32.xlu0 %v1583
    %v1585 = vpop.xlane.xlu0 %1584
    %v1586 = vsel %vm596, %v1574, 0.0
    %1587 = vadd.xlane.f32.xlu0 %v1586
    %v1588 = vpop.xlane.xlu0 %1587
    %v1589 = vsel %vm596, %v1575, 0.0
    %1590 = vadd.xlane.f32.xlu0 %v1589
    %v1591 = vpop.xlane.xlu0 %1590
    %v1592 = vsel %vm596, %v1576, 0.0
    %1593 = vadd.xlane.f32.xlu0 %v1592
    %v1594 = vpop.xlane.xlu0 %1593
    %v1595 = vsel %vm596, %v1577, 0.0
    %1596 = vadd.xlane.f32.xlu0 %v1595
    %v1597 = vpop.xlane.xlu0 %1596
    %v1598 = vsel %vm596, %v1578, 0.0
    %1599 = vadd.xlane.f32.xlu0 %v1598
    %v1600 = vpop.xlane.xlu0 %1599
    %v1601 = vsel %vm596, %v1579, 0.0
    %1602 = vadd.xlane.f32.xlu0 %v1601
    %v1603 = vpop.xlane.xlu0 %1602
    %v1604 = vadd.f32 %v1582, %v663
    %v1605 = vadd.f32 %v1585, %v666
    %v1606 = vadd.f32 %v1588, %v669
    %v1607 = vadd.f32 %v1591, %v672
    %v1608 = vadd.f32 %v1594, %v675
    %v1609 = vadd.f32 %v1597, %v678
    %v1610 = vadd.f32 %v1600, %v681
    %v1611 = vadd.f32 %v1603, %v684
    %1620 = vset.pattern.permute.xlu0 0
    %1621 = vperm.xlu0 %1620, %v1604
    %v1622 = vpop.permute.xlu0 %1621
    %1623 = vset.pattern.permute.xlu0 0
    %1624 = vperm.xlu0 %1623, %v1605
    %v1625 = vpop.permute.xlu0 %1624
    %1626 = vset.pattern.permute.xlu0 0
    %1627 = vperm.xlu0 %1626, %v1606
    %v1628 = vpop.permute.xlu0 %1627
    %1629 = vset.pattern.permute.xlu0 0
    %1630 = vperm.xlu0 %1629, %v1607
    %v1631 = vpop.permute.xlu0 %1630
    %1632 = vset.pattern.permute.xlu0 0
    %1633 = vperm.xlu0 %1632, %v1608
    %v1634 = vpop.permute.xlu0 %1633
    %1635 = vset.pattern.permute.xlu0 0
    %1636 = vperm.xlu0 %1635, %v1609
    %v1637 = vpop.permute.xlu0 %1636
    %1638 = vset.pattern.permute.xlu0 0
    %1639 = vperm.xlu0 %1638, %v1610
    %v1640 = vpop.permute.xlu0 %1639
    %1641 = vset.pattern.permute.xlu0 0
    %1642 = vperm.xlu0 %1641, %v1611
    %v1643 = vpop.permute.xlu0 %1642
    %v1644 = vlaneseq
    %v1645 = vshrl.u32 %v1644, 7
    %v1646 = vsub.s32 %v734, %v1645
    %v1647 = vrot.slane %v1622, %v1646
    %v1648 = vlaneseq
    %v1649 = vshrl.u32 %v1648, 7
    %v1650 = vsub.s32 %v734, %v1649
    %v1651 = vrot.slane %v1625, %v1650
    %v1652 = vlaneseq
    %v1653 = vshrl.u32 %v1652, 7
    %v1654 = vsub.s32 %v734, %v1653
    %v1655 = vrot.slane %v1628, %v1654
    %v1656 = vlaneseq
    %v1657 = vshrl.u32 %v1656, 7
    %v1658 = vsub.s32 %v734, %v1657
    %v1659 = vrot.slane %v1631, %v1658
    %v1660 = vlaneseq
    %v1661 = vshrl.u32 %v1660, 7
    %v1662 = vsub.s32 %v734, %v1661
    %v1663 = vrot.slane %v1634, %v1662
    %v1664 = vlaneseq
    %v1665 = vshrl.u32 %v1664, 7
    %v1666 = vsub.s32 %v734, %v1665
    %v1667 = vrot.slane %v1637, %v1666
    %v1668 = vlaneseq
    %v1669 = vshrl.u32 %v1668, 7
    %v1670 = vsub.s32 %v734, %v1669
    %v1671 = vrot.slane %v1640, %v1670
    %v1672 = vlaneseq
    %v1673 = vshrl.u32 %v1672, 7
    %v1674 = vsub.s32 %v734, %v1673
    %v1675 = vrot.slane %v1643, %v1674
    %v1676 = vsel %vm767, %v1651, %v1647
    %v1677 = vsel %vm769, %v1655, %v1676
    %v1678 = vsel %vm771, %v1659, %v1677
    %v1679 = vsel %vm773, %v1663, %v1678
    %v1680 = vsel %vm775, %v1667, %v1679
    %v1681 = vsel %vm777, %v1671, %v1680
    %v1682 = vsel %vm779, %v1675, %v1681
    %v1684 = vsel %vm782, %v1682, -inf
    %1685 = vmax.xlane.f32.xlu0 %v1684
    %v1686 = vpop.xlane.xlu0 %1685
    %v1688 = vlaneseq
    %v1689 = vshrl.u32 %v1688, 7
    %v1690 = vsub.s32 0, %v1689
    %v1691 = vrot.slane %v1686, %v1690
    %v1692 = vlaneseq
    %v1693 = vshrl.u32 %v1692, 7
    %v1694 = vsub.s32 1, %v1693
    %v1695 = vrot.slane %v1686, %v1694
    %v1696 = vlaneseq
    %v1697 = vshrl.u32 %v1696, 7
    %v1698 = vsub.s32 2, %v1697
    %v1699 = vrot.slane %v1686, %v1698
    %v1700 = vlaneseq
    %v1701 = vshrl.u32 %v1700, 7
    %v1702 = vsub.s32 3, %v1701
    %v1703 = vrot.slane %v1686, %v1702
    %v1704 = vlaneseq
    %v1705 = vshrl.u32 %v1704, 7
    %v1706 = vsub.s32 4, %v1705
    %v1707 = vrot.slane %v1686, %v1706
    %v1708 = vlaneseq
    %v1709 = vshrl.u32 %v1708, 7
    %v1710 = vsub.s32 5, %v1709
    %v1711 = vrot.slane %v1686, %v1710
    %v1712 = vlaneseq
    %v1713 = vshrl.u32 %v1712, 7
    %v1714 = vsub.s32 6, %v1713
    %v1715 = vrot.slane %v1686, %v1714
    %v1716 = vlaneseq
    %v1717 = vshrl.u32 %v1716, 7
    %v1718 = vsub.s32 7, %v1717
    %v1719 = vrot.slane %v1686, %v1718
    %v1728 = vsub.f32 %v1604, %v1691
    %v1729 = vsub.f32 %v1605, %v1695
    %v1730 = vsub.f32 %v1606, %v1699
    %v1731 = vsub.f32 %v1607, %v1703
    %v1732 = vsub.f32 %v1608, %v1707
    %v1733 = vsub.f32 %v1609, %v1711
    %v1734 = vsub.f32 %v1610, %v1715
    %v1735 = vsub.f32 %v1611, %v1719
    %v1736 = vmul.f32 %v1728, 1.442695
    %v1737 = vpow.pop %v1736
    %v1738 = vmul.f32 %v1729, 1.442695
    %v1739 = vpow.pop %v1738
    %v1740 = vmul.f32 %v1730, 1.442695
    %v1741 = vpow.pop %v1740
    %v1742 = vmul.f32 %v1731, 1.442695
    %v1743 = vpow.pop %v1742
    %v1744 = vmul.f32 %v1732, 1.442695
    %v1745 = vpow.pop %v1744
    %v1746 = vmul.f32 %v1733, 1.442695
    %v1747 = vpow.pop %v1746
    %v1748 = vmul.f32 %v1734, 1.442695
    %v1749 = vpow.pop %v1748
    %v1750 = vmul.f32 %v1735, 1.442695
    %v1751 = vpow.pop %v1750
    %1760 = vset.pattern.permute.xlu0 0
    %1761 = vperm.xlu0 %1760, %v1737
    %v1762 = vpop.permute.xlu0 %1761
    %1763 = vset.pattern.permute.xlu0 0
    %1764 = vperm.xlu0 %1763, %v1739
    %v1765 = vpop.permute.xlu0 %1764
    %1766 = vset.pattern.permute.xlu0 0
    %1767 = vperm.xlu0 %1766, %v1741
    %v1768 = vpop.permute.xlu0 %1767
    %1769 = vset.pattern.permute.xlu0 0
    %1770 = vperm.xlu0 %1769, %v1743
    %v1771 = vpop.permute.xlu0 %1770
    %1772 = vset.pattern.permute.xlu0 0
    %1773 = vperm.xlu0 %1772, %v1745
    %v1774 = vpop.permute.xlu0 %1773
    %1775 = vset.pattern.permute.xlu0 0
    %1776 = vperm.xlu0 %1775, %v1747
    %v1777 = vpop.permute.xlu0 %1776
    %1778 = vset.pattern.permute.xlu0 0
    %1779 = vperm.xlu0 %1778, %v1749
    %v1780 = vpop.permute.xlu0 %1779
    %1781 = vset.pattern.permute.xlu0 0
    %1782 = vperm.xlu0 %1781, %v1751
    %v1783 = vpop.permute.xlu0 %1782
    %v1784 = vlaneseq
    %v1785 = vshrl.u32 %v1784, 7
    %v1786 = vsub.s32 %v734, %v1785
    %v1787 = vrot.slane %v1762, %v1786
    %v1788 = vlaneseq
    %v1789 = vshrl.u32 %v1788, 7
    %v1790 = vsub.s32 %v734, %v1789
    %v1791 = vrot.slane %v1765, %v1790
    %v1792 = vlaneseq
    %v1793 = vshrl.u32 %v1792, 7
    %v1794 = vsub.s32 %v734, %v1793
    %v1795 = vrot.slane %v1768, %v1794
    %v1796 = vlaneseq
    %v1797 = vshrl.u32 %v1796, 7
    %v1798 = vsub.s32 %v734, %v1797
    %v1799 = vrot.slane %v1771, %v1798
    %v1800 = vlaneseq
    %v1801 = vshrl.u32 %v1800, 7
    %v1802 = vsub.s32 %v734, %v1801
    %v1803 = vrot.slane %v1774, %v1802
    %v1804 = vlaneseq
    %v1805 = vshrl.u32 %v1804, 7
    %v1806 = vsub.s32 %v734, %v1805
    %v1807 = vrot.slane %v1777, %v1806
    %v1808 = vlaneseq
    %v1809 = vshrl.u32 %v1808, 7
    %v1810 = vsub.s32 %v734, %v1809
    %v1811 = vrot.slane %v1780, %v1810
    %v1812 = vlaneseq
    %v1813 = vshrl.u32 %v1812, 7
    %v1814 = vsub.s32 %v734, %v1813
    %v1815 = vrot.slane %v1783, %v1814
    %v1816 = vsel %vm767, %v1791, %v1787
    %v1817 = vsel %vm769, %v1795, %v1816
    %v1818 = vsel %vm771, %v1799, %v1817
    %v1819 = vsel %vm773, %v1803, %v1818
    %v1820 = vsel %vm775, %v1807, %v1819
    %v1821 = vsel %vm777, %v1811, %v1820
    %v1822 = vsel %vm779, %v1815, %v1821
    %v1824 = vsel %vm782, %v1822, 0.0
    %1825 = vadd.xlane.f32.xlu0 %v1824
    %v1826 = vpop.xlane.xlu0 %1825
    %v1827 = vrcp.pop %v1826
    %v1829 = vlaneseq
    %v1830 = vshrl.u32 %v1829, 7
    %v1831 = vsub.s32 0, %v1830
    %v1832 = vrot.slane %v1827, %v1831
    %v1833 = vlaneseq
    %v1834 = vshrl.u32 %v1833, 7
    %v1835 = vsub.s32 1, %v1834
    %v1836 = vrot.slane %v1827, %v1835
    %v1837 = vlaneseq
    %v1838 = vshrl.u32 %v1837, 7
    %v1839 = vsub.s32 2, %v1838
    %v1840 = vrot.slane %v1827, %v1839
    %v1841 = vlaneseq
    %v1842 = vshrl.u32 %v1841, 7
    %v1843 = vsub.s32 3, %v1842
    %v1844 = vrot.slane %v1827, %v1843
    %v1845 = vlaneseq
    %v1846 = vshrl.u32 %v1845, 7
    %v1847 = vsub.s32 4, %v1846
    %v1848 = vrot.slane %v1827, %v1847
    %v1849 = vlaneseq
    %v1850 = vshrl.u32 %v1849, 7
    %v1851 = vsub.s32 5, %v1850
    %v1852 = vrot.slane %v1827, %v1851
    %v1853 = vlaneseq
    %v1854 = vshrl.u32 %v1853, 7
    %v1855 = vsub.s32 6, %v1854
    %v1856 = vrot.slane %v1827, %v1855
    %v1857 = vlaneseq
    %v1858 = vshrl.u32 %v1857, 7
    %v1859 = vsub.s32 7, %v1858
    %v1860 = vrot.slane %v1827, %v1859
    %v1869 = vmul.f32 %v1737, %v1832
    %v1870 = vmul.f32 %v1739, %v1836
    %v1871 = vmul.f32 %v1741, %v1840
    %v1872 = vmul.f32 %v1743, %v1844
    %v1873 = vmul.f32 %v1745, %v1848
    %v1874 = vmul.f32 %v1747, %v1852
    %v1875 = vmul.f32 %v1749, %v1856
    %v1876 = vmul.f32 %v1751, %v1860
    %1878 = vset.pattern.permute.xlu0 0
    %1879 = vperm.xlu0 %1878, %v1869
    %v1880 = vpop.permute.xlu0 %1879
    %1883 = vset.pattern.permute.xlu0 0
    %1884 = vperm.xlu0 %1883, %v1870
    %v1885 = vpop.permute.xlu0 %1884
    %1888 = vset.pattern.permute.xlu0 0
    %1889 = vperm.xlu0 %1888, %v1871
    %v1890 = vpop.permute.xlu0 %1889
    %1893 = vset.pattern.permute.xlu0 0
    %1894 = vperm.xlu0 %1893, %v1872
    %v1895 = vpop.permute.xlu0 %1894
    %1898 = vset.pattern.permute.xlu0 0
    %1899 = vperm.xlu0 %1898, %v1873
    %v1900 = vpop.permute.xlu0 %1899
    %1903 = vset.pattern.permute.xlu0 0
    %1904 = vperm.xlu0 %1903, %v1874
    %v1905 = vpop.permute.xlu0 %1904
    %1908 = vset.pattern.permute.xlu0 0
    %1909 = vperm.xlu0 %1908, %v1875
    %v1910 = vpop.permute.xlu0 %1909
    %1913 = vset.pattern.permute.xlu0 0
    %1914 = vperm.xlu0 %1913, %v1876
    %v1915 = vpop.permute.xlu0 %1914
    %v1917 = vmul.f32 %v1880, %v77
    %v1918 = vmul.f32 %v1885, %v78
    %v1919 = vmul.f32 %v1890, %v79
    %v1920 = vmul.f32 %v1895, %v80
    %v1921 = vmul.f32 %v1900, %v81
    %v1922 = vmul.f32 %v1905, %v82
    %v1923 = vmul.f32 %v1910, %v83
    %v1924 = vmul.f32 %v1915, %v84
    %v1925 = vsel %vm596, %v1917, 0.0
    %v1926 = vrot.slane %v1925, 4
    %v1927 = vadd.f32 %v1925, %v1926
    %v1928 = vrot.slane %v1927, 2
    %v1929 = vadd.f32 %v1927, %v1928
    %v1930 = vrot.slane %v1929, 1
    %v1931 = vadd.f32 %v1929, %v1930
    %v1932 = vsel %vm596, %v1918, 0.0
    %v1933 = vrot.slane %v1932, 4
    %v1934 = vadd.f32 %v1932, %v1933
    %v1935 = vrot.slane %v1934, 2
    %v1936 = vadd.f32 %v1934, %v1935
    %v1937 = vrot.slane %v1936, 1
    %v1938 = vadd.f32 %v1936, %v1937
    %v1939 = vsel %vm596, %v1919, 0.0
    %v1940 = vrot.slane %v1939, 4
    %v1941 = vadd.f32 %v1939, %v1940
    %v1942 = vrot.slane %v1941, 2
    %v1943 = vadd.f32 %v1941, %v1942
    %v1944 = vrot.slane %v1943, 1
    %v1945 = vadd.f32 %v1943, %v1944
    %v1946 = vsel %vm596, %v1920, 0.0
    %v1947 = vrot.slane %v1946, 4
    %v1948 = vadd.f32 %v1946, %v1947
    %v1949 = vrot.slane %v1948, 2
    %v1950 = vadd.f32 %v1948, %v1949
    %v1951 = vrot.slane %v1950, 1
    %v1952 = vadd.f32 %v1950, %v1951
    %v1953 = vsel %vm596, %v1921, 0.0
    %v1954 = vrot.slane %v1953, 4
    %v1955 = vadd.f32 %v1953, %v1954
    %v1956 = vrot.slane %v1955, 2
    %v1957 = vadd.f32 %v1955, %v1956
    %v1958 = vrot.slane %v1957, 1
    %v1959 = vadd.f32 %v1957, %v1958
    %v1960 = vsel %vm596, %v1922, 0.0
    %v1961 = vrot.slane %v1960, 4
    %v1962 = vadd.f32 %v1960, %v1961
    %v1963 = vrot.slane %v1962, 2
    %v1964 = vadd.f32 %v1962, %v1963
    %v1965 = vrot.slane %v1964, 1
    %v1966 = vadd.f32 %v1964, %v1965
    %v1967 = vsel %vm596, %v1923, 0.0
    %v1968 = vrot.slane %v1967, 4
    %v1969 = vadd.f32 %v1967, %v1968
    %v1970 = vrot.slane %v1969, 2
    %v1971 = vadd.f32 %v1969, %v1970
    %v1972 = vrot.slane %v1971, 1
    %v1973 = vadd.f32 %v1971, %v1972
    %v1974 = vsel %vm596, %v1924, 0.0
    %v1975 = vrot.slane %v1974, 4
    %v1976 = vadd.f32 %v1974, %v1975
    %v1977 = vrot.slane %v1976, 2
    %v1978 = vadd.f32 %v1976, %v1977
    %v1979 = vrot.slane %v1978, 1
    %v1980 = vadd.f32 %v1978, %v1979
    %1981 = vmatprep.subr.mxu0 0.0
    %1982 = vmatpush1.msra.mxu0 %v101
    %1983 = vmatprep.subr.mxu0 0.0
    %1984 = vmatpush1.msra.mxu0 %v102
    %1985 = vmatprep.subr.mxu0 0.0
    %1986 = vmatpush1.msra.mxu0 %v103
    %1987 = vmatprep.subr.mxu0 0.0
    %1988 = vmatpush1.msra.mxu0 %v104
    %1989 = vmatprep.subr.mxu0 0.0
    %1990 = vmatpush1.msra.mxu0 0.0
    %1991 = vmatprep.subr.mxu0 0.0
    %1992 = vmatpush1.msra.mxu0 0.0
    %1993 = vmatprep.subr.mxu0 0.0
    %1994 = vmatpush1.msra.mxu0 0.0
    %1995 = vmatprep.subr.mxu0 0.0
    %1996 = vmatpush1.msra.mxu0 0.0
    %1997 = vmatprep.subr.mxu0 0.0
    %1998 = vmatpush1.msra.mxu0 0.0
    %1999 = vmatprep.subr.mxu0 0.0
    %2000 = vmatpush1.msra.mxu0 0.0
    %2001 = vmatprep.subr.mxu0 0.0
    %2002 = vmatpush1.msra.mxu0 0.0
    %2003 = vmatprep.subr.mxu0 0.0
    %2004 = vmatpush1.msra.mxu0 0.0
    %2005 = vmatprep.subr.mxu0 0.0
    %2006 = vmatpush1.msra.mxu0 0.0
    %2007 = vmatprep.subr.mxu0 0.0
    %2008 = vmatpush1.msra.mxu0 0.0
    %2009 = vmatprep.subr.mxu0 0.0
    %2010 = vmatpush1.msra.mxu0 0.0
    %2011 = vmatprep.subr.mxu0 0.0
    %2012 = vmatpush1.msra.mxu0 0.0
    %2013 = vmatprep.subr.mxu0 0.0
    %2014 = vmatpush1.msra.mxu0 0.0
    %2015 = vmatprep.subr.mxu0 0.0
    %2016 = vmatpush1.msra.mxu0 0.0
    %2017 = vmatprep.subr.mxu0 0.0
    %2018 = vmatpush1.msra.mxu0 0.0
    %2019 = vmatprep.subr.mxu0 0.0
    %2020 = vmatpush1.msra.mxu0 0.0
    %2021 = vmatprep.subr.mxu0 0.0
    %2022 = vmatpush1.msra.mxu0 0.0
    %2023 = vmatprep.subr.mxu0 0.0
    %2024 = vmatpush1.msra.mxu0 0.0
    %2025 = vmatprep.subr.mxu0 0.0
    %2026 = vmatpush1.msra.mxu0 0.0
    %2027 = vmatprep.subr.mxu0 0.0
    %2028 = vmatpush1.msra.mxu0 0.0
    %2029 = vmatprep.subr.mxu0 0.0
    %2030 = vmatpush1.msra.mxu0 0.0
    %2031 = vmatprep.subr.mxu0 0.0
    %2032 = vmatpush1.msra.mxu0 0.0
    %2033 = vmatprep.subr.mxu0 0.0
    %2034 = vmatpush1.msra.mxu0 0.0
    %2035 = vmatprep.subr.mxu0 0.0
    %2036 = vmatpush1.msra.mxu0 0.0
    %2037 = vmatprep.subr.mxu0 0.0
    %2038 = vmatpush1.msra.mxu0 0.0
    %2039 = vmatprep.subr.mxu0 0.0
    %2040 = vmatpush1.msra.mxu0 0.0
    %2041 = vmatprep.subr.mxu0 0.0
    %2042 = vmatpush1.msra.mxu0 0.0
    %2043 = vmatprep.subr.mxu0 0.0
    %2044 = vmatpush1.msra.mxu0 0.0
    %2045 = vmatprep.mubr.f32.mxu0 0.0
    %2046 = vmatmul.mubr.f32.gmra.mrb[0].mxu0 %v1410
    %v2047 = vpop.f32.mrb[0].mxu0
    %v2048 = vadd.f32 0.0, %v2047
    %v2049 = vpop.f32.mrb[0].mxu0
    %2050 = vdwg.mxu0
    %v2059 = vsel %vm767, %v1938, %v1931
    %v2060 = vsel %vm769, %v1945, %v2059
    %v2061 = vsel %vm771, %v1952, %v2060
    %v2062 = vsel %vm773, %v1959, %v2061
    %v2063 = vsel %vm775, %v1966, %v2062
    %v2064 = vsel %vm777, %v1973, %v2063
    %v2065 = vsel %vm779, %v1980, %v2064
    %v2066 = vsel %vm193, %v2065, 0
    %2068 = vmatprep.subr.mxu0 0.0
    %2069 = vmatpush1.msra.mxu0 %v97
    %2070 = vmatprep.subr.mxu0 0.0
    %2071 = vmatpush1.msra.mxu0 %v98
    %2072 = vmatprep.subr.mxu0 0.0
    %2073 = vmatpush1.msra.mxu0 %v99
    %2074 = vmatprep.subr.mxu0 0.0
    %2075 = vmatpush1.msra.mxu0 %v100
    %2076 = vmatprep.subr.mxu0 0.0
    %2077 = vmatpush1.msra.mxu0 0.0
    %2078 = vmatprep.subr.mxu0 0.0
    %2079 = vmatpush1.msra.mxu0 0.0
    %2080 = vmatprep.subr.mxu0 0.0
    %2081 = vmatpush1.msra.mxu0 0.0
    %2082 = vmatprep.subr.mxu0 0.0
    %2083 = vmatpush1.msra.mxu0 0.0
    %2084 = vmatprep.subr.mxu0 0.0
    %2085 = vmatpush1.msra.mxu0 0.0
    %2086 = vmatprep.subr.mxu0 0.0
    %2087 = vmatpush1.msra.mxu0 0.0
    %2088 = vmatprep.subr.mxu0 0.0
    %2089 = vmatpush1.msra.mxu0 0.0
    %2090 = vmatprep.subr.mxu0 0.0
    %2091 = vmatpush1.msra.mxu0 0.0
    %2092 = vmatprep.subr.mxu0 0.0
    %2093 = vmatpush1.msra.mxu0 0.0
    %2094 = vmatprep.subr.mxu0 0.0
    %2095 = vmatpush1.msra.mxu0 0.0
    %2096 = vmatprep.subr.mxu0 0.0
    %2097 = vmatpush1.msra.mxu0 0.0
    %2098 = vmatprep.subr.mxu0 0.0
    %2099 = vmatpush1.msra.mxu0 0.0
    %2100 = vmatprep.subr.mxu0 0.0
    %2101 = vmatpush1.msra.mxu0 0.0
    %2102 = vmatprep.subr.mxu0 0.0
    %2103 = vmatpush1.msra.mxu0 0.0
    %2104 = vmatprep.subr.mxu0 0.0
    %2105 = vmatpush1.msra.mxu0 0.0
    %2106 = vmatprep.subr.mxu0 0.0
    %2107 = vmatpush1.msra.mxu0 0.0
    %2108 = vmatprep.subr.mxu0 0.0
    %2109 = vmatpush1.msra.mxu0 0.0
    %2110 = vmatprep.subr.mxu0 0.0
    %2111 = vmatpush1.msra.mxu0 0.0
    %2112 = vmatprep.subr.mxu0 0.0
    %2113 = vmatpush1.msra.mxu0 0.0
    %2114 = vmatprep.subr.mxu0 0.0
    %2115 = vmatpush1.msra.mxu0 0.0
    %2116 = vmatprep.subr.mxu0 0.0
    %2117 = vmatpush1.msra.mxu0 0.0
    %2118 = vmatprep.subr.mxu0 0.0
    %2119 = vmatpush1.msra.mxu0 0.0
    %2120 = vmatprep.subr.mxu0 0.0
    %2121 = vmatpush1.msra.mxu0 0.0
    %2122 = vmatprep.subr.mxu0 0.0
    %2123 = vmatpush1.msra.mxu0 0.0
    %2124 = vmatprep.subr.mxu0 0.0
    %2125 = vmatpush1.msra.mxu0 0.0
    %2126 = vmatprep.subr.mxu0 0.0
    %2127 = vmatpush1.msra.mxu0 0.0
    %2128 = vmatprep.subr.mxu0 0.0
    %2129 = vmatpush1.msra.mxu0 0.0
    %2130 = vmatprep.subr.mxu0 0.0
    %2131 = vmatpush1.msra.mxu0 0.0
    %2132 = vmatprep.mubr.f32.mxu0 0.0
    %2133 = vmatmul.mubr.f32.gmra.mrb[0].mxu0 %v2066
    %v2134 = vpop.f32.mrb[0].mxu0
    %v2135 = vadd.f32 %v2048, %v2134
    %v2136 = vpop.f32.mrb[0].mxu0
    %2137 = vdwg.mxu0
    %v2138 = vtanh.pop %v2135
    %s2139 = scalar_lea.vmem [#allocation8], 8
    %2140 = vst.msk [vmem:[%s2139] sm:$0xff] %vm193, %v2138
    %2141 = vmatprep.subr.mxu0 0.0
    %2142 = vmatpush1.msra.mxu0 %v89
    %2143 = vmatprep.subr.mxu0 0.0
    %2144 = vmatpush1.msra.mxu0 %v90
    %2145 = vmatprep.subr.mxu0 0.0
    %2146 = vmatpush1.msra.mxu0 %v91
    %2147 = vmatprep.subr.mxu0 0.0
    %2148 = vmatpush1.msra.mxu0 %v92
    %2149 = vmatprep.subr.mxu0 0.0
    %2150 = vmatpush1.msra.mxu0 0.0
    %2151 = vmatprep.subr.mxu0 0.0
    %2152 = vmatpush1.msra.mxu0 0.0
    %2153 = vmatprep.subr.mxu0 0.0
    %2154 = vmatpush1.msra.mxu0 0.0
    %2155 = vmatprep.subr.mxu0 0.0
    %2156 = vmatpush1.msra.mxu0 0.0
    %2157 = vmatprep.subr.mxu0 0.0
    %2158 = vmatpush1.msra.mxu0 0.0
    %2159 = vmatprep.subr.mxu0 0.0
    %2160 = vmatpush1.msra.mxu0 0.0
    %2161 = vmatprep.subr.mxu0 0.0
    %2162 = vmatpush1.msra.mxu0 0.0
    %2163 = vmatprep.subr.mxu0 0.0
    %2164 = vmatpush1.msra.mxu0 0.0
    %2165 = vmatprep.subr.mxu0 0.0
    %2166 = vmatpush1.msra.mxu0 0.0
    %2167 = vmatprep.subr.mxu0 0.0
    %2168 = vmatpush1.msra.mxu0 0.0
    %2169 = vmatprep.subr.mxu0 0.0
    %2170 = vmatpush1.msra.mxu0 0.0
    %2171 = vmatprep.subr.mxu0 0.0
    %2172 = vmatpush1.msra.mxu0 0.0
    %2173 = vmatprep.subr.mxu0 0.0
    %2174 = vmatpush1.msra.mxu0 0.0
    %2175 = vmatprep.subr.mxu0 0.0
    %2176 = vmatpush1.msra.mxu0 0.0
    %2177 = vmatprep.subr.mxu0 0.0
    %2178 = vmatpush1.msra.mxu0 0.0
    %2179 = vmatprep.subr.mxu0 0.0
    %2180 = vmatpush1.msra.mxu0 0.0
    %2181 = vmatprep.subr.mxu0 0.0
    %2182 = vmatpush1.msra.mxu0 0.0
    %2183 = vmatprep.subr.mxu0 0.0
    %2184 = vmatpush1.msra.mxu0 0.0
    %2185 = vmatprep.subr.mxu0 0.0
    %2186 = vmatpush1.msra.mxu0 0.0
    %2187 = vmatprep.subr.mxu0 0.0
    %2188 = vmatpush1.msra.mxu0 0.0
    %2189 = vmatprep.subr.mxu0 0.0
    %2190 = vmatpush1.msra.mxu0 0.0
    %2191 = vmatprep.subr.mxu0 0.0
    %2192 = vmatpush1.msra.mxu0 0.0
    %2193 = vmatprep.subr.mxu0 0.0
    %2194 = vmatpush1.msra.mxu0 0.0
    %2195 = vmatprep.subr.mxu0 0.0
    %2196 = vmatpush1.msra.mxu0 0.0
    %2197 = vmatprep.subr.mxu0 0.0
    %2198 = vmatpush1.msra.mxu0 0.0
    %2199 = vmatprep.subr.mxu0 0.0
    %2200 = vmatpush1.msra.mxu0 0.0
    %2201 = vmatprep.subr.mxu0 0.0
    %2202 = vmatpush1.msra.mxu0 0.0
    %2203 = vmatprep.subr.mxu0 0.0
    %2204 = vmatpush1.msra.mxu0 0.0
    %2205 = vmatprep.mubr.f32.mxu0 0.0
    %2206 = vmatmul.mubr.f32.gmra.mrb[0].mxu0 %v1410
    %v2207 = vpop.f32.mrb[0].mxu0
    %v2208 = vadd.f32 0.0, %v2207
    %v2209 = vpop.f32.mrb[0].mxu0
    %2210 = vdwg.mxu0
    %v2212 = vsel %vm193, %v2138, 0
    %2214 = vmatprep.subr.mxu0 0.0
    %2215 = vmatpush1.msra.mxu0 %v85
    %2216 = vmatprep.subr.mxu0 0.0
    %2217 = vmatpush1.msra.mxu0 %v86
    %2218 = vmatprep.subr.mxu0 0.0
    %2219 = vmatpush1.msra.mxu0 %v87
    %2220 = vmatprep.subr.mxu0 0.0
    %2221 = vmatpush1.msra.mxu0 %v88
    %2222 = vmatprep.subr.mxu0 0.0
    %2223 = vmatpush1.msra.mxu0 0.0
    %2224 = vmatprep.subr.mxu0 0.0
    %2225 = vmatpush1.msra.mxu0 0.0
    %2226 = vmatprep.subr.mxu0 0.0
    %2227 = vmatpush1.msra.mxu0 0.0
    %2228 = vmatprep.subr.mxu0 0.0
    %2229 = vmatpush1.msra.mxu0 0.0
    %2230 = vmatprep.subr.mxu0 0.0
    %2231 = vmatpush1.msra.mxu0 0.0
    %2232 = vmatprep.subr.mxu0 0.0
    %2233 = vmatpush1.msra.mxu0 0.0
    %2234 = vmatprep.subr.mxu0 0.0
    %2235 = vmatpush1.msra.mxu0 0.0
    %2236 = vmatprep.subr.mxu0 0.0
    %2237 = vmatpush1.msra.mxu0 0.0
    %2238 = vmatprep.subr.mxu0 0.0
    %2239 = vmatpush1.msra.mxu0 0.0
    %2240 = vmatprep.subr.mxu0 0.0
    %2241 = vmatpush1.msra.mxu0 0.0
    %2242 = vmatprep.subr.mxu0 0.0
    %2243 = vmatpush1.msra.mxu0 0.0
    %2244 = vmatprep.subr.mxu0 0.0
    %2245 = vmatpush1.msra.mxu0 0.0
    %2246 = vmatprep.subr.mxu0 0.0
    %2247 = vmatpush1.msra.mxu0 0.0
    %2248 = vmatprep.subr.mxu0 0.0
    %2249 = vmatpush1.msra.mxu0 0.0
    %2250 = vmatprep.subr.mxu0 0.0
    %2251 = vmatpush1.msra.mxu0 0.0
    %2252 = vmatprep.subr.mxu0 0.0
    %2253 = vmatpush1.msra.mxu0 0.0
    %2254 = vmatprep.subr.mxu0 0.0
    %2255 = vmatpush1.msra.mxu0 0.0
    %2256 = vmatprep.subr.mxu0 0.0
    %2257 = vmatpush1.msra.mxu0 0.0
    %2258 = vmatprep.subr.mxu0 0.0
    %2259 = vmatpush1.msra.mxu0 0.0
    %2260 = vmatprep.subr.mxu0 0.0
    %2261 = vmatpush1.msra.mxu0 0.0
    %2262 = vmatprep.subr.mxu0 0.0
    %2263 = vmatpush1.msra.mxu0 0.0
    %2264 = vmatprep.subr.mxu0 0.0
    %2265 = vmatpush1.msra.mxu0 0.0
    %2266 = vmatprep.subr.mxu0 0.0
    %2267 = vmatpush1.msra.mxu0 0.0
    %2268 = vmatprep.subr.mxu0 0.0
    %2269 = vmatpush1.msra.mxu0 0.0
    %2270 = vmatprep.subr.mxu0 0.0
    %2271 = vmatpush1.msra.mxu0 0.0
    %2272 = vmatprep.subr.mxu0 0.0
    %2273 = vmatpush1.msra.mxu0 0.0
    %2274 = vmatprep.subr.mxu0 0.0
    %2275 = vmatpush1.msra.mxu0 0.0
    %2276 = vmatprep.subr.mxu0 0.0
    %2277 = vmatpush1.msra.mxu0 0.0
    %2278 = vmatprep.mubr.f32.mxu0 0.0
    %2279 = vmatmul.mubr.f32.gmra.mrb[0].mxu0 %v2212
    %v2280 = vpop.f32.mrb[0].mxu0
    %v2281 = vadd.f32 %v2208, %v2280
    %v2282 = vpop.f32.mrb[0].mxu0
    %2283 = vdwg.mxu0
    %v2284 = vadd.f32 %v2281, %v110
    %v2285 = vxor.u32 %v2284, 2147483648
    %v2286 = vmul.f32 %v2285, 1.442695
    %v2287 = vpow.pop %v2286
    %v2288 = vadd.f32 %v2287, 1.0
    %v2289 = vrcp.pop %v2288
    %v2290 = vmul.f32 1.0, %v2289
    %v2291 = vtanh.pop %v2284
    %v2292 = vmul.f32 %v2290, %v1400
    %2294 = vrot.lane.b32.xlu0 %v2291, 64
    %v2295 = vpop.permute.xlu0 %2294
    %v2297 = vmul.f32 %v2290, %v2295
    %2299 = vrot.lane.b32.xlu0 %v2297, 32
    %v2300 = vpop.permute.xlu0 %2299
    %v2302 = vadd.f32 %v2292, %v2300
    %v2303 = vtanh.pop %v2302
    %2305 = vrot.lane.b32.xlu0 %v2303, 64
    %v2306 = vpop.permute.xlu0 %2305
    %v2308 = vmul.f32 %v2290, %v2306
    %2310 = vrot.lane.b32.xlu0 %v2308, 32
    %v2311 = vpop.permute.xlu0 %2310
    %v2312 = vsel %vm193, %v2311, 0
    %2314 = vmatprep.subr.mxu0 0.0
    %2315 = vmatpush1.msra.mxu0 %v93
    %2316 = vmatprep.subr.mxu0 0.0
    %2317 = vmatpush1.msra.mxu0 %v94
    %2318 = vmatprep.subr.mxu0 0.0
    %2319 = vmatpush1.msra.mxu0 %v95
    %2320 = vmatprep.subr.mxu0 0.0
    %2321 = vmatpush1.msra.mxu0 %v96
    %2322 = vmatprep.subr.mxu0 0.0
    %2323 = vmatpush1.msra.mxu0 0.0
    %2324 = vmatprep.subr.mxu0 0.0
    %2325 = vmatpush1.msra.mxu0 0.0
    %2326 = vmatprep.subr.mxu0 0.0
    %2327 = vmatpush1.msra.mxu0 0.0
    %2328 = vmatprep.subr.mxu0 0.0
    %2329 = vmatpush1.msra.mxu0 0.0
    %2330 = vmatprep.subr.mxu0 0.0
    %2331 = vmatpush1.msra.mxu0 0.0
    %2332 = vmatprep.subr.mxu0 0.0
    %2333 = vmatpush1.msra.mxu0 0.0
    %2334 = vmatprep.subr.mxu0 0.0
    %2335 = vmatpush1.msra.mxu0 0.0
    %2336 = vmatprep.subr.mxu0 0.0
    %2337 = vmatpush1.msra.mxu0 0.0
    %2338 = vmatprep.subr.mxu0 0.0
    %2339 = vmatpush1.msra.mxu0 0.0
    %2340 = vmatprep.subr.mxu0 0.0
    %2341 = vmatpush1.msra.mxu0 0.0
    %2342 = vmatprep.subr.mxu0 0.0
    %2343 = vmatpush1.msra.mxu0 0.0
    %2344 = vmatprep.subr.mxu0 0.0
    %2345 = vmatpush1.msra.mxu0 0.0
    %2346 = vmatprep.subr.mxu0 0.0
    %2347 = vmatpush1.msra.mxu0 0.0
    %2348 = vmatprep.subr.mxu0 0.0
    %2349 = vmatpush1.msra.mxu0 0.0
    %2350 = vmatprep.subr.mxu0 0.0
    %2351 = vmatpush1.msra.mxu0 0.0
    %2352 = vmatprep.subr.mxu0 0.0
    %2353 = vmatpush1.msra.mxu0 0.0
    %2354 = vmatprep.subr.mxu0 0.0
    %2355 = vmatpush1.msra.mxu0 0.0
    %2356 = vmatprep.subr.mxu0 0.0
    %2357 = vmatpush1.msra.mxu0 0.0
    %2358 = vmatprep.subr.mxu0 0.0
    %2359 = vmatpush1.msra.mxu0 0.0
    %2360 = vmatprep.subr.mxu0 0.0
    %2361 = vmatpush1.msra.mxu0 0.0
    %2362 = vmatprep.subr.mxu0 0.0
    %2363 = vmatpush1.msra.mxu0 0.0
    %2364 = vmatprep.subr.mxu0 0.0
    %2365 = vmatpush1.msra.mxu0 0.0
    %2366 = vmatprep.subr.mxu0 0.0
    %2367 = vmatpush1.msra.mxu0 0.0
    %2368 = vmatprep.subr.mxu0 0.0
    %2369 = vmatpush1.msra.mxu0 0.0
    %2370 = vmatprep.subr.mxu0 0.0
    %2371 = vmatpush1.msra.mxu0 0.0
    %2372 = vmatprep.subr.mxu0 0.0
    %2373 = vmatpush1.msra.mxu0 0.0
    %2374 = vmatprep.subr.mxu0 0.0
    %2375 = vmatpush1.msra.mxu0 0.0
    %2376 = vmatprep.subr.mxu0 0.0
    %2377 = vmatpush1.msra.mxu0 0.0
    %2378 = vmatprep.mubr.f32.mxu0 0.0
    %2379 = vmatmul.mubr.f32.gmra.mrb[0].mxu0 %v2312
    %v2380 = vpop.f32.mrb[0].mxu0
    %v2381 = vadd.f32 0.0, %v2380
    %v2382 = vpop.f32.mrb[0].mxu0
    %2383 = vdwg.mxu0
    %v2385 = vcombine.high %v2381, %v2381
    %v2387 = vunpack.c.l.s4 1966171168
    %v2388 = vunpack.c.0.s8 %v2387
    %v2389 = vlaneseq
    %v2390 = vshrl.u32 %v2389, 7
    %v2391 = vsub.s32 %v2388, %v2390
    %v2392 = vrot.slane %v2381, %v2391
    %v2394 = vunpack.c.l.s4 1966171168
    %v2395 = vunpack.c.0.s8 %v2394
    %v2396 = vlaneseq
    %v2397 = vshrl.u32 %v2396, 7
    %v2398 = vsub.s32 %v2395, %v2397
    %v2399 = vrot.slane %v2385, %v2398
    %v2400 = vcombine.high %v2392, %v2392
    %v2401 = vcombine.high %v2399, %v2399
    %v2403 = vunpack.c.l.s4 1966171168
    %v2404 = vunpack.c.0.s8 %v2403
    %v2405 = vlaneseq
    %v2406 = vshrl.u32 %v2405, 7
    %v2407 = vsub.s32 %v2404, %v2406
    %v2408 = vrot.slane %v2392, %v2407
    %v2410 = vunpack.c.l.s4 1966171168
    %v2411 = vunpack.c.0.s8 %v2410
    %v2412 = vlaneseq
    %v2413 = vshrl.u32 %v2412, 7
    %v2414 = vsub.s32 %v2411, %v2413
    %v2415 = vrot.slane %v2399, %v2414
    %v2417 = vunpack.c.l.s4 1966171168
    %v2418 = vunpack.c.0.s8 %v2417
    %v2419 = vlaneseq
    %v2420 = vshrl.u32 %v2419, 7
    %v2421 = vsub.s32 %v2418, %v2420
    %v2422 = vrot.slane %v2400, %v2421
    %v2424 = vunpack.c.l.s4 1966171168
    %v2425 = vunpack.c.0.s8 %v2424
    %v2426 = vlaneseq
    %v2427 = vshrl.u32 %v2426, 7
    %v2428 = vsub.s32 %v2425, %v2427
    %v2429 = vrot.slane %v2401, %v2428
    %v2430 = vcombine.high %v2408, %v2408
    %v2431 = vcombine.high %v2415, %v2415
    %v2432 = vcombine.high %v2422, %v2422
    %v2433 = vcombine.high %v2429, %v2429
    %v2434 = vlaneseq
    %v2435 = vshrl.u32 %v2434, 7
    %v2436 = vsub.s32 0, %v2435
    %v2437 = vrot.slane %v2408, %v2436
    %v2438 = vlaneseq
    %v2439 = vshrl.u32 %v2438, 7
    %v2440 = vsub.s32 0, %v2439
    %v2441 = vrot.slane %v2422, %v2440
    %v2442 = vlaneseq
    %v2443 = vshrl.u32 %v2442, 7
    %v2444 = vsub.s32 0, %v2443
    %v2445 = vrot.slane %v2430, %v2444
    %v2446 = vlaneseq
    %v2447 = vshrl.u32 %v2446, 7
    %v2448 = vsub.s32 0, %v2447
    %v2449 = vrot.slane %v2432, %v2448
    %v2450 = vlaneseq
    %v2451 = vshrl.u32 %v2450, 7
    %v2452 = vsub.s32 0, %v2451
    %v2453 = vrot.slane %v2415, %v2452
    %v2454 = vlaneseq
    %v2455 = vshrl.u32 %v2454, 7
    %v2456 = vsub.s32 0, %v2455
    %v2457 = vrot.slane %v2429, %v2456
    %v2458 = vlaneseq
    %v2459 = vshrl.u32 %v2458, 7
    %v2460 = vsub.s32 0, %v2459
    %v2461 = vrot.slane %v2431, %v2460
    %v2462 = vlaneseq
    %v2463 = vshrl.u32 %v2462, 7
    %v2464 = vsub.s32 0, %v2463
    %v2465 = vrot.slane %v2433, %v2464
    %v2474 = vmul.f32 %v2437, %v77
    %v2475 = vmul.f32 %v2441, %v78
    %v2476 = vmul.f32 %v2445, %v79
    %v2477 = vmul.f32 %v2449, %v80
    %v2478 = vmul.f32 %v2453, %v81
    %v2479 = vmul.f32 %v2457, %v82
    %v2480 = vmul.f32 %v2461, %v83
    %v2481 = vmul.f32 %v2465, %v84
    %v2482 = vsel %vm596, %v2474, 0.0
    %2483 = vadd.xlane.f32.xlu0 %v2482
    %v2484 = vpop.xlane.xlu0 %2483
    %v2485 = vsel %vm596, %v2475, 0.0
    %2486 = vadd.xlane.f32.xlu0 %v2485
    %v2487 = vpop.xlane.xlu0 %2486
    %v2488 = vsel %vm596, %v2476, 0.0
    %2489 = vadd.xlane.f32.xlu0 %v2488
    %v2490 = vpop.xlane.xlu0 %2489
    %v2491 = vsel %vm596, %v2477, 0.0
    %2492 = vadd.xlane.f32.xlu0 %v2491
    %v2493 = vpop.xlane.xlu0 %2492
    %v2494 = vsel %vm596, %v2478, 0.0
    %2495 = vadd.xlane.f32.xlu0 %v2494
    %v2496 = vpop.xlane.xlu0 %2495
    %v2497 = vsel %vm596, %v2479, 0.0
    %2498 = vadd.xlane.f32.xlu0 %v2497
    %v2499 = vpop.xlane.xlu0 %2498
    %v2500 = vsel %vm596, %v2480, 0.0
    %2501 = vadd.xlane.f32.xlu0 %v2500
    %v2502 = vpop.xlane.xlu0 %2501
    %v2503 = vsel %vm596, %v2481, 0.0
    %2504 = vadd.xlane.f32.xlu0 %v2503
    %v2505 = vpop.xlane.xlu0 %2504
    %v2506 = vadd.f32 %v2484, %v663
    %v2507 = vadd.f32 %v2487, %v666
    %v2508 = vadd.f32 %v2490, %v669
    %v2509 = vadd.f32 %v2493, %v672
    %v2510 = vadd.f32 %v2496, %v675
    %v2511 = vadd.f32 %v2499, %v678
    %v2512 = vadd.f32 %v2502, %v681
    %v2513 = vadd.f32 %v2505, %v684
    %2522 = vset.pattern.permute.xlu0 0
    %2523 = vperm.xlu0 %2522, %v2506
    %v2524 = vpop.permute.xlu0 %2523
    %2525 = vset.pattern.permute.xlu0 0
    %2526 = vperm.xlu0 %2525, %v2507
    %v2527 = vpop.permute.xlu0 %2526
    %2528 = vset.pattern.permute.xlu0 0
    %2529 = vperm.xlu0 %2528, %v2508
    %v2530 = vpop.permute.xlu0 %2529
    %2531 = vset.pattern.permute.xlu0 0
    %2532 = vperm.xlu0 %2531, %v2509
    %v2533 = vpop.permute.xlu0 %2532
    %2534 = vset.pattern.permute.xlu0 0
    %2535 = vperm.xlu0 %2534, %v2510
    %v2536 = vpop.permute.xlu0 %2535
    %2537 = vset.pattern.permute.xlu0 0
    %2538 = vperm.xlu0 %2537, %v2511
    %v2539 = vpop.permute.xlu0 %2538
    %2540 = vset.pattern.permute.xlu0 0
    %2541 = vperm.xlu0 %2540, %v2512
    %v2542 = vpop.permute.xlu0 %2541
    %2543 = vset.pattern.permute.xlu0 0
    %2544 = vperm.xlu0 %2543, %v2513
    %v2545 = vpop.permute.xlu0 %2544
    %v2546 = vlaneseq
    %v2547 = vshrl.u32 %v2546, 7
    %v2548 = vsub.s32 %v734, %v2547
    %v2549 = vrot.slane %v2524, %v2548
    %v2550 = vlaneseq
    %v2551 = vshrl.u32 %v2550, 7
    %v2552 = vsub.s32 %v734, %v2551
    %v2553 = vrot.slane %v2527, %v2552
    %v2554 = vlaneseq
    %v2555 = vshrl.u32 %v2554, 7
    %v2556 = vsub.s32 %v734, %v2555
    %v2557 = vrot.slane %v2530, %v2556
    %v2558 = vlaneseq
    %v2559 = vshrl.u32 %v2558, 7
    %v2560 = vsub.s32 %v734, %v2559
    %v2561 = vrot.slane %v2533, %v2560
    %v2562 = vlaneseq
    %v2563 = vshrl.u32 %v2562, 7
    %v2564 = vsub.s32 %v734, %v2563
    %v2565 = vrot.slane %v2536, %v2564
    %v2566 = vlaneseq
    %v2567 = vshrl.u32 %v2566, 7
    %v2568 = vsub.s32 %v734, %v2567
    %v2569 = vrot.slane %v2539, %v2568
    %v2570 = vlaneseq
    %v2571 = vshrl.u32 %v2570, 7
    %v2572 = vsub.s32 %v734, %v2571
    %v2573 = vrot.slane %v2542, %v2572
    %v2574 = vlaneseq
    %v2575 = vshrl.u32 %v2574, 7
    %v2576 = vsub.s32 %v734, %v2575
    %v2577 = vrot.slane %v2545, %v2576
    %v2578 = vsel %vm767, %v2553, %v2549
    %v2579 = vsel %vm769, %v2557, %v2578
    %v2580 = vsel %vm771, %v2561, %v2579
    %v2581 = vsel %vm773, %v2565, %v2580
    %v2582 = vsel %vm775, %v2569, %v2581
    %v2583 = vsel %vm777, %v2573, %v2582
    %v2584 = vsel %vm779, %v2577, %v2583
    %v2586 = vsel %vm782, %v2584, -inf
    %2587 = vmax.xlane.f32.xlu0 %v2586
    %v2588 = vpop.xlane.xlu0 %2587
    %v2590 = vlaneseq
    %v2591 = vshrl.u32 %v2590, 7
    %v2592 = vsub.s32 0, %v2591
    %v2593 = vrot.slane %v2588, %v2592
    %v2594 = vlaneseq
    %v2595 = vshrl.u32 %v2594, 7
    %v2596 = vsub.s32 1, %v2595
    %v2597 = vrot.slane %v2588, %v2596
    %v2598 = vlaneseq
    %v2599 = vshrl.u32 %v2598, 7
    %v2600 = vsub.s32 2, %v2599
    %v2601 = vrot.slane %v2588, %v2600
    %v2602 = vlaneseq
    %v2603 = vshrl.u32 %v2602, 7
    %v2604 = vsub.s32 3, %v2603
    %v2605 = vrot.slane %v2588, %v2604
    %v2606 = vlaneseq
    %v2607 = vshrl.u32 %v2606, 7
    %v2608 = vsub.s32 4, %v2607
    %v2609 = vrot.slane %v2588, %v2608
    %v2610 = vlaneseq
    %v2611 = vshrl.u32 %v2610, 7
    %v2612 = vsub.s32 5, %v2611
    %v2613 = vrot.slane %v2588, %v2612
    %v2614 = vlaneseq
    %v2615 = vshrl.u32 %v2614, 7
    %v2616 = vsub.s32 6, %v2615
    %v2617 = vrot.slane %v2588, %v2616
    %v2618 = vlaneseq
    %v2619 = vshrl.u32 %v2618, 7
    %v2620 = vsub.s32 7, %v2619
    %v2621 = vrot.slane %v2588, %v2620
    %v2630 = vsub.f32 %v2506, %v2593
    %v2631 = vsub.f32 %v2507, %v2597
    %v2632 = vsub.f32 %v2508, %v2601
    %v2633 = vsub.f32 %v2509, %v2605
    %v2634 = vsub.f32 %v2510, %v2609
    %v2635 = vsub.f32 %v2511, %v2613
    %v2636 = vsub.f32 %v2512, %v2617
    %v2637 = vsub.f32 %v2513, %v2621
    %v2638 = vmul.f32 %v2630, 1.442695
    %v2639 = vpow.pop %v2638
    %v2640 = vmul.f32 %v2631, 1.442695
    %v2641 = vpow.pop %v2640
    %v2642 = vmul.f32 %v2632, 1.442695
    %v2643 = vpow.pop %v2642
    %v2644 = vmul.f32 %v2633, 1.442695
    %v2645 = vpow.pop %v2644
    %v2646 = vmul.f32 %v2634, 1.442695
    %v2647 = vpow.pop %v2646
    %v2648 = vmul.f32 %v2635, 1.442695
    %v2649 = vpow.pop %v2648
    %v2650 = vmul.f32 %v2636, 1.442695
    %v2651 = vpow.pop %v2650
    %v2652 = vmul.f32 %v2637, 1.442695
    %v2653 = vpow.pop %v2652
    %2662 = vset.pattern.permute.xlu0 0
    %2663 = vperm.xlu0 %2662, %v2639
    %v2664 = vpop.permute.xlu0 %2663
    %2665 = vset.pattern.permute.xlu0 0
    %2666 = vperm.xlu0 %2665, %v2641
    %v2667 = vpop.permute.xlu0 %2666
    %2668 = vset.pattern.permute.xlu0 0
    %2669 = vperm.xlu0 %2668, %v2643
    %v2670 = vpop.permute.xlu0 %2669
    %2671 = vset.pattern.permute.xlu0 0
    %2672 = vperm.xlu0 %2671, %v2645
    %v2673 = vpop.permute.xlu0 %2672
    %2674 = vset.pattern.permute.xlu0 0
    %2675 = vperm.xlu0 %2674, %v2647
    %v2676 = vpop.permute.xlu0 %2675
    %2677 = vset.pattern.permute.xlu0 0
    %2678 = vperm.xlu0 %2677, %v2649
    %v2679 = vpop.permute.xlu0 %2678
    %2680 = vset.pattern.permute.xlu0 0
    %2681 = vperm.xlu0 %2680, %v2651
    %v2682 = vpop.permute.xlu0 %2681
    %2683 = vset.pattern.permute.xlu0 0
    %2684 = vperm.xlu0 %2683, %v2653
    %v2685 = vpop.permute.xlu0 %2684
    %v2686 = vlaneseq
    %v2687 = vshrl.u32 %v2686, 7
    %v2688 = vsub.s32 %v734, %v2687
    %v2689 = vrot.slane %v2664, %v2688
    %v2690 = vlaneseq
    %v2691 = vshrl.u32 %v2690, 7
    %v2692 = vsub.s32 %v734, %v2691
    %v2693 = vrot.slane %v2667, %v2692
    %v2694 = vlaneseq
    %v2695 = vshrl.u32 %v2694, 7
    %v2696 = vsub.s32 %v734, %v2695
    %v2697 = vrot.slane %v2670, %v2696
    %v2698 = vlaneseq
    %v2699 = vshrl.u32 %v2698, 7
    %v2700 = vsub.s32 %v734, %v2699
    %v2701 = vrot.slane %v2673, %v2700
    %v2702 = vlaneseq
    %v2703 = vshrl.u32 %v2702, 7
    %v2704 = vsub.s32 %v734, %v2703
    %v2705 = vrot.slane %v2676, %v2704
    %v2706 = vlaneseq
    %v2707 = vshrl.u32 %v2706, 7
    %v2708 = vsub.s32 %v734, %v2707
    %v2709 = vrot.slane %v2679, %v2708
    %v2710 = vlaneseq
    %v2711 = vshrl.u32 %v2710, 7
    %v2712 = vsub.s32 %v734, %v2711
    %v2713 = vrot.slane %v2682, %v2712
    %v2714 = vlaneseq
    %v2715 = vshrl.u32 %v2714, 7
    %v2716 = vsub.s32 %v734, %v2715
    %v2717 = vrot.slane %v2685, %v2716
    %v2718 = vsel %vm767, %v2693, %v2689
    %v2719 = vsel %vm769, %v2697, %v2718
    %v2720 = vsel %vm771, %v2701, %v2719
    %v2721 = vsel %vm773, %v2705, %v2720
    %v2722 = vsel %vm775, %v2709, %v2721
    %v2723 = vsel %vm777, %v2713, %v2722
    %v2724 = vsel %vm779, %v2717, %v2723
    %v2726 = vsel %vm782, %v2724, 0.0
    %2727 = vadd.xlane.f32.xlu0 %v2726
    %v2728 = vpop.xlane.xlu0 %2727
    %v2729 = vrcp.pop %v2728
    %v2731 = vlaneseq
    %v2732 = vshrl.u32 %v2731, 7
    %v2733 = vsub.s32 0, %v2732
    %v2734 = vrot.slane %v2729, %v2733
    %v2735 = vlaneseq
    %v2736 = vshrl.u32 %v2735, 7
    %v2737 = vsub.s32 1, %v2736
    %v2738 = vrot.slane %v2729, %v2737
    %v2739 = vlaneseq
    %v2740 = vshrl.u32 %v2739, 7
    %v2741 = vsub.s32 2, %v2740
    %v2742 = vrot.slane %v2729, %v2741
    %v2743 = vlaneseq
    %v2744 = vshrl.u32 %v2743, 7
    %v2745 = vsub.s32 3, %v2744
    %v2746 = vrot.slane %v2729, %v2745
    %v2747 = vlaneseq
    %v2748 = vshrl.u32 %v2747, 7
    %v2749 = vsub.s32 4, %v2748
    %v2750 = vrot.slane %v2729, %v2749
    %v2751 = vlaneseq
    %v2752 = vshrl.u32 %v2751, 7
    %v2753 = vsub.s32 5, %v2752
    %v2754 = vrot.slane %v2729, %v2753
    %v2755 = vlaneseq
    %v2756 = vshrl.u32 %v2755, 7
    %v2757 = vsub.s32 6, %v2756
    %v2758 = vrot.slane %v2729, %v2757
    %v2759 = vlaneseq
    %v2760 = vshrl.u32 %v2759, 7
    %v2761 = vsub.s32 7, %v2760
    %v2762 = vrot.slane %v2729, %v2761
    %v2771 = vmul.f32 %v2639, %v2734
    %v2772 = vmul.f32 %v2641, %v2738
    %v2773 = vmul.f32 %v2643, %v2742
    %v2774 = vmul.f32 %v2645, %v2746
    %v2775 = vmul.f32 %v2647, %v2750
    %v2776 = vmul.f32 %v2649, %v2754
    %v2777 = vmul.f32 %v2651, %v2758
    %v2778 = vmul.f32 %v2653, %v2762
    %2780 = vset.pattern.permute.xlu0 0
    %2781 = vperm.xlu0 %2780, %v2771
    %v2782 = vpop.permute.xlu0 %2781
    %2785 = vset.pattern.permute.xlu0 0
    %2786 = vperm.xlu0 %2785, %v2772
    %v2787 = vpop.permute.xlu0 %2786
    %2790 = vset.pattern.permute.xlu0 0
    %2791 = vperm.xlu0 %2790, %v2773
    %v2792 = vpop.permute.xlu0 %2791
    %2795 = vset.pattern.permute.xlu0 0
    %2796 = vperm.xlu0 %2795, %v2774
    %v2797 = vpop.permute.xlu0 %2796
    %2800 = vset.pattern.permute.xlu0 0
    %2801 = vperm.xlu0 %2800, %v2775
    %v2802 = vpop.permute.xlu0 %2801
    %2805 = vset.pattern.permute.xlu0 0
    %2806 = vperm.xlu0 %2805, %v2776
    %v2807 = vpop.permute.xlu0 %2806
    %2810 = vset.pattern.permute.xlu0 0
    %2811 = vperm.xlu0 %2810, %v2777
    %v2812 = vpop.permute.xlu0 %2811
    %2815 = vset.pattern.permute.xlu0 0
    %2816 = vperm.xlu0 %2815, %v2778
    %v2817 = vpop.permute.xlu0 %2816
    %v2819 = vmul.f32 %v2782, %v77
    %v2820 = vmul.f32 %v2787, %v78
    %v2821 = vmul.f32 %v2792, %v79
    %v2822 = vmul.f32 %v2797, %v80
    %v2823 = vmul.f32 %v2802, %v81
    %v2824 = vmul.f32 %v2807, %v82
    %v2825 = vmul.f32 %v2812, %v83
    %v2826 = vmul.f32 %v2817, %v84
    %v2827 = vsel %vm596, %v2819, 0.0
    %v2828 = vrot.slane %v2827, 4
    %v2829 = vadd.f32 %v2827, %v2828
    %v2830 = vrot.slane %v2829, 2
    %v2831 = vadd.f32 %v2829, %v2830
    %v2832 = vrot.slane %v2831, 1
    %v2833 = vadd.f32 %v2831, %v2832
    %v2834 = vsel %vm596, %v2820, 0.0
    %v2835 = vrot.slane %v2834, 4
    %v2836 = vadd.f32 %v2834, %v2835
    %v2837 = vrot.slane %v2836, 2
    %v2838 = vadd.f32 %v2836, %v2837
    %v2839 = vrot.slane %v2838, 1
    %v2840 = vadd.f32 %v2838, %v2839
    %v2841 = vsel %vm596, %v2821, 0.0
    %v2842 = vrot.slane %v2841, 4
    %v2843 = vadd.f32 %v2841, %v2842
    %v2844 = vrot.slane %v2843, 2
    %v2845 = vadd.f32 %v2843, %v2844
    %v2846 = vrot.slane %v2845, 1
    %v2847 = vadd.f32 %v2845, %v2846
    %v2848 = vsel %vm596, %v2822, 0.0
    %v2849 = vrot.slane %v2848, 4
    %v2850 = vadd.f32 %v2848, %v2849
    %v2851 = vrot.slane %v2850, 2
    %v2852 = vadd.f32 %v2850, %v2851
    %v2853 = vrot.slane %v2852, 1
    %v2854 = vadd.f32 %v2852, %v2853
    %v2855 = vsel %vm596, %v2823, 0.0
    %v2856 = vrot.slane %v2855, 4
    %v2857 = vadd.f32 %v2855, %v2856
    %v2858 = vrot.slane %v2857, 2
    %v2859 = vadd.f32 %v2857, %v2858
    %v2860 = vrot.slane %v2859, 1
    %v2861 = vadd.f32 %v2859, %v2860
    %v2862 = vsel %vm596, %v2824, 0.0
    %v2863 = vrot.slane %v2862, 4
    %v2864 = vadd.f32 %v2862, %v2863
    %v2865 = vrot.slane %v2864, 2
    %v2866 = vadd.f32 %v2864, %v2865
    %v2867 = vrot.slane %v2866, 1
    %v2868 = vadd.f32 %v2866, %v2867
    %v2869 = vsel %vm596, %v2825, 0.0
    %v2870 = vrot.slane %v2869, 4
    %v2871 = vadd.f32 %v2869, %v2870
    %v2872 = vrot.slane %v2871, 2
    %v2873 = vadd.f32 %v2871, %v2872
    %v2874 = vrot.slane %v2873, 1
    %v2875 = vadd.f32 %v2873, %v2874
    %v2876 = vsel %vm596, %v2826, 0.0
    %v2877 = vrot.slane %v2876, 4
    %v2878 = vadd.f32 %v2876, %v2877
    %v2879 = vrot.slane %v2878, 2
    %v2880 = vadd.f32 %v2878, %v2879
    %v2881 = vrot.slane %v2880, 1
    %v2882 = vadd.f32 %v2880, %v2881
    %2883 = vmatprep.subr.mxu0 0.0
    %2884 = vmatpush1.msra.mxu0 %v101
    %2885 = vmatprep.subr.mxu0 0.0
    %2886 = vmatpush1.msra.mxu0 %v102
    %2887 = vmatprep.subr.mxu0 0.0
    %2888 = vmatpush1.msra.mxu0 %v103
    %2889 = vmatprep.subr.mxu0 0.0
    %2890 = vmatpush1.msra.mxu0 %v104
    %2891 = vmatprep.subr.mxu0 0.0
    %2892 = vmatpush1.msra.mxu0 0.0
    %2893 = vmatprep.subr.mxu0 0.0
    %2894 = vmatpush1.msra.mxu0 0.0
    %2895 = vmatprep.subr.mxu0 0.0
    %2896 = vmatpush1.msra.mxu0 0.0
    %2897 = vmatprep.subr.mxu0 0.0
    %2898 = vmatpush1.msra.mxu0 0.0
    %2899 = vmatprep.subr.mxu0 0.0
    %2900 = vmatpush1.msra.mxu0 0.0
    %2901 = vmatprep.subr.mxu0 0.0
    %2902 = vmatpush1.msra.mxu0 0.0
    %2903 = vmatprep.subr.mxu0 0.0
    %2904 = vmatpush1.msra.mxu0 0.0
    %2905 = vmatprep.subr.mxu0 0.0
    %2906 = vmatpush1.msra.mxu0 0.0
    %2907 = vmatprep.subr.mxu0 0.0
    %2908 = vmatpush1.msra.mxu0 0.0
    %2909 = vmatprep.subr.mxu0 0.0
    %2910 = vmatpush1.msra.mxu0 0.0
    %2911 = vmatprep.subr.mxu0 0.0
    %2912 = vmatpush1.msra.mxu0 0.0
    %2913 = vmatprep.subr.mxu0 0.0
    %2914 = vmatpush1.msra.mxu0 0.0
    %2915 = vmatprep.subr.mxu0 0.0
    %2916 = vmatpush1.msra.mxu0 0.0
    %2917 = vmatprep.subr.mxu0 0.0
    %2918 = vmatpush1.msra.mxu0 0.0
    %2919 = vmatprep.subr.mxu0 0.0
    %2920 = vmatpush1.msra.mxu0 0.0
    %2921 = vmatprep.subr.mxu0 0.0
    %2922 = vmatpush1.msra.mxu0 0.0
    %2923 = vmatprep.subr.mxu0 0.0
    %2924 = vmatpush1.msra.mxu0 0.0
    %2925 = vmatprep.subr.mxu0 0.0
    %2926 = vmatpush1.msra.mxu0 0.0
    %2927 = vmatprep.subr.mxu0 0.0
    %2928 = vmatpush1.msra.mxu0 0.0
    %2929 = vmatprep.subr.mxu0 0.0
    %2930 = vmatpush1.msra.mxu0 0.0
    %2931 = vmatprep.subr.mxu0 0.0
    %2932 = vmatpush1.msra.mxu0 0.0
    %2933 = vmatprep.subr.mxu0 0.0
    %2934 = vmatpush1.msra.mxu0 0.0
    %2935 = vmatprep.subr.mxu0 0.0
    %2936 = vmatpush1.msra.mxu0 0.0
    %2937 = vmatprep.subr.mxu0 0.0
    %2938 = vmatpush1.msra.mxu0 0.0
    %2939 = vmatprep.subr.mxu0 0.0
    %2940 = vmatpush1.msra.mxu0 0.0
    %2941 = vmatprep.subr.mxu0 0.0
    %2942 = vmatpush1.msra.mxu0 0.0
    %2943 = vmatprep.subr.mxu0 0.0
    %2944 = vmatpush1.msra.mxu0 0.0
    %2945 = vmatprep.subr.mxu0 0.0
    %2946 = vmatpush1.msra.mxu0 0.0
    %2947 = vmatprep.mubr.f32.mxu0 0.0
    %2948 = vmatmul.mubr.f32.gmra.mrb[0].mxu0 %v2312
    %v2949 = vpop.f32.mrb[0].mxu0
    %v2950 = vadd.f32 0.0, %v2949
    %v2951 = vpop.f32.mrb[0].mxu0
    %2952 = vdwg.mxu0
    %v2961 = vsel %vm767, %v2840, %v2833
    %v2962 = vsel %vm769, %v2847, %v2961
    %v2963 = vsel %vm771, %v2854, %v2962
    %v2964 = vsel %vm773, %v2861, %v2963
    %v2965 = vsel %vm775, %v2868, %v2964
    %v2966 = vsel %vm777, %v2875, %v2965
    %v2967 = vsel %vm779, %v2882, %v2966
    %v2968 = vsel %vm193, %v2967, 0
    %2970 = vmatprep.subr.mxu0 0.0
    %2971 = vmatpush1.msra.mxu0 %v97
    %2972 = vmatprep.subr.mxu0 0.0
    %2973 = vmatpush1.msra.mxu0 %v98
    %2974 = vmatprep.subr.mxu0 0.0
    %2975 = vmatpush1.msra.mxu0 %v99
    %2976 = vmatprep.subr.mxu0 0.0
    %2977 = vmatpush1.msra.mxu0 %v100
    %2978 = vmatprep.subr.mxu0 0.0
    %2979 = vmatpush1.msra.mxu0 0.0
    %2980 = vmatprep.subr.mxu0 0.0
    %2981 = vmatpush1.msra.mxu0 0.0
    %2982 = vmatprep.subr.mxu0 0.0
    %2983 = vmatpush1.msra.mxu0 0.0
    %2984 = vmatprep.subr.mxu0 0.0
    %2985 = vmatpush1.msra.mxu0 0.0
    %2986 = vmatprep.subr.mxu0 0.0
    %2987 = vmatpush1.msra.mxu0 0.0
    %2988 = vmatprep.subr.mxu0 0.0
    %2989 = vmatpush1.msra.mxu0 0.0
    %2990 = vmatprep.subr.mxu0 0.0
    %2991 = vmatpush1.msra.mxu0 0.0
    %2992 = vmatprep.subr.mxu0 0.0
    %2993 = vmatpush1.msra.mxu0 0.0
    %2994 = vmatprep.subr.mxu0 0.0
    %2995 = vmatpush1.msra.mxu0 0.0
    %2996 = vmatprep.subr.mxu0 0.0
    %2997 = vmatpush1.msra.mxu0 0.0
    %2998 = vmatprep.subr.mxu0 0.0
    %2999 = vmatpush1.msra.mxu0 0.0
    %3000 = vmatprep.subr.mxu0 0.0
    %3001 = vmatpush1.msra.mxu0 0.0
    %3002 = vmatprep.subr.mxu0 0.0
    %3003 = vmatpush1.msra.mxu0 0.0
    %3004 = vmatprep.subr.mxu0 0.0
    %3005 = vmatpush1.msra.mxu0 0.0
    %3006 = vmatprep.subr.mxu0 0.0
    %3007 = vmatpush1.msra.mxu0 0.0
    %3008 = vmatprep.subr.mxu0 0.0
    %3009 = vmatpush1.msra.mxu0 0.0
    %3010 = vmatprep.subr.mxu0 0.0
    %3011 = vmatpush1.msra.mxu0 0.0
    %3012 = vmatprep.subr.mxu0 0.0
    %3013 = vmatpush1.msra.mxu0 0.0
    %3014 = vmatprep.subr.mxu0 0.0
    %3015 = vmatpush1.msra.mxu0 0.0
    %3016 = vmatprep.subr.mxu0 0.0
    %3017 = vmatpush1.msra.mxu0 0.0
    %3018 = vmatprep.subr.mxu0 0.0
    %3019 = vmatpush1.msra.mxu0 0.0
    %3020 = vmatprep.subr.mxu0 0.0
    %3021 = vmatpush1.msra.mxu0 0.0
    %3022 = vmatprep.subr.mxu0 0.0
    %3023 = vmatpush1.msra.mxu0 0.0
    %3024 = vmatprep.subr.mxu0 0.0
    %3025 = vmatpush1.msra.mxu0 0.0
    %3026 = vmatprep.subr.mxu0 0.0
    %3027 = vmatpush1.msra.mxu0 0.0
    %3028 = vmatprep.subr.mxu0 0.0
    %3029 = vmatpush1.msra.mxu0 0.0
    %3030 = vmatprep.subr.mxu0 0.0
    %3031 = vmatpush1.msra.mxu0 0.0
    %3032 = vmatprep.subr.mxu0 0.0
    %3033 = vmatpush1.msra.mxu0 0.0
    %3034 = vmatprep.mubr.f32.mxu0 0.0
    %3035 = vmatmul.mubr.f32.gmra.mrb[0].mxu0 %v2968
    %v3036 = vpop.f32.mrb[0].mxu0
    %v3037 = vadd.f32 %v2950, %v3036
    %v3038 = vpop.f32.mrb[0].mxu0
    %3039 = vdwg.mxu0
    %v3040 = vtanh.pop %v3037
    %s3041 = scalar_lea.vmem [#allocation8], 16
    %3042 = vst.msk [vmem:[%s3041] sm:$0xff] %vm193, %v3040
    // Predicated region
    $region54: #{tpu_custom_call.1} parent=1 // pred_check
      _
    $region55: #{tpu_custom_call.1} parent=1 // pred_check_branch
      %3044 = sbr.rel (0) target = $region57
    $region56: #{tpu_custom_call.1} parent=1 // pred_region
      %s3046 = ssub.s32 384, 384
      %3047 = vsyncadd [#allocation4], %s3046
      %s3048 = sshll.u32 [#allocation8], 4
      %s3049 = int_to_ptr.vmem [resolvable:$true] %s3048
      %3054 = dma.vmem_to_hbm [thread:$0]  %s3049, 384, %s10, [#allocation4], 128, 128, 8
    $region57: #{tpu_custom_call.1} parent=1 // pred_fallthru
      _
    // Predicated region
    $region58: #{tpu_custom_call.1} parent=1 // pred_check
      _
    $region59: #{tpu_custom_call.1} parent=1 // pred_check_branch
      %3056 = sbr.rel (0) target = $region61
    $region60: #{tpu_custom_call.1} parent=1 // pred_region
      %3057 = dma.done [#allocation4], 384
    $region61: #{tpu_custom_call.1} parent=1 // pred_fallthru
      _
    %3058 = vsyncpa [#allocation3], 1
    %3059 = vsyncpa [#allocation6], 1
    %3060 = vsyncpa [#allocation4], 1

// kernel: tpu_custom_call.1
$region0: #{tpu_custom_call.1}
  #allocation0 [shape = 'u32[]', space=smem, size = 0x4, offset = 0x4, fixed_abs, tag = 'smem constant byte address 0x4 - core index']
  #allocation1 [shape = 'u32[144,128]{1,0:T(1,128)}', space=vmem, size = 0x12000, scoped, tag = 'internal scratch']
  %s0 = inlined_call_operand.hbm [shape: f32[8,1,32], index: 0, kind: input, shape index: {}]
  %s1 = inlined_call_operand.hbm [shape: f32[8,1,32], index: 1, kind: input, shape index: {}]
  %s2 = inlined_call_operand.vmem [shape: f32[8,5,32], index: 2, kind: input, shape index: {}]
  %s3 = inlined_call_operand.vmem [shape: f32[8,1,5], index: 3, kind: input, shape index: {}]
  %s4 = inlined_call_operand.vmem [shape: f32[32,128], index: 4, kind: input, shape index: {}]
  %s5 = inlined_call_operand.vmem [shape: f32[32,128], index: 5, kind: input, shape index: {}]
  %s6 = inlined_call_operand.vmem [shape: f32[1,128], index: 6, kind: input, shape index: {}]
  %s7 = inlined_call_operand.vmem [shape: f32[32,32], index: 7, kind: input, shape index: {}]
  %s8 = inlined_call_operand.vmem [shape: f32[32,32], index: 8, kind: input, shape index: {}]
  %s9 = inlined_call_operand.hbm [shape: f32[32,32], index: 9, kind: input, shape index: {}]
  %s10 = inlined_call_operand.hbm [shape: f32[3,8,32], index: 10, kind: output, shape index: {}]
  %s11 = sld [smem:[#allocation0]]
  $region62: #{tpu_custom_call.1} parent=0
    _
  %s13 = ssub.s32 1, %s11
  %s14 = scalar_select 0, %s13, %s11
  $region1: #{tpu_custom_call.1} parent=0
    #allocation2 [shape = 'u8[4096]{0}', space=vmem, size = 0x1000, scoped, tag = 'input window, operand 0, single buffered']
    #allocation3 [shape = 's32[1]{0}', space=sflag, size = 0x4, scoped, tag = 'scoped memory for tpu_custom_call.1']
    #allocation4 [shape = 's32[1]{0}', space=sflag, size = 0x4, scoped, tag = 'scoped memory for tpu_custom_call.1']
    #allocation5 [shape = 'u8[4096]{0}', space=vmem, size = 0x1000, scoped, tag = 'input window, operand 1, single buffered']
    #allocation6 [shape = 's32[1]{0}', space=sflag, size = 0x4, scoped, tag = 'scoped memory for tpu_custom_call.1']
    #allocation7 [shape = 'u8[16384]{0}', space=vmem, size = 0x4000, scoped, tag = 'input window, operand 9, single buffered']
    #allocation8 [shape = 'u8[12288]{0}', space=vmem, size = 0x3000, scoped, tag = 'output window, operand 0, single buffered']
    %15 = vsyncpa [#allocation3], 0
    %16 = vsyncpa [#allocation6], 0
    %17 = vsyncpa [#allocation4], 0
    // Predicated region
    $region2: #{tpu_custom_call.1} parent=1 // pred_check
      _
    $region3: #{tpu_custom_call.1} parent=1 // pred_check_branch
      %19 = sbr.rel (0) target = $region5
    $region4: #{tpu_custom_call.1} parent=1 // pred_region
      %s21 = ssub.s32 128, 128
      %22 = vsyncadd [#allocation3], %s21
      %s23 = sshll.u32 [#allocation2], 4
      %s24 = int_to_ptr.vmem [resolvable:$true] %s23
      %29 = dma.hbm_to_vmem [thread:$0]  %s0, 128, %s24, [#allocation3], 16, 16, 1
    $region5: #{tpu_custom_call.1} parent=1 // pred_fallthru
      _
    // Predicated region
    $region6: #{tpu_custom_call.1} parent=1 // pred_check
      _
    $region7: #{tpu_custom_call.1} parent=1 // pred_check_branch
      %31 = sbr.rel (0) target = $region9
    $region8: #{tpu_custom_call.1} parent=1 // pred_region
      %s33 = ssub.s32 128, 128
      %34 = vsyncadd [#allocation6], %s33
      %s35 = sshll.u32 [#allocation5], 4
      %s36 = int_to_ptr.vmem [resolvable:$true] %s35
      %41 = dma.hbm_to_vmem [thread:$0]  %s1, 128, %s36, [#allocation6], 16, 16, 1
    $region9: #{tpu_custom_call.1} parent=1 // pred_fallthru
      _
    // Predicated region
    $region10: #{tpu_custom_call.1} parent=1 // pred_check
      _
    $region11: #{tpu_custom_call.1} parent=1 // pred_check_branch
      %43 = sbr.rel (0) target = $region13
    $region12: #{tpu_custom_call.1} parent=1 // pred_region
      _
    $region13: #{tpu_custom_call.1} parent=1 // pred_fallthru
      _
    // Predicated region
    $region14: #{tpu_custom_call.1} parent=1 // pred_check
      _
    $region15: #{tpu_custom_call.1} parent=1 // pred_check_branch
      %45 = sbr.rel (0) target = $region17
    $region16: #{tpu_custom_call.1} parent=1 // pred_region
      _
    $region17: #{tpu_custom_call.1} parent=1 // pred_fallthru
      _
    // Predicated region
    $region18: #{tpu_custom_call.1} parent=1 // pred_check
      _
    $region19: #{tpu_custom_call.1} parent=1 // pred_check_branch
      %47 = sbr.rel (0) target = $region21
    $region20: #{tpu_custom_call.1} parent=1 // pred_region
      _
    $region21: #{tpu_custom_call.1} parent=1 // pred_fallthru
      _
    // Predicated region
    $region22: #{tpu_custom_call.1} parent=1 // pred_check
      _
    $region23: #{tpu_custom_call.1} parent=1 // pred_check_branch
      %49 = sbr.rel (0) target = $region25
    $region24: #{tpu_custom_call.1} parent=1 // pred_region
      _
    $region25: #{tpu_custom_call.1} parent=1 // pred_fallthru
      _
    // Predicated region
    $region26: #{tpu_custom_call.1} parent=1 // pred_check
      _
    $region27: #{tpu_custom_call.1} parent=1 // pred_check_branch
      %51 = sbr.rel (0) target = $region29
    $region28: #{tpu_custom_call.1} parent=1 // pred_region
      _
    $region29: #{tpu_custom_call.1} parent=1 // pred_fallthru
      _
    // Predicated region
    $region30: #{tpu_custom_call.1} parent=1 // pred_check
      _
    $region31: #{tpu_custom_call.1} parent=1 // pred_check_branch
      %53 = sbr.rel (0) target = $region33
    $region32: #{tpu_custom_call.1} parent=1 // pred_region
      _
    $region33: #{tpu_custom_call.1} parent=1 // pred_fallthru
      _
    // Predicated region
    $region34: #{tpu_custom_call.1} parent=1 // pred_check
      _
    $region35: #{tpu_custom_call.1} parent=1 // pred_check_branch
      %55 = sbr.rel (0) target = $region37
    $region36: #{tpu_custom_call.1} parent=1 // pred_region
      _
    $region37: #{tpu_custom_call.1} parent=1 // pred_fallthru
      _
    // Predicated region
    $region38: #{tpu_custom_call.1} parent=1 // pred_check
      _
    $region39: #{tpu_custom_call.1} parent=1 // pred_check_branch
      %57 = sbr.rel (0) target = $region41
    $region40: #{tpu_custom_call.1} parent=1 // pred_region
      %s59 = ssub.s32 512, 512
      %60 = vsyncadd [#allocation6], %s59
      %s61 = sshll.u32 [#allocation7], 4
      %s62 = int_to_ptr.vmem [resolvable:$true] %s61
      %67 = dma.hbm_to_vmem [thread:$0]  %s9, 512, %s62, [#allocation6], 128, 128, 8
    $region41: #{tpu_custom_call.1} parent=1 // pred_fallthru
      _
    // Predicated region
    $region42: #{tpu_custom_call.1} parent=1 // pred_check
      _
    $region43: #{tpu_custom_call.1} parent=1 // pred_check_branch
      %69 = sbr.rel (0) target = $region45
    $region44: #{tpu_custom_call.1} parent=1 // pred_region
      %70 = dma.done [#allocation3], 128
    $region45: #{tpu_custom_call.1} parent=1 // pred_fallthru
      _
    // Predicated region
    $region46: #{tpu_custom_call.1} parent=1 // pred_check
      _
    $region47: #{tpu_custom_call.1} parent=1 // pred_check_branch
      %72 = sbr.rel (0) target = $region49
    $region48: #{tpu_custom_call.1} parent=1 // pred_region
      %73 = dma.done [#allocation6], 128
    $region49: #{tpu_custom_call.1} parent=1 // pred_fallthru
      _
    // Predicated region
    $region50: #{tpu_custom_call.1} parent=1 // pred_check
      _
    $region51: #{tpu_custom_call.1} parent=1 // pred_check_branch
      %75 = sbr.rel (0) target = $region53
    $region52: #{tpu_custom_call.1} parent=1 // pred_region
      %76 = dma.done [#allocation6], 512
    $region53: #{tpu_custom_call.1} parent=1 // pred_fallthru
      _
    %v77 = vld [vmem:[%s2] sm:$0x1f]
    %v78 = vld [vmem:[%s2 + $0x8] sm:$0x1f]
    %v79 = vld [vmem:[%s2 + $0x10] sm:$0x1f]
    %v80 = vld [vmem:[%s2 + $0x18] sm:$0x1f]
    %v81 = vld [vmem:[%s2 + $0x20] sm:$0x1f]
    %v82 = vld [vmem:[%s2 + $0x28] sm:$0x1f]
    %v83 = vld [vmem:[%s2 + $0x30] sm:$0x1f]
    %v84 = vld [vmem:[%s2 + $0x38] sm:$0x1f]
    %v85 = vld [vmem:[%s4] sm:$0xff]
    %v86 = vld [vmem:[%s4 + $0x8] sm:$0xff]
    %v87 = vld [vmem:[%s4 + $0x10] sm:$0xff]
    %v88 = vld [vmem:[%s4 + $0x18] sm:$0xff]
    %v89 = vld [vmem:[%s5] sm:$0xff]
    %v90 = vld [vmem:[%s5 + $0x8] sm:$0xff]
    %v91 = vld [vmem:[%s5 + $0x10] sm:$0xff]
    %v92 = vld [vmem:[%s5 + $0x18] sm:$0xff]
    %v93 = vld [vmem:[%s7] sm:$0xff]
    %v94 = vld [vmem:[%s7 + $0x8] sm:$0xff]
    %v95 = vld [vmem:[%s7 + $0x10] sm:$0xff]
    %v96 = vld [vmem:[%s7 + $0x18] sm:$0xff]
    %v97 = vld [vmem:[%s8] sm:$0xff]
    %v98 = vld [vmem:[%s8 + $0x8] sm:$0xff]
    %v99 = vld [vmem:[%s8 + $0x10] sm:$0xff]
    %v100 = vld [vmem:[%s8 + $0x18] sm:$0xff]
    %v101 = vld [vmem:[#allocation7] sm:$0xff]
    %v102 = vld [vmem:[#allocation7 + $0x8] sm:$0xff]
    %v103 = vld [vmem:[#allocation7 + $0x10] sm:$0xff]
    %v104 = vld [vmem:[#allocation7 + $0x18] sm:$0xff]
    %v105 = vld [vmem:[%s6] sm:$0x1]
    %v107 = vlaneseq
    %v108 = vshrl.u32 %v107, 7
    %v109 = vsub.s32 0, %v108
    %v110 = vrot.slane %v105, %v109
    %v112 = vld [vmem:[%s3] sm:$0x1]
    %v113 = vld [vmem:[%s3 + $0x1] sm:$0x1]
    %v114 = vld [vmem:[%s3 + $0x2] sm:$0x1]
    %v115 = vld [vmem:[%s3 + $0x3] sm:$0x1]
    %v116 = vld [vmem:[%s3 + $0x4] sm:$0x1]
    %v117 = vld [vmem:[%s3 + $0x5] sm:$0x1]
    %v118 = vld [vmem:[%s3 + $0x6] sm:$0x1]
    %v119 = vld [vmem:[%s3 + $0x7] sm:$0x1]
    %v120 = vld [vmem:[#allocation5] sm:$0x1]
    %v121 = vld [vmem:[#allocation5 + $0x1] sm:$0x1]
    %v122 = vld [vmem:[#allocation5 + $0x2] sm:$0x1]
    %v123 = vld [vmem:[#allocation5 + $0x3] sm:$0x1]
    %v124 = vld [vmem:[#allocation5 + $0x4] sm:$0x1]
    %v125 = vld [vmem:[#allocation5 + $0x5] sm:$0x1]
    %v126 = vld [vmem:[#allocation5 + $0x6] sm:$0x1]
    %v127 = vld [vmem:[#allocation5 + $0x7] sm:$0x1]
    %v128 = vld [vmem:[#allocation2] sm:$0x1]
    %v129 = vld [vmem:[#allocation2 + $0x1] sm:$0x1]
    %v130 = vld [vmem:[#allocation2 + $0x2] sm:$0x1]
    %v131 = vld [vmem:[#allocation2 + $0x3] sm:$0x1]
    %v132 = vld [vmem:[#allocation2 + $0x4] sm:$0x1]
    %v133 = vld [vmem:[#allocation2 + $0x5] sm:$0x1]
    %v134 = vld [vmem:[#allocation2 + $0x6] sm:$0x1]
    %v135 = vld [vmem:[#allocation2 + $0x7] sm:$0x1]
    %v144 = vcombine.low %v120, %v121
    %v145 = vcombine.low %v122, %v123
    %v146 = vcombine.low %v124, %v125
    %v147 = vcombine.low %v126, %v127
    %v149 = vunpack.c.l.s4 1966171168
    %v150 = vunpack.c.0.s8 %v149
    %v151 = vlaneseq
    %v152 = vshrl.u32 %v151, 7
    %v153 = vsub.s32 %v150, %v152
    %v154 = vrot.slane %v144, %v153
    %v156 = vunpack.c.l.s4 1966171168
    %v157 = vunpack.c.0.s8 %v156
    %v158 = vlaneseq
    %v159 = vshrl.u32 %v158, 7
    %v160 = vsub.s32 %v157, %v159
    %v161 = vrot.slane %v145, %v160
    %v163 = vunpack.c.l.s4 1966171168
    %v164 = vunpack.c.0.s8 %v163
    %v165 = vlaneseq
    %v166 = vshrl.u32 %v165, 7
    %v167 = vsub.s32 %v164, %v166
    %v168 = vrot.slane %v146, %v167
    %v170 = vunpack.c.l.s4 1966171168
    %v171 = vunpack.c.0.s8 %v170
    %v172 = vlaneseq
    %v173 = vshrl.u32 %v172, 7
    %v174 = vsub.s32 %v171, %v173
    %v175 = vrot.slane %v147, %v174
    %v176 = vcombine.low %v154, %v161
    %v177 = vcombine.low %v168, %v175
    %v179 = vunpack.c.l.s4 1966171168
    %v180 = vunpack.c.0.s8 %v179
    %v181 = vlaneseq
    %v182 = vshrl.u32 %v181, 7
    %v183 = vsub.s32 %v180, %v182
    %v184 = vrot.slane %v176, %v183
    %v186 = vunpack.c.l.s4 1966171168
    %v187 = vunpack.c.0.s8 %v186
    %v188 = vlaneseq
    %v189 = vshrl.u32 %v188, 7
    %v190 = vsub.s32 %v187, %v189
    %v191 = vrot.slane %v177, %v190
    %v192 = vcombine.low %v184, %v191
    %vm193 = vcmask 261120
    %v194 = vsel %vm193, %v192, 0
    %196 = vmatprep.subr.mxu0 0.0
    %197 = vmatpush1.msra.mxu0 %v89
    %198 = vmatprep.subr.mxu0 0.0
    %199 = vmatpush1.msra.mxu0 %v90
    %200 = vmatprep.subr.mxu0 0.0
    %201 = vmatpush1.msra.mxu0 %v91
    %202 = vmatprep.subr.mxu0 0.0
    %203 = vmatpush1.msra.mxu0 %v92
    %204 = vmatprep.subr.mxu0 0.0
    %205 = vmatpush1.msra.mxu0 0.0
    %206 = vmatprep.subr.mxu0 0.0
    %207 = vmatpush1.msra.mxu0 0.0
    %208 = vmatprep.subr.mxu0 0.0
    %209 = vmatpush1.msra.mxu0 0.0
    %210 = vmatprep.subr.mxu0 0.0
    %211 = vmatpush1.msra.mxu0 0.0
    %212 = vmatprep.subr.mxu0 0.0
    %213 = vmatpush1.msra.mxu0 0.0
    %214 = vmatprep.subr.mxu0 0.0
    %215 = vmatpush1.msra.mxu0 0.0
    %216 = vmatprep.subr.mxu0 0.0
    %217 = vmatpush1.msra.mxu0 0.0
    %218 = vmatprep.subr.mxu0 0.0
    %219 = vmatpush1.msra.mxu0 0.0
    %220 = vmatprep.subr.mxu0 0.0
    %221 = vmatpush1.msra.mxu0 0.0
    %222 = vmatprep.subr.mxu0 0.0
    %223 = vmatpush1.msra.mxu0 0.0
    %224 = vmatprep.subr.mxu0 0.0
    %225 = vmatpush1.msra.mxu0 0.0
    %226 = vmatprep.subr.mxu0 0.0
    %227 = vmatpush1.msra.mxu0 0.0
    %228 = vmatprep.subr.mxu0 0.0
    %229 = vmatpush1.msra.mxu0 0.0
    %230 = vmatprep.subr.mxu0 0.0
    %231 = vmatpush1.msra.mxu0 0.0
    %232 = vmatprep.subr.mxu0 0.0
    %233 = vmatpush1.msra.mxu0 0.0
    %234 = vmatprep.subr.mxu0 0.0
    %235 = vmatpush1.msra.mxu0 0.0
    %236 = vmatprep.subr.mxu0 0.0
    %237 = vmatpush1.msra.mxu0 0.0
    %238 = vmatprep.subr.mxu0 0.0
    %239 = vmatpush1.msra.mxu0 0.0
    %240 = vmatprep.subr.mxu0 0.0
    %241 = vmatpush1.msra.mxu0 0.0
    %242 = vmatprep.subr.mxu0 0.0
    %243 = vmatpush1.msra.mxu0 0.0
    %244 = vmatprep.subr.mxu0 0.0
    %245 = vmatpush1.msra.mxu0 0.0
    %246 = vmatprep.subr.mxu0 0.0
    %247 = vmatpush1.msra.mxu0 0.0
    %248 = vmatprep.subr.mxu0 0.0
    %249 = vmatpush1.msra.mxu0 0.0
    %250 = vmatprep.subr.mxu0 0.0
    %251 = vmatpush1.msra.mxu0 0.0
    %252 = vmatprep.subr.mxu0 0.0
    %253 = vmatpush1.msra.mxu0 0.0
    %254 = vmatprep.subr.mxu0 0.0
    %255 = vmatpush1.msra.mxu0 0.0
    %256 = vmatprep.subr.mxu0 0.0
    %257 = vmatpush1.msra.mxu0 0.0
    %258 = vmatprep.subr.mxu0 0.0
    %259 = vmatpush1.msra.mxu0 0.0
    %260 = vmatprep.mubr.f32.mxu0 0.0
    %261 = vmatmul.mubr.f32.gmra.mrb[0].mxu0 %v194
    %v262 = vpop.f32.mrb[0].mxu0
    %v263 = vadd.f32 0.0, %v262
    %v264 = vpop.f32.mrb[0].mxu0
    %265 = vdwg.mxu0
    %v274 = vcombine.low %v128, %v129
    %v275 = vcombine.low %v130, %v131
    %v276 = vcombine.low %v132, %v133
    %v277 = vcombine.low %v134, %v135
    %v279 = vunpack.c.l.s4 1966171168
    %v280 = vunpack.c.0.s8 %v279
    %v281 = vlaneseq
    %v282 = vshrl.u32 %v281, 7
    %v283 = vsub.s32 %v280, %v282
    %v284 = vrot.slane %v274, %v283
    %v286 = vunpack.c.l.s4 1966171168
    %v287 = vunpack.c.0.s8 %v286
    %v288 = vlaneseq
    %v289 = vshrl.u32 %v288, 7
    %v290 = vsub.s32 %v287, %v289
    %v291 = vrot.slane %v275, %v290
    %v293 = vunpack.c.l.s4 1966171168
    %v294 = vunpack.c.0.s8 %v293
    %v295 = vlaneseq
    %v296 = vshrl.u32 %v295, 7
    %v297 = vsub.s32 %v294, %v296
    %v298 = vrot.slane %v276, %v297
    %v300 = vunpack.c.l.s4 1966171168
    %v301 = vunpack.c.0.s8 %v300
    %v302 = vlaneseq
    %v303 = vshrl.u32 %v302, 7
    %v304 = vsub.s32 %v301, %v303
    %v305 = vrot.slane %v277, %v304
    %v306 = vcombine.low %v284, %v291
    %v307 = vcombine.low %v298, %v305
    %v309 = vunpack.c.l.s4 1966171168
    %v310 = vunpack.c.0.s8 %v309
    %v311 = vlaneseq
    %v312 = vshrl.u32 %v311, 7
    %v313 = vsub.s32 %v310, %v312
    %v314 = vrot.slane %v306, %v313
    %v316 = vunpack.c.l.s4 1966171168
    %v317 = vunpack.c.0.s8 %v316
    %v318 = vlaneseq
    %v319 = vshrl.u32 %v318, 7
    %v320 = vsub.s32 %v317, %v319
    %v321 = vrot.slane %v307, %v320
    %v322 = vcombine.low %v314, %v321
    %v323 = vsel %vm193, %v322, 0
    %325 = vmatprep.subr.mxu0 0.0
    %326 = vmatpush1.msra.mxu0 %v85
    %327 = vmatprep.subr.mxu0 0.0
    %328 = vmatpush1.msra.mxu0 %v86
    %329 = vmatprep.subr.mxu0 0.0
    %330 = vmatpush1.msra.mxu0 %v87
    %331 = vmatprep.subr.mxu0 0.0
    %332 = vmatpush1.msra.mxu0 %v88
    %333 = vmatprep.subr.mxu0 0.0
    %334 = vmatpush1.msra.mxu0 0.0
    %335 = vmatprep.subr.mxu0 0.0
    %336 = vmatpush1.msra.mxu0 0.0
    %337 = vmatprep.subr.mxu0 0.0
    %338 = vmatpush1.msra.mxu0 0.0
    %339 = vmatprep.subr.mxu0 0.0
    %340 = vmatpush1.msra.mxu0 0.0
    %341 = vmatprep.subr.mxu0 0.0
    %342 = vmatpush1.msra.mxu0 0.0
    %343 = vmatprep.subr.mxu0 0.0
    %344 = vmatpush1.msra.mxu0 0.0
    %345 = vmatprep.subr.mxu0 0.0
    %346 = vmatpush1.msra.mxu0 0.0
    %347 = vmatprep.subr.mxu0 0.0
    %348 = vmatpush1.msra.mxu0 0.0
    %349 = vmatprep.subr.mxu0 0.0
    %350 = vmatpush1.msra.mxu0 0.0
    %351 = vmatprep.subr.mxu0 0.0
    %352 = vmatpush1.msra.mxu0 0.0
    %353 = vmatprep.subr.mxu0 0.0
    %354 = vmatpush1.msra.mxu0 0.0
    %355 = vmatprep.subr.mxu0 0.0
    %356 = vmatpush1.msra.mxu0 0.0
    %357 = vmatprep.subr.mxu0 0.0
    %358 = vmatpush1.msra.mxu0 0.0
    %359 = vmatprep.subr.mxu0 0.0
    %360 = vmatpush1.msra.mxu0 0.0
    %361 = vmatprep.subr.mxu0 0.0
    %362 = vmatpush1.msra.mxu0 0.0
    %363 = vmatprep.subr.mxu0 0.0
    %364 = vmatpush1.msra.mxu0 0.0
    %365 = vmatprep.subr.mxu0 0.0
    %366 = vmatpush1.msra.mxu0 0.0
    %367 = vmatprep.subr.mxu0 0.0
    %368 = vmatpush1.msra.mxu0 0.0
    %369 = vmatprep.subr.mxu0 0.0
    %370 = vmatpush1.msra.mxu0 0.0
    %371 = vmatprep.subr.mxu0 0.0
    %372 = vmatpush1.msra.mxu0 0.0
    %373 = vmatprep.subr.mxu0 0.0
    %374 = vmatpush1.msra.mxu0 0.0
    %375 = vmatprep.subr.mxu0 0.0
    %376 = vmatpush1.msra.mxu0 0.0
    %377 = vmatprep.subr.mxu0 0.0
    %378 = vmatpush1.msra.mxu0 0.0
    %379 = vmatprep.subr.mxu0 0.0
    %380 = vmatpush1.msra.mxu0 0.0
    %381 = vmatprep.subr.mxu0 0.0
    %382 = vmatpush1.msra.mxu0 0.0
    %383 = vmatprep.subr.mxu0 0.0
    %384 = vmatpush1.msra.mxu0 0.0
    %385 = vmatprep.subr.mxu0 0.0
    %386 = vmatpush1.msra.mxu0 0.0
    %387 = vmatprep.subr.mxu0 0.0
    %388 = vmatpush1.msra.mxu0 0.0
    %389 = vmatprep.mubr.f32.mxu0 0.0
    %390 = vmatmul.mubr.f32.gmra.mrb[0].mxu0 %v323
    %v391 = vpop.f32.mrb[0].mxu0
    %v392 = vadd.f32 %v263, %v391
    %v393 = vpop.f32.mrb[0].mxu0
    %394 = vdwg.mxu0
    %v395 = vadd.f32 %v392, %v110
    %v396 = vxor.u32 %v395, 2147483648
    %v397 = vmul.f32 %v396, 1.442695
    %v398 = vpow.pop %v397
    %v399 = vadd.f32 %v398, 1.0
    %v400 = vrcp.pop %v399
    %v401 = vmul.f32 1.0, %v400
    %v402 = vtanh.pop %v395
    %403 = vrot.lane.b32.xlu0 %v192, 32
    %v404 = vpop.permute.xlu0 %403
    %v406 = vmul.f32 %v401, %v404
    %408 = vrot.lane.b32.xlu0 %v402, 64
    %v409 = vpop.permute.xlu0 %408
    %v411 = vmul.f32 %v401, %v409
    %413 = vrot.lane.b32.xlu0 %v411, 32
    %v414 = vpop.permute.xlu0 %413
    %v416 = vadd.f32 %v406, %v414
    %v417 = vtanh.pop %v416
    %419 = vrot.lane.b32.xlu0 %v417, 64
    %v420 = vpop.permute.xlu0 %419
    %v422 = vmul.f32 %v401, %v420
    %424 = vrot.lane.b32.xlu0 %v422, 32
    %v425 = vpop.permute.xlu0 %424
    %v426 = vsel %vm193, %v425, 0
    %428 = vmatprep.subr.mxu0 0.0
    %429 = vmatpush1.msra.mxu0 %v93
    %430 = vmatprep.subr.mxu0 0.0
    %431 = vmatpush1.msra.mxu0 %v94
    %432 = vmatprep.subr.mxu0 0.0
    %433 = vmatpush1.msra.mxu0 %v95
    %434 = vmatprep.subr.mxu0 0.0
    %435 = vmatpush1.msra.mxu0 %v96
    %436 = vmatprep.subr.mxu0 0.0
    %437 = vmatpush1.msra.mxu0 0.0
    %438 = vmatprep.subr.mxu0 0.0
    %439 = vmatpush1.msra.mxu0 0.0
    %440 = vmatprep.subr.mxu0 0.0
    %441 = vmatpush1.msra.mxu0 0.0
    %442 = vmatprep.subr.mxu0 0.0
    %443 = vmatpush1.msra.mxu0 0.0
    %444 = vmatprep.subr.mxu0 0.0
    %445 = vmatpush1.msra.mxu0 0.0
    %446 = vmatprep.subr.mxu0 0.0
    %447 = vmatpush1.msra.mxu0 0.0
    %448 = vmatprep.subr.mxu0 0.0
    %449 = vmatpush1.msra.mxu0 0.0
    %450 = vmatprep.subr.mxu0 0.0
    %451 = vmatpush1.msra.mxu0 0.0
    %452 = vmatprep.subr.mxu0 0.0
    %453 = vmatpush1.msra.mxu0 0.0
    %454 = vmatprep.subr.mxu0 0.0
    %455 = vmatpush1.msra.mxu0 0.0
    %456 = vmatprep.subr.mxu0 0.0
    %457 = vmatpush1.msra.mxu0 0.0
    %458 = vmatprep.subr.mxu0 0.0
    %459 = vmatpush1.msra.mxu0 0.0
    %460 = vmatprep.subr.mxu0 0.0
    %461 = vmatpush1.msra.mxu0 0.0
    %462 = vmatprep.subr.mxu0 0.0
    %463 = vmatpush1.msra.mxu0 0.0
    %464 = vmatprep.subr.mxu0 0.0
    %465 = vmatpush1.msra.mxu0 0.0
    %466 = vmatprep.subr.mxu0 0.0
    %467 = vmatpush1.msra.mxu0 0.0
    %468 = vmatprep.subr.mxu0 0.0
    %469 = vmatpush1.msra.mxu0 0.0
    %470 = vmatprep.subr.mxu0 0.0
    %471 = vmatpush1.msra.mxu0 0.0
    %472 = vmatprep.subr.mxu0 0.0
    %473 = vmatpush1.msra.mxu0 0.0
    %474 = vmatprep.subr.mxu0 0.0
    %475 = vmatpush1.msra.mxu0 0.0
    %476 = vmatprep.subr.mxu0 0.0
    %477 = vmatpush1.msra.mxu0 0.0
    %478 = vmatprep.subr.mxu0 0.0
    %479 = vmatpush1.msra.mxu0 0.0
    %480 = vmatprep.subr.mxu0 0.0
    %481 = vmatpush1.msra.mxu0 0.0
    %482 = vmatprep.subr.mxu0 0.0
    %483 = vmatpush1.msra.mxu0 0.0
    %484 = vmatprep.subr.mxu0 0.0
    %485 = vmatpush1.msra.mxu0 0.0
    %486 = vmatprep.subr.mxu0 0.0
    %487 = vmatpush1.msra.mxu0 0.0
    %488 = vmatprep.subr.mxu0 0.0
    %489 = vmatpush1.msra.mxu0 0.0
    %490 = vmatprep.subr.mxu0 0.0
    %491 = vmatpush1.msra.mxu0 0.0
    %492 = vmatprep.mubr.f32.mxu0 0.0
    %493 = vmatmul.mubr.f32.gmra.mrb[0].mxu0 %v426
    %v494 = vpop.f32.mrb[0].mxu0
    %v495 = vadd.f32 0.0, %v494
    %v496 = vpop.f32.mrb[0].mxu0
    %497 = vdwg.mxu0
    %v499 = vcombine.high %v495, %v495
    %v501 = vunpack.c.l.s4 1966171168
    %v502 = vunpack.c.0.s8 %v501
    %v503 = vlaneseq
    %v504 = vshrl.u32 %v503, 7
    %v505 = vsub.s32 %v502, %v504
    %v506 = vrot.slane %v495, %v505
    %v508 = vunpack.c.l.s4 1966171168
    %v509 = vunpack.c.0.s8 %v508
    %v510 = vlaneseq
    %v511 = vshrl.u32 %v510, 7
    %v512 = vsub.s32 %v509, %v511
    %v513 = vrot.slane %v499, %v512
    %v514 = vcombine.high %v506, %v506
    %v515 = vcombine.high %v513, %v513
    %v517 = vunpack.c.l.s4 1966171168
    %v518 = vunpack.c.0.s8 %v517
    %v519 = vlaneseq
    %v520 = vshrl.u32 %v519, 7
    %v521 = vsub.s32 %v518, %v520
    %v522 = vrot.slane %v506, %v521
    %v524 = vunpack.c.l.s4 1966171168
    %v525 = vunpack.c.0.s8 %v524
    %v526 = vlaneseq
    %v527 = vshrl.u32 %v526, 7
    %v528 = vsub.s32 %v525, %v527
    %v529 = vrot.slane %v513, %v528
    %v531 = vunpack.c.l.s4 1966171168
    %v532 = vunpack.c.0.s8 %v531
    %v533 = vlaneseq
    %v534 = vshrl.u32 %v533, 7
    %v535 = vsub.s32 %v532, %v534
    %v536 = vrot.slane %v514, %v535
    %v538 = vunpack.c.l.s4 1966171168
    %v539 = vunpack.c.0.s8 %v538
    %v540 = vlaneseq
    %v541 = vshrl.u32 %v540, 7
    %v542 = vsub.s32 %v539, %v541
    %v543 = vrot.slane %v515, %v542
    %v544 = vcombine.high %v522, %v522
    %v545 = vcombine.high %v529, %v529
    %v546 = vcombine.high %v536, %v536
    %v547 = vcombine.high %v543, %v543
    %v548 = vlaneseq
    %v549 = vshrl.u32 %v548, 7
    %v550 = vsub.s32 0, %v549
    %v551 = vrot.slane %v522, %v550
    %v552 = vlaneseq
    %v553 = vshrl.u32 %v552, 7
    %v554 = vsub.s32 0, %v553
    %v555 = vrot.slane %v536, %v554
    %v556 = vlaneseq
    %v557 = vshrl.u32 %v556, 7
    %v558 = vsub.s32 0, %v557
    %v559 = vrot.slane %v544, %v558
    %v560 = vlaneseq
    %v561 = vshrl.u32 %v560, 7
    %v562 = vsub.s32 0, %v561
    %v563 = vrot.slane %v546, %v562
    %v564 = vlaneseq
    %v565 = vshrl.u32 %v564, 7
    %v566 = vsub.s32 0, %v565
    %v567 = vrot.slane %v529, %v566
    %v568 = vlaneseq
    %v569 = vshrl.u32 %v568, 7
    %v570 = vsub.s32 0, %v569
    %v571 = vrot.slane %v543, %v570
    %v572 = vlaneseq
    %v573 = vshrl.u32 %v572, 7
    %v574 = vsub.s32 0, %v573
    %v575 = vrot.slane %v545, %v574
    %v576 = vlaneseq
    %v577 = vshrl.u32 %v576, 7
    %v578 = vsub.s32 0, %v577
    %v579 = vrot.slane %v547, %v578
    %v588 = vmul.f32 %v551, %v77
    %v589 = vmul.f32 %v555, %v78
    %v590 = vmul.f32 %v559, %v79
    %v591 = vmul.f32 %v563, %v80
    %v592 = vmul.f32 %v567, %v81
    %v593 = vmul.f32 %v571, %v82
    %v594 = vmul.f32 %v575, %v83
    %v595 = vmul.f32 %v579, %v84
    %vm596 = vcmask 258048
    %v597 = vsel %vm596, %v588, 0.0
    %598 = vadd.xlane.f32.xlu0 %v597
    %v599 = vpop.xlane.xlu0 %598
    %v600 = vsel %vm596, %v589, 0.0
    %601 = vadd.xlane.f32.xlu0 %v600
    %v602 = vpop.xlane.xlu0 %601
    %v603 = vsel %vm596, %v590, 0.0
    %604 = vadd.xlane.f32.xlu0 %v603
    %v605 = vpop.xlane.xlu0 %604
    %v606 = vsel %vm596, %v591, 0.0
    %607 = vadd.xlane.f32.xlu0 %v606
    %v608 = vpop.xlane.xlu0 %607
    %v609 = vsel %vm596, %v592, 0.0
    %610 = vadd.xlane.f32.xlu0 %v609
    %v611 = vpop.xlane.xlu0 %610
    %v612 = vsel %vm596, %v593, 0.0
    %613 = vadd.xlane.f32.xlu0 %v612
    %v614 = vpop.xlane.xlu0 %613
    %v615 = vsel %vm596, %v594, 0.0
    %616 = vadd.xlane.f32.xlu0 %v615
    %v617 = vpop.xlane.xlu0 %616
    %v618 = vsel %vm596, %v595, 0.0
    %619 = vadd.xlane.f32.xlu0 %v618
    %v620 = vpop.xlane.xlu0 %619
    %v629 = vlaneseq
    %v630 = vshrl.u32 %v629, 7
    %v631 = vsub.s32 0, %v630
    %v632 = vrot.slane %v112, %v631
    %v633 = vlaneseq
    %v634 = vshrl.u32 %v633, 7
    %v635 = vsub.s32 0, %v634
    %v636 = vrot.slane %v113, %v635
    %v637 = vlaneseq
    %v638 = vshrl.u32 %v637, 7
    %v639 = vsub.s32 0, %v638
    %v640 = vrot.slane %v114, %v639
    %v641 = vlaneseq
    %v642 = vshrl.u32 %v641, 7
    %v643 = vsub.s32 0, %v642
    %v644 = vrot.slane %v115, %v643
    %v645 = vlaneseq
    %v646 = vshrl.u32 %v645, 7
    %v647 = vsub.s32 0, %v646
    %v648 = vrot.slane %v116, %v647
    %v649 = vlaneseq
    %v650 = vshrl.u32 %v649, 7
    %v651 = vsub.s32 0, %v650
    %v652 = vrot.slane %v117, %v651
    %v653 = vlaneseq
    %v654 = vshrl.u32 %v653, 7
    %v655 = vsub.s32 0, %v654
    %v656 = vrot.slane %v118, %v655
    %v657 = vlaneseq
    %v658 = vshrl.u32 %v657, 7
    %v659 = vsub.s32 0, %v658
    %v660 = vrot.slane %v119, %v659
    %662 = vbcast.lane.b32.xlu0 %v632, 256
    %v663 = vpop.permute.xlu0 %662
    %665 = vbcast.lane.b32.xlu0 %v636, 256
    %v666 = vpop.permute.xlu0 %665
    %668 = vbcast.lane.b32.xlu0 %v640, 256
    %v669 = vpop.permute.xlu0 %668
    %671 = vbcast.lane.b32.xlu0 %v644, 256
    %v672 = vpop.permute.xlu0 %671
    %674 = vbcast.lane.b32.xlu0 %v648, 256
    %v675 = vpop.permute.xlu0 %674
    %677 = vbcast.lane.b32.xlu0 %v652, 256
    %v678 = vpop.permute.xlu0 %677
    %680 = vbcast.lane.b32.xlu0 %v656, 256
    %v681 = vpop.permute.xlu0 %680
    %683 = vbcast.lane.b32.xlu0 %v660, 256
    %v684 = vpop.permute.xlu0 %683
    %v693 = vadd.f32 %v599, %v663
    %v694 = vadd.f32 %v602, %v666
    %v695 = vadd.f32 %v605, %v669
    %v696 = vadd.f32 %v608, %v672
    %v697 = vadd.f32 %v611, %v675
    %v698 = vadd.f32 %v614, %v678
    %v699 = vadd.f32 %v617, %v681
    %v700 = vadd.f32 %v620, %v684
    %709 = vset.pattern.permute.xlu0 0
    %710 = vperm.xlu0 %709, %v693
    %v711 = vpop.permute.xlu0 %710
    %712 = vset.pattern.permute.xlu0 0
    %713 = vperm.xlu0 %712, %v694
    %v714 = vpop.permute.xlu0 %713
    %715 = vset.pattern.permute.xlu0 0
    %716 = vperm.xlu0 %715, %v695
    %v717 = vpop.permute.xlu0 %716
    %718 = vset.pattern.permute.xlu0 0
    %719 = vperm.xlu0 %718, %v696
    %v720 = vpop.permute.xlu0 %719
    %721 = vset.pattern.permute.xlu0 0
    %722 = vperm.xlu0 %721, %v697
    %v723 = vpop.permute.xlu0 %722
    %724 = vset.pattern.permute.xlu0 0
    %725 = vperm.xlu0 %724, %v698
    %v726 = vpop.permute.xlu0 %725
    %727 = vset.pattern.permute.xlu0 0
    %728 = vperm.xlu0 %727, %v699
    %v729 = vpop.permute.xlu0 %728
    %730 = vset.pattern.permute.xlu0 0
    %731 = vperm.xlu0 %730, %v700
    %v732 = vpop.permute.xlu0 %731
    %v733 = vlaneseq
    %v734 = vand.u32 %v733, 127
    %v735 = vlaneseq
    %v736 = vshrl.u32 %v735, 7
    %v737 = vsub.s32 %v734, %v736
    %v738 = vrot.slane %v711, %v737
    %v739 = vlaneseq
    %v740 = vshrl.u32 %v739, 7
    %v741 = vsub.s32 %v734, %v740
    %v742 = vrot.slane %v714, %v741
    %v743 = vlaneseq
    %v744 = vshrl.u32 %v743, 7
    %v745 = vsub.s32 %v734, %v744
    %v746 = vrot.slane %v717, %v745
    %v747 = vlaneseq
    %v748 = vshrl.u32 %v747, 7
    %v749 = vsub.s32 %v734, %v748
    %v750 = vrot.slane %v720, %v749
    %v751 = vlaneseq
    %v752 = vshrl.u32 %v751, 7
    %v753 = vsub.s32 %v734, %v752
    %v754 = vrot.slane %v723, %v753
    %v755 = vlaneseq
    %v756 = vshrl.u32 %v755, 7
    %v757 = vsub.s32 %v734, %v756
    %v758 = vrot.slane %v726, %v757
    %v759 = vlaneseq
    %v760 = vshrl.u32 %v759, 7
    %v761 = vsub.s32 %v734, %v760
    %v762 = vrot.slane %v729, %v761
    %v763 = vlaneseq
    %v764 = vshrl.u32 %v763, 7
    %v765 = vsub.s32 %v734, %v764
    %v766 = vrot.slane %v732, %v765
    %vm767 = vcmask 1041409
    %v768 = vsel %vm767, %v742, %v738
    %vm769 = vcmask 1042434
    %v770 = vsel %vm769, %v746, %v768
    %vm771 = vcmask 1043459
    %v772 = vsel %vm771, %v750, %v770
    %vm773 = vcmask 1044484
    %v774 = vsel %vm773, %v754, %v772
    %vm775 = vcmask 1045509
    %v776 = vsel %vm775, %v758, %v774
    %vm777 = vcmask 1046534
    %v778 = vsel %vm777, %v762, %v776
    %vm779 = vcmask 1047559
    %v780 = vsel %vm779, %v766, %v778
    %vm782 = vcmask 39936
    %v783 = vsel %vm782, %v780, -inf
    %784 = vmax.xlane.f32.xlu0 %v783
    %v785 = vpop.xlane.xlu0 %784
    %v787 = vlaneseq
    %v788 = vshrl.u32 %v787, 7
    %v789 = vsub.s32 0, %v788
    %v790 = vrot.slane %v785, %v789
    %v791 = vlaneseq
    %v792 = vshrl.u32 %v791, 7
    %v793 = vsub.s32 1, %v792
    %v794 = vrot.slane %v785, %v793
    %v795 = vlaneseq
    %v796 = vshrl.u32 %v795, 7
    %v797 = vsub.s32 2, %v796
    %v798 = vrot.slane %v785, %v797
    %v799 = vlaneseq
    %v800 = vshrl.u32 %v799, 7
    %v801 = vsub.s32 3, %v800
    %v802 = vrot.slane %v785, %v801
    %v803 = vlaneseq
    %v804 = vshrl.u32 %v803, 7
    %v805 = vsub.s32 4, %v804
    %v806 = vrot.slane %v785, %v805
    %v807 = vlaneseq
    %v808 = vshrl.u32 %v807, 7
    %v809 = vsub.s32 5, %v808
    %v810 = vrot.slane %v785, %v809
    %v811 = vlaneseq
    %v812 = vshrl.u32 %v811, 7
    %v813 = vsub.s32 6, %v812
    %v814 = vrot.slane %v785, %v813
    %v815 = vlaneseq
    %v816 = vshrl.u32 %v815, 7
    %v817 = vsub.s32 7, %v816
    %v818 = vrot.slane %v785, %v817
    %v827 = vsub.f32 %v693, %v790
    %v828 = vsub.f32 %v694, %v794
    %v829 = vsub.f32 %v695, %v798
    %v830 = vsub.f32 %v696, %v802
    %v831 = vsub.f32 %v697, %v806
    %v832 = vsub.f32 %v698, %v810
    %v833 = vsub.f32 %v699, %v814
    %v834 = vsub.f32 %v700, %v818
    %v835 = vmul.f32 %v827, 1.442695
    %v836 = vpow.pop %v835
    %v837 = vmul.f32 %v828, 1.442695
    %v838 = vpow.pop %v837
    %v839 = vmul.f32 %v829, 1.442695
    %v840 = vpow.pop %v839
    %v841 = vmul.f32 %v830, 1.442695
    %v842 = vpow.pop %v841
    %v843 = vmul.f32 %v831, 1.442695
    %v844 = vpow.pop %v843
    %v845 = vmul.f32 %v832, 1.442695
    %v846 = vpow.pop %v845
    %v847 = vmul.f32 %v833, 1.442695
    %v848 = vpow.pop %v847
    %v849 = vmul.f32 %v834, 1.442695
    %v850 = vpow.pop %v849
    %859 = vset.pattern.permute.xlu0 0
    %860 = vperm.xlu0 %859, %v836
    %v861 = vpop.permute.xlu0 %860
    %862 = vset.pattern.permute.xlu0 0
    %863 = vperm.xlu0 %862, %v838
    %v864 = vpop.permute.xlu0 %863
    %865 = vset.pattern.permute.xlu0 0
    %866 = vperm.xlu0 %865, %v840
    %v867 = vpop.permute.xlu0 %866
    %868 = vset.pattern.permute.xlu0 0
    %869 = vperm.xlu0 %868, %v842
    %v870 = vpop.permute.xlu0 %869
    %871 = vset.pattern.permute.xlu0 0
    %872 = vperm.xlu0 %871, %v844
    %v873 = vpop.permute.xlu0 %872
    %874 = vset.pattern.permute.xlu0 0
    %875 = vperm.xlu0 %874, %v846
    %v876 = vpop.permute.xlu0 %875
    %877 = vset.pattern.permute.xlu0 0
    %878 = vperm.xlu0 %877, %v848
    %v879 = vpop.permute.xlu0 %878
    %880 = vset.pattern.permute.xlu0 0
    %881 = vperm.xlu0 %880, %v850
    %v882 = vpop.permute.xlu0 %881
    %v883 = vlaneseq
    %v884 = vshrl.u32 %v883, 7
    %v885 = vsub.s32 %v734, %v884
    %v886 = vrot.slane %v861, %v885
    %v887 = vlaneseq
    %v888 = vshrl.u32 %v887, 7
    %v889 = vsub.s32 %v734, %v888
    %v890 = vrot.slane %v864, %v889
    %v891 = vlaneseq
    %v892 = vshrl.u32 %v891, 7
    %v893 = vsub.s32 %v734, %v892
    %v894 = vrot.slane %v867, %v893
    %v895 = vlaneseq
    %v896 = vshrl.u32 %v895, 7
    %v897 = vsub.s32 %v734, %v896
    %v898 = vrot.slane %v870, %v897
    %v899 = vlaneseq
    %v900 = vshrl.u32 %v899, 7
    %v901 = vsub.s32 %v734, %v900
    %v902 = vrot.slane %v873, %v901
    %v903 = vlaneseq
    %v904 = vshrl.u32 %v903, 7
    %v905 = vsub.s32 %v734, %v904
    %v906 = vrot.slane %v876, %v905
    %v907 = vlaneseq
    %v908 = vshrl.u32 %v907, 7
    %v909 = vsub.s32 %v734, %v908
    %v910 = vrot.slane %v879, %v909
    %v911 = vlaneseq
    %v912 = vshrl.u32 %v911, 7
    %v913 = vsub.s32 %v734, %v912
    %v914 = vrot.slane %v882, %v913
    %v915 = vsel %vm767, %v890, %v886
    %v916 = vsel %vm769, %v894, %v915
    %v917 = vsel %vm771, %v898, %v916
    %v918 = vsel %vm773, %v902, %v917
    %v919 = vsel %vm775, %v906, %v918
    %v920 = vsel %vm777, %v910, %v919
    %v921 = vsel %vm779, %v914, %v920
    %v923 = vsel %vm782, %v921, 0.0
    %924 = vadd.xlane.f32.xlu0 %v923
    %v925 = vpop.xlane.xlu0 %924
    %v926 = vrcp.pop %v925
    %v928 = vlaneseq
    %v929 = vshrl.u32 %v928, 7
    %v930 = vsub.s32 0, %v929
    %v931 = vrot.slane %v926, %v930
    %v932 = vlaneseq
    %v933 = vshrl.u32 %v932, 7
    %v934 = vsub.s32 1, %v933
    %v935 = vrot.slane %v926, %v934
    %v936 = vlaneseq
    %v937 = vshrl.u32 %v936, 7
    %v938 = vsub.s32 2, %v937
    %v939 = vrot.slane %v926, %v938
    %v940 = vlaneseq
    %v941 = vshrl.u32 %v940, 7
    %v942 = vsub.s32 3, %v941
    %v943 = vrot.slane %v926, %v942
    %v944 = vlaneseq
    %v945 = vshrl.u32 %v944, 7
    %v946 = vsub.s32 4, %v945
    %v947 = vrot.slane %v926, %v946
    %v948 = vlaneseq
    %v949 = vshrl.u32 %v948, 7
    %v950 = vsub.s32 5, %v949
    %v951 = vrot.slane %v926, %v950
    %v952 = vlaneseq
    %v953 = vshrl.u32 %v952, 7
    %v954 = vsub.s32 6, %v953
    %v955 = vrot.slane %v926, %v954
    %v956 = vlaneseq
    %v957 = vshrl.u32 %v956, 7
    %v958 = vsub.s32 7, %v957
    %v959 = vrot.slane %v926, %v958
    %v968 = vmul.f32 %v836, %v931
    %v969 = vmul.f32 %v838, %v935
    %v970 = vmul.f32 %v840, %v939
    %v971 = vmul.f32 %v842, %v943
    %v972 = vmul.f32 %v844, %v947
    %v973 = vmul.f32 %v846, %v951
    %v974 = vmul.f32 %v848, %v955
    %v975 = vmul.f32 %v850, %v959
    %977 = vset.pattern.permute.xlu0 0
    %978 = vperm.xlu0 %977, %v968
    %v979 = vpop.permute.xlu0 %978
    %982 = vset.pattern.permute.xlu0 0
    %983 = vperm.xlu0 %982, %v969
    %v984 = vpop.permute.xlu0 %983
    %987 = vset.pattern.permute.xlu0 0
    %988 = vperm.xlu0 %987, %v970
    %v989 = vpop.permute.xlu0 %988
    %992 = vset.pattern.permute.xlu0 0
    %993 = vperm.xlu0 %992, %v971
    %v994 = vpop.permute.xlu0 %993
    %997 = vset.pattern.permute.xlu0 0
    %998 = vperm.xlu0 %997, %v972
    %v999 = vpop.permute.xlu0 %998
    %1002 = vset.pattern.permute.xlu0 0
    %1003 = vperm.xlu0 %1002, %v973
    %v1004 = vpop.permute.xlu0 %1003
    %1007 = vset.pattern.permute.xlu0 0
    %1008 = vperm.xlu0 %1007, %v974
    %v1009 = vpop.permute.xlu0 %1008
    %1012 = vset.pattern.permute.xlu0 0
    %1013 = vperm.xlu0 %1012, %v975
    %v1014 = vpop.permute.xlu0 %1013
    %v1016 = vmul.f32 %v979, %v77
    %v1017 = vmul.f32 %v984, %v78
    %v1018 = vmul.f32 %v989, %v79
    %v1019 = vmul.f32 %v994, %v80
    %v1020 = vmul.f32 %v999, %v81
    %v1021 = vmul.f32 %v1004, %v82
    %v1022 = vmul.f32 %v1009, %v83
    %v1023 = vmul.f32 %v1014, %v84
    %v1024 = vsel %vm596, %v1016, 0.0
    %v1025 = vrot.slane %v1024, 4
    %v1026 = vadd.f32 %v1024, %v1025
    %v1027 = vrot.slane %v1026, 2
    %v1028 = vadd.f32 %v1026, %v1027
    %v1029 = vrot.slane %v1028, 1
    %v1030 = vadd.f32 %v1028, %v1029
    %v1031 = vsel %vm596, %v1017, 0.0
    %v1032 = vrot.slane %v1031, 4
    %v1033 = vadd.f32 %v1031, %v1032
    %v1034 = vrot.slane %v1033, 2
    %v1035 = vadd.f32 %v1033, %v1034
    %v1036 = vrot.slane %v1035, 1
    %v1037 = vadd.f32 %v1035, %v1036
    %v1038 = vsel %vm596, %v1018, 0.0
    %v1039 = vrot.slane %v1038, 4
    %v1040 = vadd.f32 %v1038, %v1039
    %v1041 = vrot.slane %v1040, 2
    %v1042 = vadd.f32 %v1040, %v1041
    %v1043 = vrot.slane %v1042, 1
    %v1044 = vadd.f32 %v1042, %v1043
    %v1045 = vsel %vm596, %v1019, 0.0
    %v1046 = vrot.slane %v1045, 4
    %v1047 = vadd.f32 %v1045, %v1046
    %v1048 = vrot.slane %v1047, 2
    %v1049 = vadd.f32 %v1047, %v1048
    %v1050 = vrot.slane %v1049, 1
    %v1051 = vadd.f32 %v1049, %v1050
    %v1052 = vsel %vm596, %v1020, 0.0
    %v1053 = vrot.slane %v1052, 4
    %v1054 = vadd.f32 %v1052, %v1053
    %v1055 = vrot.slane %v1054, 2
    %v1056 = vadd.f32 %v1054, %v1055
    %v1057 = vrot.slane %v1056, 1
    %v1058 = vadd.f32 %v1056, %v1057
    %v1059 = vsel %vm596, %v1021, 0.0
    %v1060 = vrot.slane %v1059, 4
    %v1061 = vadd.f32 %v1059, %v1060
    %v1062 = vrot.slane %v1061, 2
    %v1063 = vadd.f32 %v1061, %v1062
    %v1064 = vrot.slane %v1063, 1
    %v1065 = vadd.f32 %v1063, %v1064
    %v1066 = vsel %vm596, %v1022, 0.0
    %v1067 = vrot.slane %v1066, 4
    %v1068 = vadd.f32 %v1066, %v1067
    %v1069 = vrot.slane %v1068, 2
    %v1070 = vadd.f32 %v1068, %v1069
    %v1071 = vrot.slane %v1070, 1
    %v1072 = vadd.f32 %v1070, %v1071
    %v1073 = vsel %vm596, %v1023, 0.0
    %v1074 = vrot.slane %v1073, 4
    %v1075 = vadd.f32 %v1073, %v1074
    %v1076 = vrot.slane %v1075, 2
    %v1077 = vadd.f32 %v1075, %v1076
    %v1078 = vrot.slane %v1077, 1
    %v1079 = vadd.f32 %v1077, %v1078
    %1080 = vmatprep.subr.mxu0 0.0
    %1081 = vmatpush1.msra.mxu0 %v101
    %1082 = vmatprep.subr.mxu0 0.0
    %1083 = vmatpush1.msra.mxu0 %v102
    %1084 = vmatprep.subr.mxu0 0.0
    %1085 = vmatpush1.msra.mxu0 %v103
    %1086 = vmatprep.subr.mxu0 0.0
    %1087 = vmatpush1.msra.mxu0 %v104
    %1088 = vmatprep.subr.mxu0 0.0
    %1089 = vmatpush1.msra.mxu0 0.0
    %1090 = vmatprep.subr.mxu0 0.0
    %1091 = vmatpush1.msra.mxu0 0.0
    %1092 = vmatprep.subr.mxu0 0.0
    %1093 = vmatpush1.msra.mxu0 0.0
    %1094 = vmatprep.subr.mxu0 0.0
    %1095 = vmatpush1.msra.mxu0 0.0
    %1096 = vmatprep.subr.mxu0 0.0
    %1097 = vmatpush1.msra.mxu0 0.0
    %1098 = vmatprep.subr.mxu0 0.0
    %1099 = vmatpush1.msra.mxu0 0.0
    %1100 = vmatprep.subr.mxu0 0.0
    %1101 = vmatpush1.msra.mxu0 0.0
    %1102 = vmatprep.subr.mxu0 0.0
    %1103 = vmatpush1.msra.mxu0 0.0
    %1104 = vmatprep.subr.mxu0 0.0
    %1105 = vmatpush1.msra.mxu0 0.0
    %1106 = vmatprep.subr.mxu0 0.0
    %1107 = vmatpush1.msra.mxu0 0.0
    %1108 = vmatprep.subr.mxu0 0.0
    %1109 = vmatpush1.msra.mxu0 0.0
    %1110 = vmatprep.subr.mxu0 0.0
    %1111 = vmatpush1.msra.mxu0 0.0
    %1112 = vmatprep.subr.mxu0 0.0
    %1113 = vmatpush1.msra.mxu0 0.0
    %1114 = vmatprep.subr.mxu0 0.0
    %1115 = vmatpush1.msra.mxu0 0.0
    %1116 = vmatprep.subr.mxu0 0.0
    %1117 = vmatpush1.msra.mxu0 0.0
    %1118 = vmatprep.subr.mxu0 0.0
    %1119 = vmatpush1.msra.mxu0 0.0
    %1120 = vmatprep.subr.mxu0 0.0
    %1121 = vmatpush1.msra.mxu0 0.0
    %1122 = vmatprep.subr.mxu0 0.0
    %1123 = vmatpush1.msra.mxu0 0.0
    %1124 = vmatprep.subr.mxu0 0.0
    %1125 = vmatpush1.msra.mxu0 0.0
    %1126 = vmatprep.subr.mxu0 0.0
    %1127 = vmatpush1.msra.mxu0 0.0
    %1128 = vmatprep.subr.mxu0 0.0
    %1129 = vmatpush1.msra.mxu0 0.0
    %1130 = vmatprep.subr.mxu0 0.0
    %1131 = vmatpush1.msra.mxu0 0.0
    %1132 = vmatprep.subr.mxu0 0.0
    %1133 = vmatpush1.msra.mxu0 0.0
    %1134 = vmatprep.subr.mxu0 0.0
    %1135 = vmatpush1.msra.mxu0 0.0
    %1136 = vmatprep.subr.mxu0 0.0
    %1137 = vmatpush1.msra.mxu0 0.0
    %1138 = vmatprep.subr.mxu0 0.0
    %1139 = vmatpush1.msra.mxu0 0.0
    %1140 = vmatprep.subr.mxu0 0.0
    %1141 = vmatpush1.msra.mxu0 0.0
    %1142 = vmatprep.subr.mxu0 0.0
    %1143 = vmatpush1.msra.mxu0 0.0
    %1144 = vmatprep.mubr.f32.mxu0 0.0
    %1145 = vmatmul.mubr.f32.gmra.mrb[0].mxu0 %v426
    %v1146 = vpop.f32.mrb[0].mxu0
    %v1147 = vadd.f32 0.0, %v1146
    %v1148 = vpop.f32.mrb[0].mxu0
    %1149 = vdwg.mxu0
    %v1158 = vsel %vm767, %v1037, %v1030
    %v1159 = vsel %vm769, %v1044, %v1158
    %v1160 = vsel %vm771, %v1051, %v1159
    %v1161 = vsel %vm773, %v1058, %v1160
    %v1162 = vsel %vm775, %v1065, %v1161
    %v1163 = vsel %vm777, %v1072, %v1162
    %v1164 = vsel %vm779, %v1079, %v1163
    %v1165 = vsel %vm193, %v1164, 0
    %1167 = vmatprep.subr.mxu0 0.0
    %1168 = vmatpush1.msra.mxu0 %v97
    %1169 = vmatprep.subr.mxu0 0.0
    %1170 = vmatpush1.msra.mxu0 %v98
    %1171 = vmatprep.subr.mxu0 0.0
    %1172 = vmatpush1.msra.mxu0 %v99
    %1173 = vmatprep.subr.mxu0 0.0
    %1174 = vmatpush1.msra.mxu0 %v100
    %1175 = vmatprep.subr.mxu0 0.0
    %1176 = vmatpush1.msra.mxu0 0.0
    %1177 = vmatprep.subr.mxu0 0.0
    %1178 = vmatpush1.msra.mxu0 0.0
    %1179 = vmatprep.subr.mxu0 0.0
    %1180 = vmatpush1.msra.mxu0 0.0
    %1181 = vmatprep.subr.mxu0 0.0
    %1182 = vmatpush1.msra.mxu0 0.0
    %1183 = vmatprep.subr.mxu0 0.0
    %1184 = vmatpush1.msra.mxu0 0.0
    %1185 = vmatprep.subr.mxu0 0.0
    %1186 = vmatpush1.msra.mxu0 0.0
    %1187 = vmatprep.subr.mxu0 0.0
    %1188 = vmatpush1.msra.mxu0 0.0
    %1189 = vmatprep.subr.mxu0 0.0
    %1190 = vmatpush1.msra.mxu0 0.0
    %1191 = vmatprep.subr.mxu0 0.0
    %1192 = vmatpush1.msra.mxu0 0.0
    %1193 = vmatprep.subr.mxu0 0.0
    %1194 = vmatpush1.msra.mxu0 0.0
    %1195 = vmatprep.subr.mxu0 0.0
    %1196 = vmatpush1.msra.mxu0 0.0
    %1197 = vmatprep.subr.mxu0 0.0
    %1198 = vmatpush1.msra.mxu0 0.0
    %1199 = vmatprep.subr.mxu0 0.0
    %1200 = vmatpush1.msra.mxu0 0.0
    %1201 = vmatprep.subr.mxu0 0.0
    %1202 = vmatpush1.msra.mxu0 0.0
    %1203 = vmatprep.subr.mxu0 0.0
    %1204 = vmatpush1.msra.mxu0 0.0
    %1205 = vmatprep.subr.mxu0 0.0
    %1206 = vmatpush1.msra.mxu0 0.0
    %1207 = vmatprep.subr.mxu0 0.0
    %1208 = vmatpush1.msra.mxu0 0.0
    %1209 = vmatprep.subr.mxu0 0.0
    %1210 = vmatpush1.msra.mxu0 0.0
    %1211 = vmatprep.subr.mxu0 0.0
    %1212 = vmatpush1.msra.mxu0 0.0
    %1213 = vmatprep.subr.mxu0 0.0
    %1214 = vmatpush1.msra.mxu0 0.0
    %1215 = vmatprep.subr.mxu0 0.0
    %1216 = vmatpush1.msra.mxu0 0.0
    %1217 = vmatprep.subr.mxu0 0.0
    %1218 = vmatpush1.msra.mxu0 0.0
    %1219 = vmatprep.subr.mxu0 0.0
    %1220 = vmatpush1.msra.mxu0 0.0
    %1221 = vmatprep.subr.mxu0 0.0
    %1222 = vmatpush1.msra.mxu0 0.0
    %1223 = vmatprep.subr.mxu0 0.0
    %1224 = vmatpush1.msra.mxu0 0.0
    %1225 = vmatprep.subr.mxu0 0.0
    %1226 = vmatpush1.msra.mxu0 0.0
    %1227 = vmatprep.subr.mxu0 0.0
    %1228 = vmatpush1.msra.mxu0 0.0
    %1229 = vmatprep.subr.mxu0 0.0
    %1230 = vmatpush1.msra.mxu0 0.0
    %1231 = vmatprep.mubr.f32.mxu0 0.0
    %1232 = vmatmul.mubr.f32.gmra.mrb[0].mxu0 %v1165
    %v1233 = vpop.f32.mrb[0].mxu0
    %v1234 = vadd.f32 %v1147, %v1233
    %v1235 = vpop.f32.mrb[0].mxu0
    %1236 = vdwg.mxu0
    %v1237 = vtanh.pop %v1234
    %1238 = vst.msk [vmem:[#allocation8] sm:$0xff] %vm193, %v1237
    %1239 = vmatprep.subr.mxu0 0.0
    %1240 = vmatpush1.msra.mxu0 %v89
    %1241 = vmatprep.subr.mxu0 0.0
    %1242 = vmatpush1.msra.mxu0 %v90
    %1243 = vmatprep.subr.mxu0 0.0
    %1244 = vmatpush1.msra.mxu0 %v91
    %1245 = vmatprep.subr.mxu0 0.0
    %1246 = vmatpush1.msra.mxu0 %v92
    %1247 = vmatprep.subr.mxu0 0.0
    %1248 = vmatpush1.msra.mxu0 0.0
    %1249 = vmatprep.subr.mxu0 0.0
    %1250 = vmatpush1.msra.mxu0 0.0
    %1251 = vmatprep.subr.mxu0 0.0
    %1252 = vmatpush1.msra.mxu0 0.0
    %1253 = vmatprep.subr.mxu0 0.0
    %1254 = vmatpush1.msra.mxu0 0.0
    %1255 = vmatprep.subr.mxu0 0.0
    %1256 = vmatpush1.msra.mxu0 0.0
    %1257 = vmatprep.subr.mxu0 0.0
    %1258 = vmatpush1.msra.mxu0 0.0
    %1259 = vmatprep.subr.mxu0 0.0
    %1260 = vmatpush1.msra.mxu0 0.0
    %1261 = vmatprep.subr.mxu0 0.0
    %1262 = vmatpush1.msra.mxu0 0.0
    %1263 = vmatprep.subr.mxu0 0.0
    %1264 = vmatpush1.msra.mxu0 0.0
    %1265 = vmatprep.subr.mxu0 0.0
    %1266 = vmatpush1.msra.mxu0 0.0
    %1267 = vmatprep.subr.mxu0 0.0
    %1268 = vmatpush1.msra.mxu0 0.0
    %1269 = vmatprep.subr.mxu0 0.0
    %1270 = vmatpush1.msra.mxu0 0.0
    %1271 = vmatprep.subr.mxu0 0.0
    %1272 = vmatpush1.msra.mxu0 0.0
    %1273 = vmatprep.subr.mxu0 0.0
    %1274 = vmatpush1.msra.mxu0 0.0
    %1275 = vmatprep.subr.mxu0 0.0
    %1276 = vmatpush1.msra.mxu0 0.0
    %1277 = vmatprep.subr.mxu0 0.0
    %1278 = vmatpush1.msra.mxu0 0.0
    %1279 = vmatprep.subr.mxu0 0.0
    %1280 = vmatpush1.msra.mxu0 0.0
    %1281 = vmatprep.subr.mxu0 0.0
    %1282 = vmatpush1.msra.mxu0 0.0
    %1283 = vmatprep.subr.mxu0 0.0
    %1284 = vmatpush1.msra.mxu0 0.0
    %1285 = vmatprep.subr.mxu0 0.0
    %1286 = vmatpush1.msra.mxu0 0.0
    %1287 = vmatprep.subr.mxu0 0.0
    %1288 = vmatpush1.msra.mxu0 0.0
    %1289 = vmatprep.subr.mxu0 0.0
    %1290 = vmatpush1.msra.mxu0 0.0
    %1291 = vmatprep.subr.mxu0 0.0
    %1292 = vmatpush1.msra.mxu0 0.0
    %1293 = vmatprep.subr.mxu0 0.0
    %1294 = vmatpush1.msra.mxu0 0.0
    %1295 = vmatprep.subr.mxu0 0.0
    %1296 = vmatpush1.msra.mxu0 0.0
    %1297 = vmatprep.subr.mxu0 0.0
    %1298 = vmatpush1.msra.mxu0 0.0
    %1299 = vmatprep.subr.mxu0 0.0
    %1300 = vmatpush1.msra.mxu0 0.0
    %1301 = vmatprep.subr.mxu0 0.0
    %1302 = vmatpush1.msra.mxu0 0.0
    %1303 = vmatprep.mubr.f32.mxu0 0.0
    %1304 = vmatmul.mubr.f32.gmra.mrb[0].mxu0 %v426
    %v1305 = vpop.f32.mrb[0].mxu0
    %v1306 = vadd.f32 0.0, %v1305
    %v1307 = vpop.f32.mrb[0].mxu0
    %1308 = vdwg.mxu0
    %v1310 = vsel %vm193, %v1237, 0
    %1312 = vmatprep.subr.mxu0 0.0
    %1313 = vmatpush1.msra.mxu0 %v85
    %1314 = vmatprep.subr.mxu0 0.0
    %1315 = vmatpush1.msra.mxu0 %v86
    %1316 = vmatprep.subr.mxu0 0.0
    %1317 = vmatpush1.msra.mxu0 %v87
    %1318 = vmatprep.subr.mxu0 0.0
    %1319 = vmatpush1.msra.mxu0 %v88
    %1320 = vmatprep.subr.mxu0 0.0
    %1321 = vmatpush1.msra.mxu0 0.0
    %1322 = vmatprep.subr.mxu0 0.0
    %1323 = vmatpush1.msra.mxu0 0.0
    %1324 = vmatprep.subr.mxu0 0.0
    %1325 = vmatpush1.msra.mxu0 0.0
    %1326 = vmatprep.subr.mxu0 0.0
    %1327 = vmatpush1.msra.mxu0 0.0
    %1328 = vmatprep.subr.mxu0 0.0
    %1329 = vmatpush1.msra.mxu0 0.0
    %1330 = vmatprep.subr.mxu0 0.0
    %1331 = vmatpush1.msra.mxu0 0.0
    %1332 = vmatprep.subr.mxu0 0.0
    %1333 = vmatpush1.msra.mxu0 0.0
    %1334 = vmatprep.subr.mxu0 0.0
    %1335 = vmatpush1.msra.mxu0 0.0
    %1336 = vmatprep.subr.mxu0 0.0
    %1337 = vmatpush1.msra.mxu0 0.0
    %1338 = vmatprep.subr.mxu0 0.0
    %1339 = vmatpush1.msra.mxu0 0.0
    %1340 = vmatprep.subr.mxu0 0.0
    %1341 = vmatpush1.msra.mxu0 0.0
    %1342 = vmatprep.subr.mxu0 0.0
    %1343 = vmatpush1.msra.mxu0 0.0
    %1344 = vmatprep.subr.mxu0 0.0
    %1345 = vmatpush1.msra.mxu0 0.0
    %1346 = vmatprep.subr.mxu0 0.0
    %1347 = vmatpush1.msra.mxu0 0.0
    %1348 = vmatprep.subr.mxu0 0.0
    %1349 = vmatpush1.msra.mxu0 0.0
    %1350 = vmatprep.subr.mxu0 0.0
    %1351 = vmatpush1.msra.mxu0 0.0
    %1352 = vmatprep.subr.mxu0 0.0
    %1353 = vmatpush1.msra.mxu0 0.0
    %1354 = vmatprep.subr.mxu0 0.0
    %1355 = vmatpush1.msra.mxu0 0.0
    %1356 = vmatprep.subr.mxu0 0.0
    %1357 = vmatpush1.msra.mxu0 0.0
    %1358 = vmatprep.subr.mxu0 0.0
    %1359 = vmatpush1.msra.mxu0 0.0
    %1360 = vmatprep.subr.mxu0 0.0
    %1361 = vmatpush1.msra.mxu0 0.0
    %1362 = vmatprep.subr.mxu0 0.0
    %1363 = vmatpush1.msra.mxu0 0.0
    %1364 = vmatprep.subr.mxu0 0.0
    %1365 = vmatpush1.msra.mxu0 0.0
    %1366 = vmatprep.subr.mxu0 0.0
    %1367 = vmatpush1.msra.mxu0 0.0
    %1368 = vmatprep.subr.mxu0 0.0
    %1369 = vmatpush1.msra.mxu0 0.0
    %1370 = vmatprep.subr.mxu0 0.0
    %1371 = vmatpush1.msra.mxu0 0.0
    %1372 = vmatprep.subr.mxu0 0.0
    %1373 = vmatpush1.msra.mxu0 0.0
    %1374 = vmatprep.subr.mxu0 0.0
    %1375 = vmatpush1.msra.mxu0 0.0
    %1376 = vmatprep.mubr.f32.mxu0 0.0
    %1377 = vmatmul.mubr.f32.gmra.mrb[0].mxu0 %v1310
    %v1378 = vpop.f32.mrb[0].mxu0
    %v1379 = vadd.f32 %v1306, %v1378
    %v1380 = vpop.f32.mrb[0].mxu0
    %1381 = vdwg.mxu0
    %v1382 = vadd.f32 %v1379, %v110
    %v1383 = vxor.u32 %v1382, 2147483648
    %v1384 = vmul.f32 %v1383, 1.442695
    %v1385 = vpow.pop %v1384
    %v1386 = vadd.f32 %v1385, 1.0
    %v1387 = vrcp.pop %v1386
    %v1388 = vmul.f32 1.0, %v1387
    %v1389 = vtanh.pop %v1382
    %v1390 = vmul.f32 %v1388, %v416
    %1392 = vrot.lane.b32.xlu0 %v1389, 64
    %v1393 = vpop.permute.xlu0 %1392
    %v1395 = vmul.f32 %v1388, %v1393
    %1397 = vrot.lane.b32.xlu0 %v1395, 32
    %v1398 = vpop.permute.xlu0 %1397
    %v1400 = vadd.f32 %v1390, %v1398
    %v1401 = vtanh.pop %v1400
    %1403 = vrot.lane.b32.xlu0 %v1401, 64
    %v1404 = vpop.permute.xlu0 %1403
    %v1406 = vmul.f32 %v1388, %v1404
    %1408 = vrot.lane.b32.xlu0 %v1406, 32
    %v1409 = vpop.permute.xlu0 %1408
    %v1410 = vsel %vm193, %v1409, 0
    %1412 = vmatprep.subr.mxu0 0.0
    %1413 = vmatpush1.msra.mxu0 %v93
    %1414 = vmatprep.subr.mxu0 0.0
    %1415 = vmatpush1.msra.mxu0 %v94
    %1416 = vmatprep.subr.mxu0 0.0
    %1417 = vmatpush1.msra.mxu0 %v95
    %1418 = vmatprep.subr.mxu0 0.0
    %1419 = vmatpush1.msra.mxu0 %v96
    %1420 = vmatprep.subr.mxu0 0.0
    %1421 = vmatpush1.msra.mxu0 0.0
    %1422 = vmatprep.subr.mxu0 0.0
    %1423 = vmatpush1.msra.mxu0 0.0
    %1424 = vmatprep.subr.mxu0 0.0
    %1425 = vmatpush1.msra.mxu0 0.0
    %1426 = vmatprep.subr.mxu0 0.0
    %1427 = vmatpush1.msra.mxu0 0.0
    %1428 = vmatprep.subr.mxu0 0.0
    %1429 = vmatpush1.msra.mxu0 0.0
    %1430 = vmatprep.subr.mxu0 0.0
    %1431 = vmatpush1.msra.mxu0 0.0
    %1432 = vmatprep.subr.mxu0 0.0
    %1433 = vmatpush1.msra.mxu0 0.0
    %1434 = vmatprep.subr.mxu0 0.0
    %1435 = vmatpush1.msra.mxu0 0.0
    %1436 = vmatprep.subr.mxu0 0.0
    %1437 = vmatpush1.msra.mxu0 0.0
    %1438 = vmatprep.subr.mxu0 0.0
    %1439 = vmatpush1.msra.mxu0 0.0
    %1440 = vmatprep.subr.mxu0 0.0
    %1441 = vmatpush1.msra.mxu0 0.0
    %1442 = vmatprep.subr.mxu0 0.0
    %1443 = vmatpush1.msra.mxu0 0.0
    %1444 = vmatprep.subr.mxu0 0.0
    %1445 = vmatpush1.msra.mxu0 0.0
    %1446 = vmatprep.subr.mxu0 0.0
    %1447 = vmatpush1.msra.mxu0 0.0
    %1448 = vmatprep.subr.mxu0 0.0
    %1449 = vmatpush1.msra.mxu0 0.0
    %1450 = vmatprep.subr.mxu0 0.0
    %1451 = vmatpush1.msra.mxu0 0.0
    %1452 = vmatprep.subr.mxu0 0.0
    %1453 = vmatpush1.msra.mxu0 0.0
    %1454 = vmatprep.subr.mxu0 0.0
    %1455 = vmatpush1.msra.mxu0 0.0
    %1456 = vmatprep.subr.mxu0 0.0
    %1457 = vmatpush1.msra.mxu0 0.0
    %1458 = vmatprep.subr.mxu0 0.0
    %1459 = vmatpush1.msra.mxu0 0.0
    %1460 = vmatprep.subr.mxu0 0.0
    %1461 = vmatpush1.msra.mxu0 0.0
    %1462 = vmatprep.subr.mxu0 0.0
    %1463 = vmatpush1.msra.mxu0 0.0
    %1464 = vmatprep.subr.mxu0 0.0
    %1465 = vmatpush1.msra.mxu0 0.0
    %1466 = vmatprep.subr.mxu0 0.0
    %1467 = vmatpush1.msra.mxu0 0.0
    %1468 = vmatprep.subr.mxu0 0.0
    %1469 = vmatpush1.msra.mxu0 0.0
    %1470 = vmatprep.subr.mxu0 0.0
    %1471 = vmatpush1.msra.mxu0 0.0
    %1472 = vmatprep.subr.mxu0 0.0
    %1473 = vmatpush1.msra.mxu0 0.0
    %1474 = vmatprep.subr.mxu0 0.0
    %1475 = vmatpush1.msra.mxu0 0.0
    %1476 = vmatprep.mubr.f32.mxu0 0.0
    %1477 = vmatmul.mubr.f32.gmra.mrb[0].mxu0 %v1410
    %v1478 = vpop.f32.mrb[0].mxu0
    %v1479 = vadd.f32 0.0, %v1478
    %v1480 = vpop.f32.mrb[0].mxu0
    %1481 = vdwg.mxu0
    %v1483 = vcombine.high %v1479, %v1479
    %v1485 = vunpack.c.l.s4 1966171168
    %v1486 = vunpack.c.0.s8 %v1485
    %v1487 = vlaneseq
    %v1488 = vshrl.u32 %v1487, 7
    %v1489 = vsub.s32 %v1486, %v1488
    %v1490 = vrot.slane %v1479, %v1489
    %v1492 = vunpack.c.l.s4 1966171168
    %v1493 = vunpack.c.0.s8 %v1492
    %v1494 = vlaneseq
    %v1495 = vshrl.u32 %v1494, 7
    %v1496 = vsub.s32 %v1493, %v1495
    %v1497 = vrot.slane %v1483, %v1496
    %v1498 = vcombine.high %v1490, %v1490
    %v1499 = vcombine.high %v1497, %v1497
    %v1501 = vunpack.c.l.s4 1966171168
    %v1502 = vunpack.c.0.s8 %v1501
    %v1503 = vlaneseq
    %v1504 = vshrl.u32 %v1503, 7
    %v1505 = vsub.s32 %v1502, %v1504
    %v1506 = vrot.slane %v1490, %v1505
    %v1508 = vunpack.c.l.s4 1966171168
    %v1509 = vunpack.c.0.s8 %v1508
    %v1510 = vlaneseq
    %v1511 = vshrl.u32 %v1510, 7
    %v1512 = vsub.s32 %v1509, %v1511
    %v1513 = vrot.slane %v1497, %v1512
    %v1515 = vunpack.c.l.s4 1966171168
    %v1516 = vunpack.c.0.s8 %v1515
    %v1517 = vlaneseq
    %v1518 = vshrl.u32 %v1517, 7
    %v1519 = vsub.s32 %v1516, %v1518
    %v1520 = vrot.slane %v1498, %v1519
    %v1522 = vunpack.c.l.s4 1966171168
    %v1523 = vunpack.c.0.s8 %v1522
    %v1524 = vlaneseq
    %v1525 = vshrl.u32 %v1524, 7
    %v1526 = vsub.s32 %v1523, %v1525
    %v1527 = vrot.slane %v1499, %v1526
    %v1528 = vcombine.high %v1506, %v1506
    %v1529 = vcombine.high %v1513, %v1513
    %v1530 = vcombine.high %v1520, %v1520
    %v1531 = vcombine.high %v1527, %v1527
    %v1532 = vlaneseq
    %v1533 = vshrl.u32 %v1532, 7
    %v1534 = vsub.s32 0, %v1533
    %v1535 = vrot.slane %v1506, %v1534
    %v1536 = vlaneseq
    %v1537 = vshrl.u32 %v1536, 7
    %v1538 = vsub.s32 0, %v1537
    %v1539 = vrot.slane %v1520, %v1538
    %v1540 = vlaneseq
    %v1541 = vshrl.u32 %v1540, 7
    %v1542 = vsub.s32 0, %v1541
    %v1543 = vrot.slane %v1528, %v1542
    %v1544 = vlaneseq
    %v1545 = vshrl.u32 %v1544, 7
    %v1546 = vsub.s32 0, %v1545
    %v1547 = vrot.slane %v1530, %v1546
    %v1548 = vlaneseq
    %v1549 = vshrl.u32 %v1548, 7
    %v1550 = vsub.s32 0, %v1549
    %v1551 = vrot.slane %v1513, %v1550
    %v1552 = vlaneseq
    %v1553 = vshrl.u32 %v1552, 7
    %v1554 = vsub.s32 0, %v1553
    %v1555 = vrot.slane %v1527, %v1554
    %v1556 = vlaneseq
    %v1557 = vshrl.u32 %v1556, 7
    %v1558 = vsub.s32 0, %v1557
    %v1559 = vrot.slane %v1529, %v1558
    %v1560 = vlaneseq
    %v1561 = vshrl.u32 %v1560, 7
    %v1562 = vsub.s32 0, %v1561
    %v1563 = vrot.slane %v1531, %v1562
    %v1572 = vmul.f32 %v1535, %v77
    %v1573 = vmul.f32 %v1539, %v78
    %v1574 = vmul.f32 %v1543, %v79
    %v1575 = vmul.f32 %v1547, %v80
    %v1576 = vmul.f32 %v1551, %v81
    %v1577 = vmul.f32 %v1555, %v82
    %v1578 = vmul.f32 %v1559, %v83
    %v1579 = vmul.f32 %v1563, %v84
    %v1580 = vsel %vm596, %v1572, 0.0
    %1581 = vadd.xlane.f32.xlu0 %v1580
    %v1582 = vpop.xlane.xlu0 %1581
    %v1583 = vsel %vm596, %v1573, 0.0
    %1584 = vadd.xlane.f32.xlu0 %v1583
    %v1585 = vpop.xlane.xlu0 %1584
    %v1586 = vsel %vm596, %v1574, 0.0
    %1587 = vadd.xlane.f32.xlu0 %v1586
    %v1588 = vpop.xlane.xlu0 %1587
    %v1589 = vsel %vm596, %v1575, 0.0
    %1590 = vadd.xlane.f32.xlu0 %v1589
    %v1591 = vpop.xlane.xlu0 %1590
    %v1592 = vsel %vm596, %v1576, 0.0
    %1593 = vadd.xlane.f32.xlu0 %v1592
    %v1594 = vpop.xlane.xlu0 %1593
    %v1595 = vsel %vm596, %v1577, 0.0
    %1596 = vadd.xlane.f32.xlu0 %v1595
    %v1597 = vpop.xlane.xlu0 %1596
    %v1598 = vsel %vm596, %v1578, 0.0
    %1599 = vadd.xlane.f32.xlu0 %v1598
    %v1600 = vpop.xlane.xlu0 %1599
    %v1601 = vsel %vm596, %v1579, 0.0
    %1602 = vadd.xlane.f32.xlu0 %v1601
    %v1603 = vpop.xlane.xlu0 %1602
    %v1604 = vadd.f32 %v1582, %v663
    %v1605 = vadd.f32 %v1585, %v666
    %v1606 = vadd.f32 %v1588, %v669
    %v1607 = vadd.f32 %v1591, %v672
    %v1608 = vadd.f32 %v1594, %v675
    %v1609 = vadd.f32 %v1597, %v678
    %v1610 = vadd.f32 %v1600, %v681
    %v1611 = vadd.f32 %v1603, %v684
    %1620 = vset.pattern.permute.xlu0 0
    %1621 = vperm.xlu0 %1620, %v1604
    %v1622 = vpop.permute.xlu0 %1621
    %1623 = vset.pattern.permute.xlu0 0
    %1624 = vperm.xlu0 %1623, %v1605
    %v1625 = vpop.permute.xlu0 %1624
    %1626 = vset.pattern.permute.xlu0 0
    %1627 = vperm.xlu0 %1626, %v1606
    %v1628 = vpop.permute.xlu0 %1627
    %1629 = vset.pattern.permute.xlu0 0
    %1630 = vperm.xlu0 %1629, %v1607
    %v1631 = vpop.permute.xlu0 %1630
    %1632 = vset.pattern.permute.xlu0 0
    %1633 = vperm.xlu0 %1632, %v1608
    %v1634 = vpop.permute.xlu0 %1633
    %1635 = vset.pattern.permute.xlu0 0
    %1636 = vperm.xlu0 %1635, %v1609
    %v1637 = vpop.permute.xlu0 %1636
    %1638 = vset.pattern.permute.xlu0 0
    %1639 = vperm.xlu0 %1638, %v1610
    %v1640 = vpop.permute.xlu0 %1639
    %1641 = vset.pattern.permute.xlu0 0
    %1642 = vperm.xlu0 %1641, %v1611
    %v1643 = vpop.permute.xlu0 %1642
    %v1644 = vlaneseq
    %v1645 = vshrl.u32 %v1644, 7
    %v1646 = vsub.s32 %v734, %v1645
    %v1647 = vrot.slane %v1622, %v1646
    %v1648 = vlaneseq
    %v1649 = vshrl.u32 %v1648, 7
    %v1650 = vsub.s32 %v734, %v1649
    %v1651 = vrot.slane %v1625, %v1650
    %v1652 = vlaneseq
    %v1653 = vshrl.u32 %v1652, 7
    %v1654 = vsub.s32 %v734, %v1653
    %v1655 = vrot.slane %v1628, %v1654
    %v1656 = vlaneseq
    %v1657 = vshrl.u32 %v1656, 7
    %v1658 = vsub.s32 %v734, %v1657
    %v1659 = vrot.slane %v1631, %v1658
    %v1660 = vlaneseq
    %v1661 = vshrl.u32 %v1660, 7
    %v1662 = vsub.s32 %v734, %v1661
    %v1663 = vrot.slane %v1634, %v1662
    %v1664 = vlaneseq
    %v1665 = vshrl.u32 %v1664, 7
    %v1666 = vsub.s32 %v734, %v1665
    %v1667 = vrot.slane %v1637, %v1666
    %v1668 = vlaneseq
    %v1669 = vshrl.u32 %v1668, 7
    %v1670 = vsub.s32 %v734, %v1669
    %v1671 = vrot.slane %v1640, %v1670
    %v1672 = vlaneseq
    %v1673 = vshrl.u32 %v1672, 7
    %v1674 = vsub.s32 %v734, %v1673
    %v1675 = vrot.slane %v1643, %v1674
    %v1676 = vsel %vm767, %v1651, %v1647
    %v1677 = vsel %vm769, %v1655, %v1676
    %v1678 = vsel %vm771, %v1659, %v1677
    %v1679 = vsel %vm773, %v1663, %v1678
    %v1680 = vsel %vm775, %v1667, %v1679
    %v1681 = vsel %vm777, %v1671, %v1680
    %v1682 = vsel %vm779, %v1675, %v1681
    %v1684 = vsel %vm782, %v1682, -inf
    %1685 = vmax.xlane.f32.xlu0 %v1684
    %v1686 = vpop.xlane.xlu0 %1685
    %v1688 = vlaneseq
    %v1689 = vshrl.u32 %v1688, 7
    %v1690 = vsub.s32 0, %v1689
    %v1691 = vrot.slane %v1686, %v1690
    %v1692 = vlaneseq
    %v1693 = vshrl.u32 %v1692, 7
    %v1694 = vsub.s32 1, %v1693
    %v1695 = vrot.slane %v1686, %v1694
    %v1696 = vlaneseq
    %v1697 = vshrl.u32 %v1696, 7
    %v1698 = vsub.s32 2, %v1697
    %v1699 = vrot.slane %v1686, %v1698
    %v1700 = vlaneseq
    %v1701 = vshrl.u32 %v1700, 7
    %v1702 = vsub.s32 3, %v1701
    %v1703 = vrot.slane %v1686, %v1702
    %v1704 = vlaneseq
    %v1705 = vshrl.u32 %v1704, 7
    %v1706 = vsub.s32 4, %v1705
    %v1707 = vrot.slane %v1686, %v1706
    %v1708 = vlaneseq
    %v1709 = vshrl.u32 %v1708, 7
    %v1710 = vsub.s32 5, %v1709
    %v1711 = vrot.slane %v1686, %v1710
    %v1712 = vlaneseq
    %v1713 = vshrl.u32 %v1712, 7
    %v1714 = vsub.s32 6, %v1713
    %v1715 = vrot.slane %v1686, %v1714
    %v1716 = vlaneseq
    %v1717 = vshrl.u32 %v1716, 7
    %v1718 = vsub.s32 7, %v1717
    %v1719 = vrot.slane %v1686, %v1718
    %v1728 = vsub.f32 %v1604, %v1691
    %v1729 = vsub.f32 %v1605, %v1695
    %v1730 = vsub.f32 %v1606, %v1699
    %v1731 = vsub.f32 %v1607, %v1703
    %v1732 = vsub.f32 %v1608, %v1707
    %v1733 = vsub.f32 %v1609, %v1711
    %v1734 = vsub.f32 %v1610, %v1715
    %v1735 = vsub.f32 %v1611, %v1719
    %v1736 = vmul.f32 %v1728, 1.442695
    %v1737 = vpow.pop %v1736
    %v1738 = vmul.f32 %v1729, 1.442695
    %v1739 = vpow.pop %v1738
    %v1740 = vmul.f32 %v1730, 1.442695
    %v1741 = vpow.pop %v1740
    %v1742 = vmul.f32 %v1731, 1.442695
    %v1743 = vpow.pop %v1742
    %v1744 = vmul.f32 %v1732, 1.442695
    %v1745 = vpow.pop %v1744
    %v1746 = vmul.f32 %v1733, 1.442695
    %v1747 = vpow.pop %v1746
    %v1748 = vmul.f32 %v1734, 1.442695
    %v1749 = vpow.pop %v1748
    %v1750 = vmul.f32 %v1735, 1.442695
    %v1751 = vpow.pop %v1750
    %1760 = vset.pattern.permute.xlu0 0
    %1761 = vperm.xlu0 %1760, %v1737
    %v1762 = vpop.permute.xlu0 %1761
    %1763 = vset.pattern.permute.xlu0 0
    %1764 = vperm.xlu0 %1763, %v1739
    %v1765 = vpop.permute.xlu0 %1764
    %1766 = vset.pattern.permute.xlu0 0
    %1767 = vperm.xlu0 %1766, %v1741
    %v1768 = vpop.permute.xlu0 %1767
    %1769 = vset.pattern.permute.xlu0 0
    %1770 = vperm.xlu0 %1769, %v1743
    %v1771 = vpop.permute.xlu0 %1770
    %1772 = vset.pattern.permute.xlu0 0
    %1773 = vperm.xlu0 %1772, %v1745
    %v1774 = vpop.permute.xlu0 %1773
    %1775 = vset.pattern.permute.xlu0 0
    %1776 = vperm.xlu0 %1775, %v1747
    %v1777 = vpop.permute.xlu0 %1776
    %1778 = vset.pattern.permute.xlu0 0
    %1779 = vperm.xlu0 %1778, %v1749
    %v1780 = vpop.permute.xlu0 %1779
    %1781 = vset.pattern.permute.xlu0 0
    %1782 = vperm.xlu0 %1781, %v1751
    %v1783 = vpop.permute.xlu0 %1782
    %v1784 = vlaneseq
    %v1785 = vshrl.u32 %v1784, 7
    %v1786 = vsub.s32 %v734, %v1785
    %v1787 = vrot.slane %v1762, %v1786
    %v1788 = vlaneseq
    %v1789 = vshrl.u32 %v1788, 7
    %v1790 = vsub.s32 %v734, %v1789
    %v1791 = vrot.slane %v1765, %v1790
    %v1792 = vlaneseq
    %v1793 = vshrl.u32 %v1792, 7
    %v1794 = vsub.s32 %v734, %v1793
    %v1795 = vrot.slane %v1768, %v1794
    %v1796 = vlaneseq
    %v1797 = vshrl.u32 %v1796, 7
    %v1798 = vsub.s32 %v734, %v1797
    %v1799 = vrot.slane %v1771, %v1798
    %v1800 = vlaneseq
    %v1801 = vshrl.u32 %v1800, 7
    %v1802 = vsub.s32 %v734, %v1801
    %v1803 = vrot.slane %v1774, %v1802
    %v1804 = vlaneseq
    %v1805 = vshrl.u32 %v1804, 7
    %v1806 = vsub.s32 %v734, %v1805
    %v1807 = vrot.slane %v1777, %v1806
    %v1808 = vlaneseq
    %v1809 = vshrl.u32 %v1808, 7
    %v1810 = vsub.s32 %v734, %v1809
    %v1811 = vrot.slane %v1780, %v1810
    %v1812 = vlaneseq
    %v1813 = vshrl.u32 %v1812, 7
    %v1814 = vsub.s32 %v734, %v1813
    %v1815 = vrot.slane %v1783, %v1814
    %v1816 = vsel %vm767, %v1791, %v1787
    %v1817 = vsel %vm769, %v1795, %v1816
    %v1818 = vsel %vm771, %v1799, %v1817
    %v1819 = vsel %vm773, %v1803, %v1818
    %v1820 = vsel %vm775, %v1807, %v1819
    %v1821 = vsel %vm777, %v1811, %v1820
    %v1822 = vsel %vm779, %v1815, %v1821
    %v1824 = vsel %vm782, %v1822, 0.0
    %1825 = vadd.xlane.f32.xlu0 %v1824
    %v1826 = vpop.xlane.xlu0 %1825
    %v1827 = vrcp.pop %v1826
    %v1829 = vlaneseq
    %v1830 = vshrl.u32 %v1829, 7
    %v1831 = vsub.s32 0, %v1830
    %v1832 = vrot.slane %v1827, %v1831
    %v1833 = vlaneseq
    %v1834 = vshrl.u32 %v1833, 7
    %v1835 = vsub.s32 1, %v1834
    %v1836 = vrot.slane %v1827, %v1835
    %v1837 = vlaneseq
    %v1838 = vshrl.u32 %v1837, 7
    %v1839 = vsub.s32 2, %v1838
    %v1840 = vrot.slane %v1827, %v1839
    %v1841 = vlaneseq
    %v1842 = vshrl.u32 %v1841, 7
    %v1843 = vsub.s32 3, %v1842
    %v1844 = vrot.slane %v1827, %v1843
    %v1845 = vlaneseq
    %v1846 = vshrl.u32 %v1845, 7
    %v1847 = vsub.s32 4, %v1846
    %v1848 = vrot.slane %v1827, %v1847
    %v1849 = vlaneseq
    %v1850 = vshrl.u32 %v1849, 7
    %v1851 = vsub.s32 5, %v1850
    %v1852 = vrot.slane %v1827, %v1851
    %v1853 = vlaneseq
    %v1854 = vshrl.u32 %v1853, 7
    %v1855 = vsub.s32 6, %v1854
    %v1856 = vrot.slane %v1827, %v1855
    %v1857 = vlaneseq
    %v1858 = vshrl.u32 %v1857, 7
    %v1859 = vsub.s32 7, %v1858
    %v1860 = vrot.slane %v1827, %v1859
    %v1869 = vmul.f32 %v1737, %v1832
    %v1870 = vmul.f32 %v1739, %v1836
    %v1871 = vmul.f32 %v1741, %v1840
    %v1872 = vmul.f32 %v1743, %v1844
    %v1873 = vmul.f32 %v1745, %v1848
    %v1874 = vmul.f32 %v1747, %v1852
    %v1875 = vmul.f32 %v1749, %v1856
    %v1876 = vmul.f32 %v1751, %v1860
    %1878 = vset.pattern.permute.xlu0 0
    %1879 = vperm.xlu0 %1878, %v1869
    %v1880 = vpop.permute.xlu0 %1879
    %1883 = vset.pattern.permute.xlu0 0
    %1884 = vperm.xlu0 %1883, %v1870
    %v1885 = vpop.permute.xlu0 %1884
    %1888 = vset.pattern.permute.xlu0 0
    %1889 = vperm.xlu0 %1888, %v1871
    %v1890 = vpop.permute.xlu0 %1889
    %1893 = vset.pattern.permute.xlu0 0
    %1894 = vperm.xlu0 %1893, %v1872
    %v1895 = vpop.permute.xlu0 %1894
    %1898 = vset.pattern.permute.xlu0 0
    %1899 = vperm.xlu0 %1898, %v1873
    %v1900 = vpop.permute.xlu0 %1899
    %1903 = vset.pattern.permute.xlu0 0
    %1904 = vperm.xlu0 %1903, %v1874
    %v1905 = vpop.permute.xlu0 %1904
    %1908 = vset.pattern.permute.xlu0 0
    %1909 = vperm.xlu0 %1908, %v1875
    %v1910 = vpop.permute.xlu0 %1909
    %1913 = vset.pattern.permute.xlu0 0
    %1914 = vperm.xlu0 %1913, %v1876
    %v1915 = vpop.permute.xlu0 %1914
    %v1917 = vmul.f32 %v1880, %v77
    %v1918 = vmul.f32 %v1885, %v78
    %v1919 = vmul.f32 %v1890, %v79
    %v1920 = vmul.f32 %v1895, %v80
    %v1921 = vmul.f32 %v1900, %v81
    %v1922 = vmul.f32 %v1905, %v82
    %v1923 = vmul.f32 %v1910, %v83
    %v1924 = vmul.f32 %v1915, %v84
    %v1925 = vsel %vm596, %v1917, 0.0
    %v1926 = vrot.slane %v1925, 4
    %v1927 = vadd.f32 %v1925, %v1926
    %v1928 = vrot.slane %v1927, 2
    %v1929 = vadd.f32 %v1927, %v1928
    %v1930 = vrot.slane %v1929, 1
    %v1931 = vadd.f32 %v1929, %v1930
    %v1932 = vsel %vm596, %v1918, 0.0
    %v1933 = vrot.slane %v1932, 4
    %v1934 = vadd.f32 %v1932, %v1933
    %v1935 = vrot.slane %v1934, 2
    %v1936 = vadd.f32 %v1934, %v1935
    %v1937 = vrot.slane %v1936, 1
    %v1938 = vadd.f32 %v1936, %v1937
    %v1939 = vsel %vm596, %v1919, 0.0
    %v1940 = vrot.slane %v1939, 4
    %v1941 = vadd.f32 %v1939, %v1940
    %v1942 = vrot.slane %v1941, 2
    %v1943 = vadd.f32 %v1941, %v1942
    %v1944 = vrot.slane %v1943, 1
    %v1945 = vadd.f32 %v1943, %v1944
    %v1946 = vsel %vm596, %v1920, 0.0
    %v1947 = vrot.slane %v1946, 4
    %v1948 = vadd.f32 %v1946, %v1947
    %v1949 = vrot.slane %v1948, 2
    %v1950 = vadd.f32 %v1948, %v1949
    %v1951 = vrot.slane %v1950, 1
    %v1952 = vadd.f32 %v1950, %v1951
    %v1953 = vsel %vm596, %v1921, 0.0
    %v1954 = vrot.slane %v1953, 4
    %v1955 = vadd.f32 %v1953, %v1954
    %v1956 = vrot.slane %v1955, 2
    %v1957 = vadd.f32 %v1955, %v1956
    %v1958 = vrot.slane %v1957, 1
    %v1959 = vadd.f32 %v1957, %v1958
    %v1960 = vsel %vm596, %v1922, 0.0
    %v1961 = vrot.slane %v1960, 4
    %v1962 = vadd.f32 %v1960, %v1961
    %v1963 = vrot.slane %v1962, 2
    %v1964 = vadd.f32 %v1962, %v1963
    %v1965 = vrot.slane %v1964, 1
    %v1966 = vadd.f32 %v1964, %v1965
    %v1967 = vsel %vm596, %v1923, 0.0
    %v1968 = vrot.slane %v1967, 4
    %v1969 = vadd.f32 %v1967, %v1968
    %v1970 = vrot.slane %v1969, 2
    %v1971 = vadd.f32 %v1969, %v1970
    %v1972 = vrot.slane %v1971, 1
    %v1973 = vadd.f32 %v1971, %v1972
    %v1974 = vsel %vm596, %v1924, 0.0
    %v1975 = vrot.slane %v1974, 4
    %v1976 = vadd.f32 %v1974, %v1975
    %v1977 = vrot.slane %v1976, 2
    %v1978 = vadd.f32 %v1976, %v1977
    %v1979 = vrot.slane %v1978, 1
    %v1980 = vadd.f32 %v1978, %v1979
    %1981 = vmatprep.subr.mxu0 0.0
    %1982 = vmatpush1.msra.mxu0 %v101
    %1983 = vmatprep.subr.mxu0 0.0
    %1984 = vmatpush1.msra.mxu0 %v102
    %1985 = vmatprep.subr.mxu0 0.0
    %1986 = vmatpush1.msra.mxu0 %v103
    %1987 = vmatprep.subr.mxu0 0.0
    %1988 = vmatpush1.msra.mxu0 %v104
    %1989 = vmatprep.subr.mxu0 0.0
    %1990 = vmatpush1.msra.mxu0 0.0
    %1991 = vmatprep.subr.mxu0 0.0
    %1992 = vmatpush1.msra.mxu0 0.0
    %1993 = vmatprep.subr.mxu0 0.0
    %1994 = vmatpush1.msra.mxu0 0.0
    %1995 = vmatprep.subr.mxu0 0.0
    %1996 = vmatpush1.msra.mxu0 0.0
    %1997 = vmatprep.subr.mxu0 0.0
    %1998 = vmatpush1.msra.mxu0 0.0
    %1999 = vmatprep.subr.mxu0 0.0
    %2000 = vmatpush1.msra.mxu0 0.0
    %2001 = vmatprep.subr.mxu0 0.0
    %2002 = vmatpush1.msra.mxu0 0.0
    %2003 = vmatprep.subr.mxu0 0.0
    %2004 = vmatpush1.msra.mxu0 0.0
    %2005 = vmatprep.subr.mxu0 0.0
    %2006 = vmatpush1.msra.mxu0 0.0
    %2007 = vmatprep.subr.mxu0 0.0
    %2008 = vmatpush1.msra.mxu0 0.0
    %2009 = vmatprep.subr.mxu0 0.0
    %2010 = vmatpush1.msra.mxu0 0.0
    %2011 = vmatprep.subr.mxu0 0.0
    %2012 = vmatpush1.msra.mxu0 0.0
    %2013 = vmatprep.subr.mxu0 0.0
    %2014 = vmatpush1.msra.mxu0 0.0
    %2015 = vmatprep.subr.mxu0 0.0
    %2016 = vmatpush1.msra.mxu0 0.0
    %2017 = vmatprep.subr.mxu0 0.0
    %2018 = vmatpush1.msra.mxu0 0.0
    %2019 = vmatprep.subr.mxu0 0.0
    %2020 = vmatpush1.msra.mxu0 0.0
    %2021 = vmatprep.subr.mxu0 0.0
    %2022 = vmatpush1.msra.mxu0 0.0
    %2023 = vmatprep.subr.mxu0 0.0
    %2024 = vmatpush1.msra.mxu0 0.0
    %2025 = vmatprep.subr.mxu0 0.0
    %2026 = vmatpush1.msra.mxu0 0.0
    %2027 = vmatprep.subr.mxu0 0.0
    %2028 = vmatpush1.msra.mxu0 0.0
    %2029 = vmatprep.subr.mxu0 0.0
    %2030 = vmatpush1.msra.mxu0 0.0
    %2031 = vmatprep.subr.mxu0 0.0
    %2032 = vmatpush1.msra.mxu0 0.0
    %2033 = vmatprep.subr.mxu0 0.0
    %2034 = vmatpush1.msra.mxu0 0.0
    %2035 = vmatprep.subr.mxu0 0.0
    %2036 = vmatpush1.msra.mxu0 0.0
    %2037 = vmatprep.subr.mxu0 0.0
    %2038 = vmatpush1.msra.mxu0 0.0
    %2039 = vmatprep.subr.mxu0 0.0
    %2040 = vmatpush1.msra.mxu0 0.0
    %2041 = vmatprep.subr.mxu0 0.0
    %2042 = vmatpush1.msra.mxu0 0.0
    %2043 = vmatprep.subr.mxu0 0.0
    %2044 = vmatpush1.msra.mxu0 0.0
    %2045 = vmatprep.mubr.f32.mxu0 0.0
    %2046 = vmatmul.mubr.f32.gmra.mrb[0].mxu0 %v1410
    %v2047 = vpop.f32.mrb[0].mxu0
    %v2048 = vadd.f32 0.0, %v2047
    %v2049 = vpop.f32.mrb[0].mxu0
    %2050 = vdwg.mxu0
    %v2059 = vsel %vm767, %v1938, %v1931
    %v2060 = vsel %vm769, %v1945, %v2059
    %v2061 = vsel %vm771, %v1952, %v2060
    %v2062 = vsel %vm773, %v1959, %v2061
    %v2063 = vsel %vm775, %v1966, %v2062
    %v2064 = vsel %vm777, %v1973, %v2063
    %v2065 = vsel %vm779, %v1980, %v2064
    %v2066 = vsel %vm193, %v2065, 0
    %2068 = vmatprep.subr.mxu0 0.0
    %2069 = vmatpush1.msra.mxu0 %v97
    %2070 = vmatprep.subr.mxu0 0.0
    %2071 = vmatpush1.msra.mxu0 %v98
    %2072 = vmatprep.subr.mxu0 0.0
    %2073 = vmatpush1.msra.mxu0 %v99
    %2074 = vmatprep.subr.mxu0 0.0
    %2075 = vmatpush1.msra.mxu0 %v100
    %2076 = vmatprep.subr.mxu0 0.0
    %2077 = vmatpush1.msra.mxu0 0.0
    %2078 = vmatprep.subr.mxu0 0.0
    %2079 = vmatpush1.msra.mxu0 0.0
    %2080 = vmatprep.subr.mxu0 0.0
    %2081 = vmatpush1.msra.mxu0 0.0
    %2082 = vmatprep.subr.mxu0 0.0
    %2083 = vmatpush1.msra.mxu0 0.0
    %2084 = vmatprep.subr.mxu0 0.0
    %2085 = vmatpush1.msra.mxu0 0.0
    %2086 = vmatprep.subr.mxu0 0.0
    %2087 = vmatpush1.msra.mxu0 0.0
    %2088 = vmatprep.subr.mxu0 0.0
    %2089 = vmatpush1.msra.mxu0 0.0
    %2090 = vmatprep.subr.mxu0 0.0
    %2091 = vmatpush1.msra.mxu0 0.0
    %2092 = vmatprep.subr.mxu0 0.0
    %2093 = vmatpush1.msra.mxu0 0.0
    %2094 = vmatprep.subr.mxu0 0.0
    %2095 = vmatpush1.msra.mxu0 0.0
    %2096 = vmatprep.subr.mxu0 0.0
    %2097 = vmatpush1.msra.mxu0 0.0
    %2098 = vmatprep.subr.mxu0 0.0
    %2099 = vmatpush1.msra.mxu0 0.0
    %2100 = vmatprep.subr.mxu0 0.0
    %2101 = vmatpush1.msra.mxu0 0.0
    %2102 = vmatprep.subr.mxu0 0.0
    %2103 = vmatpush1.msra.mxu0 0.0
    %2104 = vmatprep.subr.mxu0 0.0
    %2105 = vmatpush1.msra.mxu0 0.0
    %2106 = vmatprep.subr.mxu0 0.0
    %2107 = vmatpush1.msra.mxu0 0.0
    %2108 = vmatprep.subr.mxu0 0.0
    %2109 = vmatpush1.msra.mxu0 0.0
    %2110 = vmatprep.subr.mxu0 0.0
    %2111 = vmatpush1.msra.mxu0 0.0
    %2112 = vmatprep.subr.mxu0 0.0
    %2113 = vmatpush1.msra.mxu0 0.0
    %2114 = vmatprep.subr.mxu0 0.0
    %2115 = vmatpush1.msra.mxu0 0.0
    %2116 = vmatprep.subr.mxu0 0.0
    %2117 = vmatpush1.msra.mxu0 0.0
    %2118 = vmatprep.subr.mxu0 0.0
    %2119 = vmatpush1.msra.mxu0 0.0
    %2120 = vmatprep.subr.mxu0 0.0
    %2121 = vmatpush1.msra.mxu0 0.0
    %2122 = vmatprep.subr.mxu0 0.0
    %2123 = vmatpush1.msra.mxu0 0.0
    %2124 = vmatprep.subr.mxu0 0.0
    %2125 = vmatpush1.msra.mxu0 0.0
    %2126 = vmatprep.subr.mxu0 0.0
    %2127 = vmatpush1.msra.mxu0 0.0
    %2128 = vmatprep.subr.mxu0 0.0
    %2129 = vmatpush1.msra.mxu0 0.0
    %2130 = vmatprep.subr.mxu0 0.0
    %2131 = vmatpush1.msra.mxu0 0.0
    %2132 = vmatprep.mubr.f32.mxu0 0.0
    %2133 = vmatmul.mubr.f32.gmra.mrb[0].mxu0 %v2066
    %v2134 = vpop.f32.mrb[0].mxu0
    %v2135 = vadd.f32 %v2048, %v2134
    %v2136 = vpop.f32.mrb[0].mxu0
    %2137 = vdwg.mxu0
    %v2138 = vtanh.pop %v2135
    %s2139 = scalar_lea.vmem [#allocation8], 8
    %2140 = vst.msk [vmem:[%s2139] sm:$0xff] %vm193, %v2138
    %2141 = vmatprep.subr.mxu0 0.0
    %2142 = vmatpush1.msra.mxu0 %v89
    %2143 = vmatprep.subr.mxu0 0.0
    %2144 = vmatpush1.msra.mxu0 %v90
    %2145 = vmatprep.subr.mxu0 0.0
    %2146 = vmatpush1.msra.mxu0 %v91
    %2147 = vmatprep.subr.mxu0 0.0
    %2148 = vmatpush1.msra.mxu0 %v92
    %2149 = vmatprep.subr.mxu0 0.0
    %2150 = vmatpush1.msra.mxu0 0.0
    %2151 = vmatprep.subr.mxu0 0.0
    %2152 = vmatpush1.msra.mxu0 0.0
    %2153 = vmatprep.subr.mxu0 0.0
    %2154 = vmatpush1.msra.mxu0 0.0
    %2155 = vmatprep.subr.mxu0 0.0
    %2156 = vmatpush1.msra.mxu0 0.0
    %2157 = vmatprep.subr.mxu0 0.0
    %2158 = vmatpush1.msra.mxu0 0.0
    %2159 = vmatprep.subr.mxu0 0.0
    %2160 = vmatpush1.msra.mxu0 0.0
    %2161 = vmatprep.subr.mxu0 0.0
    %2162 = vmatpush1.msra.mxu0 0.0
    %2163 = vmatprep.subr.mxu0 0.0
    %2164 = vmatpush1.msra.mxu0 0.0
    %2165 = vmatprep.subr.mxu0 0.0
    %2166 = vmatpush1.msra.mxu0 0.0
    %2167 = vmatprep.subr.mxu0 0.0
    %2168 = vmatpush1.msra.mxu0 0.0
    %2169 = vmatprep.subr.mxu0 0.0
    %2170 = vmatpush1.msra.mxu0 0.0
    %2171 = vmatprep.subr.mxu0 0.0
    %2172 = vmatpush1.msra.mxu0 0.0
    %2173 = vmatprep.subr.mxu0 0.0
    %2174 = vmatpush1.msra.mxu0 0.0
    %2175 = vmatprep.subr.mxu0 0.0
    %2176 = vmatpush1.msra.mxu0 0.0
    %2177 = vmatprep.subr.mxu0 0.0
    %2178 = vmatpush1.msra.mxu0 0.0
    %2179 = vmatprep.subr.mxu0 0.0
    %2180 = vmatpush1.msra.mxu0 0.0
    %2181 = vmatprep.subr.mxu0 0.0
    %2182 = vmatpush1.msra.mxu0 0.0
    %2183 = vmatprep.subr.mxu0 0.0
    %2184 = vmatpush1.msra.mxu0 0.0
    %2185 = vmatprep.subr.mxu0 0.0
    %2186 = vmatpush1.msra.mxu0 0.0
    %2187 = vmatprep.subr.mxu0 0.0
    %2188 = vmatpush1.msra.mxu0 0.0
    %2189 = vmatprep.subr.mxu0 0.0
    %2190 = vmatpush1.msra.mxu0 0.0
    %2191 = vmatprep.subr.mxu0 0.0
    %2192 = vmatpush1.msra.mxu0 0.0
    %2193 = vmatprep.subr.mxu0 0.0
    %2194 = vmatpush1.msra.mxu0 0.0
    %2195 = vmatprep.subr.mxu0 0.0
    %2196 = vmatpush1.msra.mxu0 0.0
    %2197 = vmatprep.subr.mxu0 0.0
    %2198 = vmatpush1.msra.mxu0 0.0
    %2199 = vmatprep.subr.mxu0 0.0
    %2200 = vmatpush1.msra.mxu0 0.0
    %2201 = vmatprep.subr.mxu0 0.0
    %2202 = vmatpush1.msra.mxu0 0.0
    %2203 = vmatprep.subr.mxu0 0.0
    %2204 = vmatpush1.msra.mxu0 0.0
    %2205 = vmatprep.mubr.f32.mxu0 0.0
    %2206 = vmatmul.mubr.f32.gmra.mrb[0].mxu0 %v1410
    %v2207 = vpop.f32.mrb[0].mxu0
    %v2208 = vadd.f32 0.0, %v2207
    %v2209 = vpop.f32.mrb[0].mxu0
    %2210 = vdwg.mxu0
    %v2212 = vsel %vm193, %v2138, 0
    %2214 = vmatprep.subr.mxu0 0.0
    %2215 = vmatpush1.msra.mxu0 %v85
    %2216 = vmatprep.subr.mxu0 0.0
    %2217 = vmatpush1.msra.mxu0 %v86
    %2218 = vmatprep.subr.mxu0 0.0
    %2219 = vmatpush1.msra.mxu0 %v87
    %2220 = vmatprep.subr.mxu0 0.0
    %2221 = vmatpush1.msra.mxu0 %v88
    %2222 = vmatprep.subr.mxu0 0.0
    %2223 = vmatpush1.msra.mxu0 0.0
    %2224 = vmatprep.subr.mxu0 0.0
    %2225 = vmatpush1.msra.mxu0 0.0
    %2226 = vmatprep.subr.mxu0 0.0
    %2227 = vmatpush1.msra.mxu0 0.0
    %2228 = vmatprep.subr.mxu0 0.0
    %2229 = vmatpush1.msra.mxu0 0.0
    %2230 = vmatprep.subr.mxu0 0.0
    %2231 = vmatpush1.msra.mxu0 0.0
    %2232 = vmatprep.subr.mxu0 0.0
    %2233 = vmatpush1.msra.mxu0 0.0
    %2234 = vmatprep.subr.mxu0 0.0
    %2235 = vmatpush1.msra.mxu0 0.0
    %2236 = vmatprep.subr.mxu0 0.0
    %2237 = vmatpush1.msra.mxu0 0.0
    %2238 = vmatprep.subr.mxu0 0.0
    %2239 = vmatpush1.msra.mxu0 0.0
    %2240 = vmatprep.subr.mxu0 0.0
    %2241 = vmatpush1.msra.mxu0 0.0
    %2242 = vmatprep.subr.mxu0 0.0
    %2243 = vmatpush1.msra.mxu0 0.0
    %2244 = vmatprep.subr.mxu0 0.0
    %2245 = vmatpush1.msra.mxu0 0.0
    %2246 = vmatprep.subr.mxu0 0.0
    %2247 = vmatpush1.msra.mxu0 0.0
    %2248 = vmatprep.subr.mxu0 0.0
    %2249 = vmatpush1.msra.mxu0 0.0
    %2250 = vmatprep.subr.mxu0 0.0
    %2251 = vmatpush1.msra.mxu0 0.0
    %2252 = vmatprep.subr.mxu0 0.0
    %2253 = vmatpush1.msra.mxu0 0.0
    %2254 = vmatprep.subr.mxu0 0.0
    %2255 = vmatpush1.msra.mxu0 0.0
    %2256 = vmatprep.subr.mxu0 0.0
    %2257 = vmatpush1.msra.mxu0 0.0
    %2258 = vmatprep.subr.mxu0 0.0
    %2259 = vmatpush1.msra.mxu0 0.0
    %2260 = vmatprep.subr.mxu0 0.0
    %2261 = vmatpush1.msra.mxu0 0.0
    %2262 = vmatprep.subr.mxu0 0.0
    %2263 = vmatpush1.msra.mxu0 0.0
    %2264 = vmatprep.subr.mxu0 0.0
    %2265 = vmatpush1.msra.mxu0 0.0
    %2266 = vmatprep.subr.mxu0 0.0
    %2267 = vmatpush1.msra.mxu0 0.0
    %2268 = vmatprep.subr.mxu0 0.0
    %2269 = vmatpush1.msra.mxu0 0.0
    %2270 = vmatprep.subr.mxu0 0.0
    %2271 = vmatpush1.msra.mxu0 0.0
    %2272 = vmatprep.subr.mxu0 0.0
    %2273 = vmatpush1.msra.mxu0 0.0
    %2274 = vmatprep.subr.mxu0 0.0
    %2275 = vmatpush1.msra.mxu0 0.0
    %2276 = vmatprep.subr.mxu0 0.0
    %2277 = vmatpush1.msra.mxu0 0.0
    %2278 = vmatprep.mubr.f32.mxu0 0.0
    %2279 = vmatmul.mubr.f32.gmra.mrb[0].mxu0 %v2212
    %v2280 = vpop.f32.mrb[0].mxu0
    %v2281 = vadd.f32 %v2208, %v2280
    %v2282 = vpop.f32.mrb[0].mxu0
    %2283 = vdwg.mxu0
    %v2284 = vadd.f32 %v2281, %v110
    %v2285 = vxor.u32 %v2284, 2147483648
    %v2286 = vmul.f32 %v2285, 1.442695
    %v2287 = vpow.pop %v2286
    %v2288 = vadd.f32 %v2287, 1.0
    %v2289 = vrcp.pop %v2288
    %v2290 = vmul.f32 1.0, %v2289
    %v2291 = vtanh.pop %v2284
    %v2292 = vmul.f32 %v2290, %v1400
    %2294 = vrot.lane.b32.xlu0 %v2291, 64
    %v2295 = vpop.permute.xlu0 %2294
    %v2297 = vmul.f32 %v2290, %v2295
    %2299 = vrot.lane.b32.xlu0 %v2297, 32
    %v2300 = vpop.permute.xlu0 %2299
    %v2302 = vadd.f32 %v2292, %v2300
    %v2303 = vtanh.pop %v2302
    %2305 = vrot.lane.b32.xlu0 %v2303, 64
    %v2306 = vpop.permute.xlu0 %2305
    %v2308 = vmul.f32 %v2290, %v2306
    %2310 = vrot.lane.b32.xlu0 %v2308, 32
    %v2311 = vpop.permute.xlu0 %2310
    %v2312 = vsel %vm193, %v2311, 0
    %2314 = vmatprep.subr.mxu0 0.0
    %2315 = vmatpush1.msra.mxu0 %v93
    %2316 = vmatprep.subr.mxu0 0.0
    %2317 = vmatpush1.msra.mxu0 %v94
    %2318 = vmatprep.subr.mxu0 0.0
    %2319 = vmatpush1.msra.mxu0 %v95
    %2320 = vmatprep.subr.mxu0 0.0
    %2321 = vmatpush1.msra.mxu0 %v96
    %2322 = vmatprep.subr.mxu0 0.0
    %2323 = vmatpush1.msra.mxu0 0.0
    %2324 = vmatprep.subr.mxu0 0.0
    %2325 = vmatpush1.msra.mxu0 0.0
    %2326 = vmatprep.subr.mxu0 0.0
    %2327 = vmatpush1.msra.mxu0 0.0
    %2328 = vmatprep.subr.mxu0 0.0
    %2329 = vmatpush1.msra.mxu0 0.0
    %2330 = vmatprep.subr.mxu0 0.0
    %2331 = vmatpush1.msra.mxu0 0.0
    %2332 = vmatprep.subr.mxu0 0.0
    %2333 = vmatpush1.msra.mxu0 0.0
    %2334 = vmatprep.subr.mxu0 0.0
    %2335 = vmatpush1.msra.mxu0 0.0
    %2336 = vmatprep.subr.mxu0 0.0
    %2337 = vmatpush1.msra.mxu0 0.0
    %2338 = vmatprep.subr.mxu0 0.0
    %2339 = vmatpush1.msra.mxu0 0.0
    %2340 = vmatprep.subr.mxu0 0.0
    %2341 = vmatpush1.msra.mxu0 0.0
    %2342 = vmatprep.subr.mxu0 0.0
    %2343 = vmatpush1.msra.mxu0 0.0
    %2344 = vmatprep.subr.mxu0 0.0
    %2345 = vmatpush1.msra.mxu0 0.0
    %2346 = vmatprep.subr.mxu0 0.0
    %2347 = vmatpush1.msra.mxu0 0.0
    %2348 = vmatprep.subr.mxu0 0.0
    %2349 = vmatpush1.msra.mxu0 0.0
    %2350 = vmatprep.subr.mxu0 0.0
    %2351 = vmatpush1.msra.mxu0 0.0
    %2352 = vmatprep.subr.mxu0 0.0
    %2353 = vmatpush1.msra.mxu0 0.0
    %2354 = vmatprep.subr.mxu0 0.0
    %2355 = vmatpush1.msra.mxu0 0.0
    %2356 = vmatprep.subr.mxu0 0.0
    %2357 = vmatpush1.msra.mxu0 0.0
    %2358 = vmatprep.subr.mxu0 0.0
    %2359 = vmatpush1.msra.mxu0 0.0
    %2360 = vmatprep.subr.mxu0 0.0
    %2361 = vmatpush1.msra.mxu0 0.0
    %2362 = vmatprep.subr.mxu0 0.0
    %2363 = vmatpush1.msra.mxu0 0.0
    %2364 = vmatprep.subr.mxu0 0.0
    %2365 = vmatpush1.msra.mxu0 0.0
    %2366 = vmatprep.subr.mxu0 0.0
    %2367 = vmatpush1.msra.mxu0 0.0
    %2368 = vmatprep.subr.mxu0 0.0
    %2369 = vmatpush1.msra.mxu0 0.0
    %2370 = vmatprep.subr.mxu0 0.0
    %2371 = vmatpush1.msra.mxu0 0.0
    %2372 = vmatprep.subr.mxu0 0.0
    %2373 = vmatpush1.msra.mxu0 0.0
    %2374 = vmatprep.subr.mxu0 0.0
    %2375 = vmatpush1.msra.mxu0 0.0
    %2376 = vmatprep.subr.mxu0 0.0
    %2377 = vmatpush1.msra.mxu0 0.0
    %2378 = vmatprep.mubr.f32.mxu0 0.0
    %2379 = vmatmul.mubr.f32.gmra.mrb[0].mxu0 %v2312
    %v2380 = vpop.f32.mrb[0].mxu0
    %v2381 = vadd.f32 0.0, %v2380
    %v2382 = vpop.f32.mrb[0].mxu0
    %2383 = vdwg.mxu0
    %v2385 = vcombine.high %v2381, %v2381
    %v2387 = vunpack.c.l.s4 1966171168
    %v2388 = vunpack.c.0.s8 %v2387
    %v2389 = vlaneseq
    %v2390 = vshrl.u32 %v2389, 7
    %v2391 = vsub.s32 %v2388, %v2390
    %v2392 = vrot.slane %v2381, %v2391
    %v2394 = vunpack.c.l.s4 1966171168
    %v2395 = vunpack.c.0.s8 %v2394
    %v2396 = vlaneseq
    %v2397 = vshrl.u32 %v2396, 7
    %v2398 = vsub.s32 %v2395, %v2397
    %v2399 = vrot.slane %v2385, %v2398
    %v2400 = vcombine.high %v2392, %v2392
    %v2401 = vcombine.high %v2399, %v2399
    %v2403 = vunpack.c.l.s4 1966171168
    %v2404 = vunpack.c.0.s8 %v2403
    %v2405 = vlaneseq
    %v2406 = vshrl.u32 %v2405, 7
    %v2407 = vsub.s32 %v2404, %v2406
    %v2408 = vrot.slane %v2392, %v2407
    %v2410 = vunpack.c.l.s4 1966171168
    %v2411 = vunpack.c.0.s8 %v2410
    %v2412 = vlaneseq
    %v2413 = vshrl.u32 %v2412, 7
    %v2414 = vsub.s32 %v2411, %v2413
    %v2415 = vrot.slane %v2399, %v2414
    %v2417 = vunpack.c.l.s4 1966171168
    %v2418 = vunpack.c.0.s8 %v2417
    %v2419 = vlaneseq
    %v2420 = vshrl.u32 %v2419, 7
    %v2421 = vsub.s32 %v2418, %v2420
    %v2422 = vrot.slane %v2400, %v2421
    %v2424 = vunpack.c.l.s4 1966171168
    %v2425 = vunpack.c.0.s8 %v2424
    %v2426 = vlaneseq
    %v2427 = vshrl.u32 %v2426, 7
    %v2428 = vsub.s32 %v2425, %v2427
    %v2429 = vrot.slane %v2401, %v2428
    %v2430 = vcombine.high %v2408, %v2408
    %v2431 = vcombine.high %v2415, %v2415
    %v2432 = vcombine.high %v2422, %v2422
    %v2433 = vcombine.high %v2429, %v2429
    %v2434 = vlaneseq
    %v2435 = vshrl.u32 %v2434, 7
    %v2436 = vsub.s32 0, %v2435
    %v2437 = vrot.slane %v2408, %v2436
    %v2438 = vlaneseq
    %v2439 = vshrl.u32 %v2438, 7
    %v2440 = vsub.s32 0, %v2439
    %v2441 = vrot.slane %v2422, %v2440
    %v2442 = vlaneseq
    %v2443 = vshrl.u32 %v2442, 7
    %v2444 = vsub.s32 0, %v2443
    %v2445 = vrot.slane %v2430, %v2444
    %v2446 = vlaneseq
    %v2447 = vshrl.u32 %v2446, 7
    %v2448 = vsub.s32 0, %v2447
    %v2449 = vrot.slane %v2432, %v2448
    %v2450 = vlaneseq
    %v2451 = vshrl.u32 %v2450, 7
    %v2452 = vsub.s32 0, %v2451
    %v2453 = vrot.slane %v2415, %v2452
    %v2454 = vlaneseq
    %v2455 = vshrl.u32 %v2454, 7
    %v2456 = vsub.s32 0, %v2455
    %v2457 = vrot.slane %v2429, %v2456
    %v2458 = vlaneseq
    %v2459 = vshrl.u32 %v2458, 7
    %v2460 = vsub.s32 0, %v2459
    %v2461 = vrot.slane %v2431, %v2460
    %v2462 = vlaneseq
    %v2463 = vshrl.u32 %v2462, 7
    %v2464 = vsub.s32 0, %v2463
    %v2465 = vrot.slane %v2433, %v2464
    %v2474 = vmul.f32 %v2437, %v77
    %v2475 = vmul.f32 %v2441, %v78
    %v2476 = vmul.f32 %v2445, %v79
    %v2477 = vmul.f32 %v2449, %v80
    %v2478 = vmul.f32 %v2453, %v81
    %v2479 = vmul.f32 %v2457, %v82
    %v2480 = vmul.f32 %v2461, %v83
    %v2481 = vmul.f32 %v2465, %v84
    %v2482 = vsel %vm596, %v2474, 0.0
    %2483 = vadd.xlane.f32.xlu0 %v2482
    %v2484 = vpop.xlane.xlu0 %2483
    %v2485 = vsel %vm596, %v2475, 0.0
    %2486 = vadd.xlane.f32.xlu0 %v2485
    %v2487 = vpop.xlane.xlu0 %2486
    %v2488 = vsel %vm596, %v2476, 0.0
    %2489 = vadd.xlane.f32.xlu0 %v2488
    %v2490 = vpop.xlane.xlu0 %2489
    %v2491 = vsel %vm596, %v2477, 0.0
    %2492 = vadd.xlane.f32.xlu0 %v2491
    %v2493 = vpop.xlane.xlu0 %2492
    %v2494 = vsel %vm596, %v2478, 0.0
    %2495 = vadd.xlane.f32.xlu0 %v2494
    %v2496 = vpop.xlane.xlu0 %2495
    %v2497 = vsel %vm596, %v2479, 0.0
    %2498 = vadd.xlane.f32.xlu0 %v2497
    %v2499 = vpop.xlane.xlu0 %2498
    %v2500 = vsel %vm596, %v2480, 0.0
    %2501 = vadd.xlane.f32.xlu0 %v2500
    %v2502 = vpop.xlane.xlu0 %2501
    %v2503 = vsel %vm596, %v2481, 0.0
    %2504 = vadd.xlane.f32.xlu0 %v2503
    %v2505 = vpop.xlane.xlu0 %2504
    %v2506 = vadd.f32 %v2484, %v663
    %v2507 = vadd.f32 %v2487, %v666
    %v2508 = vadd.f32 %v2490, %v669
    %v2509 = vadd.f32 %v2493, %v672
    %v2510 = vadd.f32 %v2496, %v675
    %v2511 = vadd.f32 %v2499, %v678
    %v2512 = vadd.f32 %v2502, %v681
    %v2513 = vadd.f32 %v2505, %v684
    %2522 = vset.pattern.permute.xlu0 0
    %2523 = vperm.xlu0 %2522, %v2506
    %v2524 = vpop.permute.xlu0 %2523
    %2525 = vset.pattern.permute.xlu0 0
    %2526 = vperm.xlu0 %2525, %v2507
    %v2527 = vpop.permute.xlu0 %2526
    %2528 = vset.pattern.permute.xlu0 0
    %2529 = vperm.xlu0 %2528, %v2508
    %v2530 = vpop.permute.xlu0 %2529
    %2531 = vset.pattern.permute.xlu0 0
    %2532 = vperm.xlu0 %2531, %v2509
    %v2533 = vpop.permute.xlu0 %2532
    %2534 = vset.pattern.permute.xlu0 0
    %2535 = vperm.xlu0 %2534, %v2510
    %v2536 = vpop.permute.xlu0 %2535
    %2537 = vset.pattern.permute.xlu0 0
    %2538 = vperm.xlu0 %2537, %v2511
    %v2539 = vpop.permute.xlu0 %2538
    %2540 = vset.pattern.permute.xlu0 0
    %2541 = vperm.xlu0 %2540, %v2512
    %v2542 = vpop.permute.xlu0 %2541
    %2543 = vset.pattern.permute.xlu0 0
    %2544 = vperm.xlu0 %2543, %v2513
    %v2545 = vpop.permute.xlu0 %2544
    %v2546 = vlaneseq
    %v2547 = vshrl.u32 %v2546, 7
    %v2548 = vsub.s32 %v734, %v2547
    %v2549 = vrot.slane %v2524, %v2548
    %v2550 = vlaneseq
    %v2551 = vshrl.u32 %v2550, 7
    %v2552 = vsub.s32 %v734, %v2551
    %v2553 = vrot.slane %v2527, %v2552
    %v2554 = vlaneseq
    %v2555 = vshrl.u32 %v2554, 7
    %v2556 = vsub.s32 %v734, %v2555
    %v2557 = vrot.slane %v2530, %v2556
    %v2558 = vlaneseq
    %v2559 = vshrl.u32 %v2558, 7
    %v2560 = vsub.s32 %v734, %v2559
    %v2561 = vrot.slane %v2533, %v2560
    %v2562 = vlaneseq
    %v2563 = vshrl.u32 %v2562, 7
    %v2564 = vsub.s32 %v734, %v2563
    %v2565 = vrot.slane %v2536, %v2564
    %v2566 = vlaneseq
    %v2567 = vshrl.u32 %v2566, 7
    %v2568 = vsub.s32 %v734, %v2567
    %v2569 = vrot.slane %v2539, %v2568
    %v2570 = vlaneseq
    %v2571 = vshrl.u32 %v2570, 7
    %v2572 = vsub.s32 %v734, %v2571
    %v2573 = vrot.slane %v2542, %v2572
    %v2574 = vlaneseq
    %v2575 = vshrl.u32 %v2574, 7
    %v2576 = vsub.s32 %v734, %v2575
    %v2577 = vrot.slane %v2545, %v2576
    %v2578 = vsel %vm767, %v2553, %v2549
    %v2579 = vsel %vm769, %v2557, %v2578
    %v2580 = vsel %vm771, %v2561, %v2579
    %v2581 = vsel %vm773, %v2565, %v2580
    %v2582 = vsel %vm775, %v2569, %v2581
    %v2583 = vsel %vm777, %v2573, %v2582
    %v2584 = vsel %vm779, %v2577, %v2583
    %v2586 = vsel %vm782, %v2584, -inf
    %2587 = vmax.xlane.f32.xlu0 %v2586
    %v2588 = vpop.xlane.xlu0 %2587
    %v2590 = vlaneseq
    %v2591 = vshrl.u32 %v2590, 7
    %v2592 = vsub.s32 0, %v2591
    %v2593 = vrot.slane %v2588, %v2592
    %v2594 = vlaneseq
    %v2595 = vshrl.u32 %v2594, 7
    %v2596 = vsub.s32 1, %v2595
    %v2597 = vrot.slane %v2588, %v2596
    %v2598 = vlaneseq
    %v2599 = vshrl.u32 %v2598, 7
    %v2600 = vsub.s32 2, %v2599
    %v2601 = vrot.slane %v2588, %v2600
    %v2602 = vlaneseq
    %v2603 = vshrl.u32 %v2602, 7
    %v2604 = vsub.s32 3, %v2603
    %v2605 = vrot.slane %v2588, %v2604
    %v2606 = vlaneseq
    %v2607 = vshrl.u32 %v2606, 7
    %v2608 = vsub.s32 4, %v2607
    %v2609 = vrot.slane %v2588, %v2608
    %v2610 = vlaneseq
    %v2611 = vshrl.u32 %v2610, 7
    %v2612 = vsub.s32 5, %v2611
    %v2613 = vrot.slane %v2588, %v2612
    %v2614 = vlaneseq
    %v2615 = vshrl.u32 %v2614, 7
    %v2616 = vsub.s32 6, %v2615
    %v2617 = vrot.slane %v2588, %v2616
    %v2618 = vlaneseq
    %v2619 = vshrl.u32 %v2618, 7
    %v2620 = vsub.s32 7, %v2619
    %v2621 = vrot.slane %v2588, %v2620
    %v2630 = vsub.f32 %v2506, %v2593
    %v2631 = vsub.f32 %v2507, %v2597
    %v2632 = vsub.f32 %v2508, %v2601
    %v2633 = vsub.f32 %v2509, %v2605
    %v2634 = vsub.f32 %v2510, %v2609
    %v2635 = vsub.f32 %v2511, %v2613
    %v2636 = vsub.f32 %v2512, %v2617
    %v2637 = vsub.f32 %v2513, %v2621
    %v2638 = vmul.f32 %v2630, 1.442695
    %v2639 = vpow.pop %v2638
    %v2640 = vmul.f32 %v2631, 1.442695
    %v2641 = vpow.pop %v2640
    %v2642 = vmul.f32 %v2632, 1.442695
    %v2643 = vpow.pop %v2642
    %v2644 = vmul.f32 %v2633, 1.442695
    %v2645 = vpow.pop %v2644
    %v2646 = vmul.f32 %v2634, 1.442695
    %v2647 = vpow.pop %v2646
    %v2648 = vmul.f32 %v2635, 1.442695
    %v2649 = vpow.pop %v2648
    %v2650 = vmul.f32 %v2636, 1.442695
    %v2651 = vpow.pop %v2650
    %v2652 = vmul.f32 %v2637, 1.442695
    %v2653 = vpow.pop %v2652
    %2662 = vset.pattern.permute.xlu0 0
    %2663 = vperm.xlu0 %2662, %v2639
    %v2664 = vpop.permute.xlu0 %2663
    %2665 = vset.pattern.permute.xlu0 0
    %2666 = vperm.xlu0 %2665, %v2641
    %v2667 = vpop.permute.xlu0 %2666
    %2668 = vset.pattern.permute.xlu0 0
    %2669 = vperm.xlu0 %2668, %v2643
    %v2670 = vpop.permute.xlu0 %2669
    %2671 = vset.pattern.permute.xlu0 0
    %2672 = vperm.xlu0 %2671, %v2645
    %v2673 = vpop.permute.xlu0 %2672
    %2674 = vset.pattern.permute.xlu0 0
    %2675 = vperm.xlu0 %2674, %v2647
    %v2676 = vpop.permute.xlu0 %2675
    %2677 = vset.pattern.permute.xlu0 0
    %2678 = vperm.xlu0 %2677, %v2649
    %v2679 = vpop.permute.xlu0 %2678
    %2680 = vset.pattern.permute.xlu0 0
    %2681 = vperm.xlu0 %2680, %v2651
    %v2682 = vpop.permute.xlu0 %2681
    %2683 = vset.pattern.permute.xlu0 0
    %2684 = vperm.xlu0 %2683, %v2653
    %v2685 = vpop.permute.xlu0 %2684
    %v2686 = vlaneseq
    %v2687 = vshrl.u32 %v2686, 7
    %v2688 = vsub.s32 %v734, %v2687
    %v2689 = vrot.slane %v2664, %v2688
    %v2690 = vlaneseq
    %v2691 = vshrl.u32 %v2690, 7
    %v2692 = vsub.s32 %v734, %v2691
    %v2693 = vrot.slane %v2667, %v2692
    %v2694 = vlaneseq
    %v2695 = vshrl.u32 %v2694, 7
    %v2696 = vsub.s32 %v734, %v2695
    %v2697 = vrot.slane %v2670, %v2696
    %v2698 = vlaneseq
    %v2699 = vshrl.u32 %v2698, 7
    %v2700 = vsub.s32 %v734, %v2699
    %v2701 = vrot.slane %v2673, %v2700
    %v2702 = vlaneseq
    %v2703 = vshrl.u32 %v2702, 7
    %v2704 = vsub.s32 %v734, %v2703
    %v2705 = vrot.slane %v2676, %v2704
    %v2706 = vlaneseq
    %v2707 = vshrl.u32 %v2706, 7
    %v2708 = vsub.s32 %v734, %v2707
    %v2709 = vrot.slane %v2679, %v2708
    %v2710 = vlaneseq
    %v2711 = vshrl.u32 %v2710, 7
    %v2712 = vsub.s32 %v734, %v2711
    %v2713 = vrot.slane %v2682, %v2712
    %v2714 = vlaneseq
    %v2715 = vshrl.u32 %v2714, 7
    %v2716 = vsub.s32 %v734, %v2715
    %v2717 = vrot.slane %v2685, %v2716
    %v2718 = vsel %vm767, %v2693, %v2689
    %v2719 = vsel %vm769, %v2697, %v2718
    %v2720 = vsel %vm771, %v2701, %v2719
    %v2721 = vsel %vm773, %v2705, %v2720
    %v2722 = vsel %vm775, %v2709, %v2721
    %v2723 = vsel %vm777, %v2713, %v2722
    %v2724 = vsel %vm779, %v2717, %v2723
    %v2726 = vsel %vm782, %v2724, 0.0
    %2727 = vadd.xlane.f32.xlu0 %v2726
    %v2728 = vpop.xlane.xlu0 %2727
    %v2729 = vrcp.pop %v2728
    %v2731 = vlaneseq
    %v2732 = vshrl.u32 %v2731, 7
    %v2733 = vsub.s32 0, %v2732
    %v2734 = vrot.slane %v2729, %v2733
    %v2735 = vlaneseq
    %v2736 = vshrl.u32 %v2735, 7
    %v2737 = vsub.s32 1, %v2736
    %v2738 = vrot.slane %v2729, %v2737
    %v2739 = vlaneseq
    %v2740 = vshrl.u32 %v2739, 7
    %v2741 = vsub.s32 2, %v2740
    %v2742 = vrot.slane %v2729, %v2741
    %v2743 = vlaneseq
    %v2744 = vshrl.u32 %v2743, 7
    %v2745 = vsub.s32 3, %v2744
    %v2746 = vrot.slane %v2729, %v2745
    %v2747 = vlaneseq
    %v2748 = vshrl.u32 %v2747, 7
    %v2749 = vsub.s32 4, %v2748
    %v2750 = vrot.slane %v2729, %v2749
    %v2751 = vlaneseq
    %v2752 = vshrl.u32 %v2751, 7
    %v2753 = vsub.s32 5, %v2752
    %v2754 = vrot.slane %v2729, %v2753
    %v2755 = vlaneseq
    %v2756 = vshrl.u32 %v2755, 7
    %v2757 = vsub.s32 6, %v2756
    %v2758 = vrot.slane %v2729, %v2757
    %v2759 = vlaneseq
    %v2760 = vshrl.u32 %v2759, 7
    %v2761 = vsub.s32 7, %v2760
    %v2762 = vrot.slane %v2729, %v2761
    %v2771 = vmul.f32 %v2639, %v2734
    %v2772 = vmul.f32 %v2641, %v2738
    %v2773 = vmul.f32 %v2643, %v2742
    %v2774 = vmul.f32 %v2645, %v2746
    %v2775 = vmul.f32 %v2647, %v2750
    %v2776 = vmul.f32 %v2649, %v2754
    %v2777 = vmul.f32 %v2651, %v2758
    %v2778 = vmul.f32 %v2653, %v2762
    %2780 = vset.pattern.permute.xlu0 0
    %2781 = vperm.xlu0 %2780, %v2771
    %v2782 = vpop.permute.xlu0 %2781
    %2785 = vset.pattern.permute.xlu0 0
    %2786 = vperm.xlu0 %2785, %v2772
    %v2787 = vpop.permute.xlu0 %2786
    %2790 = vset.pattern.permute.xlu0 0
    %2791 = vperm.xlu0 %2790, %v2773
    %v2792 = vpop.permute.xlu0 %2791
    %2795 = vset.pattern.permute.xlu0 0
    %2796 = vperm.xlu0 %2795, %v2774
    %v2797 = vpop.permute.xlu0 %2796
    %2800 = vset.pattern.permute.xlu0 0
    %2801 = vperm.xlu0 %2800, %v2775
    %v2802 = vpop.permute.xlu0 %2801
    %2805 = vset.pattern.permute.xlu0 0
    %2806 = vperm.xlu0 %2805, %v2776
    %v2807 = vpop.permute.xlu0 %2806
    %2810 = vset.pattern.permute.xlu0 0
    %2811 = vperm.xlu0 %2810, %v2777
    %v2812 = vpop.permute.xlu0 %2811
    %2815 = vset.pattern.permute.xlu0 0
    %2816 = vperm.xlu0 %2815, %v2778
    %v2817 = vpop.permute.xlu0 %2816
    %v2819 = vmul.f32 %v2782, %v77
    %v2820 = vmul.f32 %v2787, %v78
    %v2821 = vmul.f32 %v2792, %v79
    %v2822 = vmul.f32 %v2797, %v80
    %v2823 = vmul.f32 %v2802, %v81
    %v2824 = vmul.f32 %v2807, %v82
    %v2825 = vmul.f32 %v2812, %v83
    %v2826 = vmul.f32 %v2817, %v84
    %v2827 = vsel %vm596, %v2819, 0.0
    %v2828 = vrot.slane %v2827, 4
    %v2829 = vadd.f32 %v2827, %v2828
    %v2830 = vrot.slane %v2829, 2
    %v2831 = vadd.f32 %v2829, %v2830
    %v2832 = vrot.slane %v2831, 1
    %v2833 = vadd.f32 %v2831, %v2832
    %v2834 = vsel %vm596, %v2820, 0.0
    %v2835 = vrot.slane %v2834, 4
    %v2836 = vadd.f32 %v2834, %v2835
    %v2837 = vrot.slane %v2836, 2
    %v2838 = vadd.f32 %v2836, %v2837
    %v2839 = vrot.slane %v2838, 1
    %v2840 = vadd.f32 %v2838, %v2839
    %v2841 = vsel %vm596, %v2821, 0.0
    %v2842 = vrot.slane %v2841, 4
    %v2843 = vadd.f32 %v2841, %v2842
    %v2844 = vrot.slane %v2843, 2
    %v2845 = vadd.f32 %v2843, %v2844
    %v2846 = vrot.slane %v2845, 1
    %v2847 = vadd.f32 %v2845, %v2846
    %v2848 = vsel %vm596, %v2822, 0.0
    %v2849 = vrot.slane %v2848, 4
    %v2850 = vadd.f32 %v2848, %v2849
    %v2851 = vrot.slane %v2850, 2
    %v2852 = vadd.f32 %v2850, %v2851
    %v2853 = vrot.slane %v2852, 1
    %v2854 = vadd.f32 %v2852, %v2853
    %v2855 = vsel %vm596, %v2823, 0.0
    %v2856 = vrot.slane %v2855, 4
    %v2857 = vadd.f32 %v2855, %v2856
    %v2858 = vrot.slane %v2857, 2
    %v2859 = vadd.f32 %v2857, %v2858
    %v2860 = vrot.slane %v2859, 1
    %v2861 = vadd.f32 %v2859, %v2860
    %v2862 = vsel %vm596, %v2824, 0.0
    %v2863 = vrot.slane %v2862, 4
    %v2864 = vadd.f32 %v2862, %v2863
    %v2865 = vrot.slane %v2864, 2
    %v2866 = vadd.f32 %v2864, %v2865
    %v2867 = vrot.slane %v2866, 1
    %v2868 = vadd.f32 %v2866, %v2867
    %v2869 = vsel %vm596, %v2825, 0.0
    %v2870 = vrot.slane %v2869, 4
    %v2871 = vadd.f32 %v2869, %v2870
    %v2872 = vrot.slane %v2871, 2
    %v2873 = vadd.f32 %v2871, %v2872
    %v2874 = vrot.slane %v2873, 1
    %v2875 = vadd.f32 %v2873, %v2874
    %v2876 = vsel %vm596, %v2826, 0.0
    %v2877 = vrot.slane %v2876, 4
    %v2878 = vadd.f32 %v2876, %v2877
    %v2879 = vrot.slane %v2878, 2
    %v2880 = vadd.f32 %v2878, %v2879
    %v2881 = vrot.slane %v2880, 1
    %v2882 = vadd.f32 %v2880, %v2881
    %2883 = vmatprep.subr.mxu0 0.0
    %2884 = vmatpush1.msra.mxu0 %v101
    %2885 = vmatprep.subr.mxu0 0.0
    %2886 = vmatpush1.msra.mxu0 %v102
    %2887 = vmatprep.subr.mxu0 0.0
    %2888 = vmatpush1.msra.mxu0 %v103
    %2889 = vmatprep.subr.mxu0 0.0
    %2890 = vmatpush1.msra.mxu0 %v104
    %2891 = vmatprep.subr.mxu0 0.0
    %2892 = vmatpush1.msra.mxu0 0.0
    %2893 = vmatprep.subr.mxu0 0.0
    %2894 = vmatpush1.msra.mxu0 0.0
    %2895 = vmatprep.subr.mxu0 0.0
    %2896 = vmatpush1.msra.mxu0 0.0
    %2897 = vmatprep.subr.mxu0 0.0
    %2898 = vmatpush1.msra.mxu0 0.0
    %2899 = vmatprep.subr.mxu0 0.0
    %2900 = vmatpush1.msra.mxu0 0.0
    %2901 = vmatprep.subr.mxu0 0.0
    %2902 = vmatpush1.msra.mxu0 0.0
    %2903 = vmatprep.subr.mxu0 0.0
    %2904 = vmatpush1.msra.mxu0 0.0
    %2905 = vmatprep.subr.mxu0 0.0
    %2906 = vmatpush1.msra.mxu0 0.0
    %2907 = vmatprep.subr.mxu0 0.0
    %2908 = vmatpush1.msra.mxu0 0.0
    %2909 = vmatprep.subr.mxu0 0.0
    %2910 = vmatpush1.msra.mxu0 0.0
    %2911 = vmatprep.subr.mxu0 0.0
    %2912 = vmatpush1.msra.mxu0 0.0
    %2913 = vmatprep.subr.mxu0 0.0
    %2914 = vmatpush1.msra.mxu0 0.0
    %2915 = vmatprep.subr.mxu0 0.0
    %2916 = vmatpush1.msra.mxu0 0.0
    %2917 = vmatprep.subr.mxu0 0.0
    %2918 = vmatpush1.msra.mxu0 0.0
    %2919 = vmatprep.subr.mxu0 0.0
    %2920 = vmatpush1.msra.mxu0 0.0
    %2921 = vmatprep.subr.mxu0 0.0
    %2922 = vmatpush1.msra.mxu0 0.0
    %2923 = vmatprep.subr.mxu0 0.0
    %2924 = vmatpush1.msra.mxu0 0.0
    %2925 = vmatprep.subr.mxu0 0.0
    %2926 = vmatpush1.msra.mxu0 0.0
    %2927 = vmatprep.subr.mxu0 0.0
    %2928 = vmatpush1.msra.mxu0 0.0
    %2929 = vmatprep.subr.mxu0 0.0
    %2930 = vmatpush1.msra.mxu0 0.0
    %2931 = vmatprep.subr.mxu0 0.0
    %2932 = vmatpush1.msra.mxu0 0.0
    %2933 = vmatprep.subr.mxu0 0.0
    %2934 = vmatpush1.msra.mxu0 0.0
    %2935 = vmatprep.subr.mxu0 0.0
    %2936 = vmatpush1.msra.mxu0 0.0
    %2937 = vmatprep.subr.mxu0 0.0
    %2938 = vmatpush1.msra.mxu0 0.0
    %2939 = vmatprep.subr.mxu0 0.0
    %2940 = vmatpush1.msra.mxu0 0.0
    %2941 = vmatprep.subr.mxu0 0.0
    %2942 = vmatpush1.msra.mxu0 0.0
    %2943 = vmatprep.subr.mxu0 0.0
    %2944 = vmatpush1.msra.mxu0 0.0
    %2945 = vmatprep.subr.mxu0 0.0
    %2946 = vmatpush1.msra.mxu0 0.0
    %2947 = vmatprep.mubr.f32.mxu0 0.0
    %2948 = vmatmul.mubr.f32.gmra.mrb[0].mxu0 %v2312
    %v2949 = vpop.f32.mrb[0].mxu0
    %v2950 = vadd.f32 0.0, %v2949
    %v2951 = vpop.f32.mrb[0].mxu0
    %2952 = vdwg.mxu0
    %v2961 = vsel %vm767, %v2840, %v2833
    %v2962 = vsel %vm769, %v2847, %v2961
    %v2963 = vsel %vm771, %v2854, %v2962
    %v2964 = vsel %vm773, %v2861, %v2963
    %v2965 = vsel %vm775, %v2868, %v2964
    %v2966 = vsel %vm777, %v2875, %v2965
    %v2967 = vsel %vm779, %v2882, %v2966
    %v2968 = vsel %vm193, %v2967, 0
    %2970 = vmatprep.subr.mxu0 0.0
    %2971 = vmatpush1.msra.mxu0 %v97
    %2972 = vmatprep.subr.mxu0 0.0
    %2973 = vmatpush1.msra.mxu0 %v98
    %2974 = vmatprep.subr.mxu0 0.0
    %2975 = vmatpush1.msra.mxu0 %v99
    %2976 = vmatprep.subr.mxu0 0.0
    %2977 = vmatpush1.msra.mxu0 %v100
    %2978 = vmatprep.subr.mxu0 0.0
    %2979 = vmatpush1.msra.mxu0 0.0
    %2980 = vmatprep.subr.mxu0 0.0
    %2981 = vmatpush1.msra.mxu0 0.0
    %2982 = vmatprep.subr.mxu0 0.0
    %2983 = vmatpush1.msra.mxu0 0.0
    %2984 = vmatprep.subr.mxu0 0.0
    %2985 = vmatpush1.msra.mxu0 0.0
    %2986 = vmatprep.subr.mxu0 0.0
    %2987 = vmatpush1.msra.mxu0 0.0
    %2988 = vmatprep.subr.mxu0 0.0
    %2989 = vmatpush1.msra.mxu0 0.0
    %2990 = vmatprep.subr.mxu0 0.0
    %2991 = vmatpush1.msra.mxu0 0.0
    %2992 = vmatprep.subr.mxu0 0.0
    %2993 = vmatpush1.msra.mxu0 0.0
    %2994 = vmatprep.subr.mxu0 0.0
    %2995 = vmatpush1.msra.mxu0 0.0
    %2996 = vmatprep.subr.mxu0 0.0
    %2997 = vmatpush1.msra.mxu0 0.0
    %2998 = vmatprep.subr.mxu0 0.0
    %2999 = vmatpush1.msra.mxu0 0.0
    %3000 = vmatprep.subr.mxu0 0.0
    %3001 = vmatpush1.msra.mxu0 0.0
    %3002 = vmatprep.subr.mxu0 0.0
    %3003 = vmatpush1.msra.mxu0 0.0
    %3004 = vmatprep.subr.mxu0 0.0
    %3005 = vmatpush1.msra.mxu0 0.0
    %3006 = vmatprep.subr.mxu0 0.0
    %3007 = vmatpush1.msra.mxu0 0.0
    %3008 = vmatprep.subr.mxu0 0.0
    %3009 = vmatpush1.msra.mxu0 0.0
    %3010 = vmatprep.subr.mxu0 0.0
    %3011 = vmatpush1.msra.mxu0 0.0
    %3012 = vmatprep.subr.mxu0 0.0
    %3013 = vmatpush1.msra.mxu0 0.0
    %3014 = vmatprep.subr.mxu0 0.0
    %3015 = vmatpush1.msra.mxu0 0.0
    %3016 = vmatprep.subr.mxu0 0.0
    %3017 = vmatpush1.msra.mxu0 0.0
    %3018 = vmatprep.subr.mxu0 0.0
    %3019 = vmatpush1.msra.mxu0 0.0
    %3020 = vmatprep.subr.mxu0 0.0
    %3021 = vmatpush1.msra.mxu0 0.0
    %3022 = vmatprep.subr.mxu0 0.0
    %3023 = vmatpush1.msra.mxu0 0.0
    %3024 = vmatprep.subr.mxu0 0.0
    %3025 = vmatpush1.msra.mxu0 0.0
    %3026 = vmatprep.subr.mxu0 0.0
    %3027 = vmatpush1.msra.mxu0 0.0
    %3028 = vmatprep.subr.mxu0 0.0
    %3029 = vmatpush1.msra.mxu0 0.0
    %3030 = vmatprep.subr.mxu0 0.0
    %3031 = vmatpush1.msra.mxu0 0.0
    %3032 = vmatprep.subr.mxu0 0.0
    %3033 = vmatpush1.msra.mxu0 0.0
    %3034 = vmatprep.mubr.f32.mxu0 0.0
    %3035 = vmatmul.mubr.f32.gmra.mrb[0].mxu0 %v2968
    %v3036 = vpop.f32.mrb[0].mxu0
    %v3037 = vadd.f32 %v2950, %v3036
    %v3038 = vpop.f32.mrb[0].mxu0
    %3039 = vdwg.mxu0
    %v3040 = vtanh.pop %v3037
    %s3041 = scalar_lea.vmem [#allocation8], 16
    %3042 = vst.msk [vmem:[%s3041] sm:$0xff] %vm193, %v3040
    // Predicated region
    $region54: #{tpu_custom_call.1} parent=1 // pred_check
      _
    $region55: #{tpu_custom_call.1} parent=1 // pred_check_branch
      %3044 = sbr.rel (0) target = $region57
    $region56: #{tpu_custom_call.1} parent=1 // pred_region
      %s3046 = ssub.s32 384, 384
      %3047 = vsyncadd [#allocation4], %s3046
      %s3048 = sshll.u32 [#allocation8], 4
      %s3049 = int_to_ptr.vmem [resolvable:$true] %s3048
      %3054 = dma.vmem_to_hbm [thread:$0]  %s3049, 384, %s10, [#allocation4], 128, 128, 8
    $region57: #{tpu_custom_call.1} parent=1 // pred_fallthru
      _
    // Predicated region
    $region58: #{tpu_custom_call.1} parent=1 // pred_check
      _
    $region59: #{tpu_custom_call.1} parent=1 // pred_check_branch
      %3056 = sbr.rel (0) target = $region61
    $region60: #{tpu_custom_call.1} parent=1 // pred_region
      %3057 = dma.done [#allocation4], 384
    $region61: #{tpu_custom_call.1} parent=1 // pred_fallthru
      _
    %3058 = vsyncpa [#allocation3], 1
    %3059 = vsyncpa [#allocation6], 1
    %3060 = vsyncpa [#allocation4], 1

</llo_original>
